<compile_context>
chip_gen: v7x
topology: tpu7x:2x2x1
jax: 0.10.0
libtpu: 0.0.40
codegen_flags: <defaults>
</compile_context>

<pallas_src>
import functools

import jax
import jax.numpy as jnp
from jax import lax
from jax.experimental import pallas as pl
from jax.experimental.pallas import tpu as pltpu

NEG_SLOPE = 0.2
BIG = 1e30  # "infinity" sentinel for masked distances (avoids inf-inf NaNs)


def _lrelu(x, slope=NEG_SLOPE):
    return jnp.where(x > 0, x, slope * x)


def _dot(a, b):
    return jnp.dot(a, b, preferred_element_type=jnp.float32)


# ----------------------------------------------------------------------------
# Single fused kernel: all EdgeConv layers + global mean pool + FFN head
# ----------------------------------------------------------------------------
def disc_kernel(batch_col_ref, batch_row_ref, x_ref, *refs, num_layers, k):
    o_ref = refs[-1]
    conv_refs = refs[: 5 * num_layers]
    ffn_refs = refs[5 * num_layers: 5 * num_layers + 6]

    n = x_ref.shape[0]
    g = o_ref.shape[0]

    bcol = batch_col_ref[...]        # [N, 1] int32 graph ids
    brow = batch_row_ref[...]        # [1, N] int32 graph ids

    row_ids = lax.broadcasted_iota(jnp.int32, (n, n), 0)
    col_ids = lax.broadcasted_iota(jnp.int32, (n, n), 1)

    # additive distance bias: 0 for valid neighbour (same graph, j != i), BIG otherwise.
    # Built once from the [N] batch vector, reused by every conv layer.
    valid_pair = jnp.logical_and(bcol == brow, row_ids != col_ids)
    dist_bias = jnp.where(valid_pair, 0.0, BIG)

    x = x_ref[...].astype(jnp.float32)          # node features, stay in VMEM/vregs

    for layer in range(num_layers):
        w1d = conv_refs[5 * layer + 0][...]     # [C_in, H]   bf16  (= W1a - W1b)
        w1b = conv_refs[5 * layer + 1][...]     # [C_in, H]   bf16  (acts on x_j)
        b1 = conv_refs[5 * layer + 2][...]      # [1, H]      f32
        w2 = conv_refs[5 * layer + 3][...]      # [H, C_out]  bf16
        b2 = conv_refs[5 * layer + 4][...]      # [1, C_out]  f32
        out_c = w2.shape[1]

        # pairwise squared distances (f32 MXU) + additive validity bias
        sq = jnp.sum(x * x, axis=-1, keepdims=True)                    # [N, 1]
        d = sq + sq.T - 2.0 * jnp.dot(x, x.T, preferred_element_type=jnp.float32)
        d = d + dist_bias

        x_bf = x.astype(jnp.bfloat16)
        base = _dot(x_bf, w1d) + b1             # loop-invariant Lin1 part   [N, H]
        acc0 = jnp.full((n, out_c), -BIG, dtype=jnp.float32)

        def knn_step(_, carry, base=base, x_bf=x_bf, w1b=w1b, w2=w2):
            d, acc = carry
            dmin = jnp.min(d, axis=-1, keepdims=True)                  # [N, 1]
            cand = jnp.where(d <= dmin, col_ids, n)                    # tie-break: smallest idx
            jmin = jnp.min(cand, axis=-1, keepdims=True)               # [N, 1]
            sel = col_ids == jmin                                      # [N, N] bool
            d = jnp.where(sel, BIG, d)                                 # remove chosen neighbour

            onehot = jnp.where(sel, 1.0, 0.0).astype(jnp.bfloat16)
            nbr = _dot(onehot, x_bf)                                   # gather x_j  [N, C_in]

            h = _lrelu(base + _dot(nbr.astype(jnp.bfloat16), w1b))     # Lin1 + LReLU
            hv = _dot(h.astype(jnp.bfloat16), w2)                      # Lin2 (b2 added later)

            # guard: if the node had no valid neighbour left, don't fold into the max
            hv = jnp.where(dmin < 0.5 * BIG, hv, -BIG)
            return d, jnp.maximum(acc, hv)                             # aggr='max'

        d, acc = lax.fori_loop(0, k, knn_step, (d, acc0), unroll=True)

        has_nbr = acc[:, :1] > -0.5 * BIG                              # isolated nodes -> 0
        x = _lrelu(jnp.where(has_nbr, acc + b2, 0.0))                  # self.act after conv

    # ---------------- global mean pool (built in-kernel) ----------------
    gid = lax.broadcasted_iota(jnp.int32, (g, n), 0)                   # [G, N]
    onehot_g = jnp.where(gid == brow, 1.0, 0.0)                        # [G, N] f32
    counts = jnp.maximum(jnp.sum(onehot_g, axis=-1, keepdims=True), 1.0)
    pooled = _dot(onehot_g, x) / counts                                # [G, C]

    # ---------------- FFN head (Dropout is identity at inference) ----------------
    w1f, b1f, w2f, b2f, w3f, b3f = (r[...] for r in ffn_refs)
    h = _lrelu(_dot(pooled.astype(jnp.bfloat16), w1f) + b1f)
    h = _lrelu(_dot(h.astype(jnp.bfloat16), w2f) + b2f)
    o_ref[...] = _dot(h.astype(jnp.bfloat16), w3f) + b3f


# ----------------------------------------------------------------------------
# Wrapper: one grid-less pallas_call, everything resident in VMEM
# ----------------------------------------------------------------------------
_VMEM = pl.BlockSpec(memory_space=pltpu.MemorySpace.VMEM)


def discriminator_forward(pos, batch, num_graphs, params, k):
    n = pos.shape[0]
    batch = batch.astype(jnp.int32)
    batch_col = batch.reshape(n, 1)
    batch_row = batch.reshape(1, n)

    inputs = [batch_col, batch_row, pos.astype(jnp.float32)]
    for p in params["convs"]:
        inputs += [p["w1d"], p["w1b"], p["b1"], p["w2"], p["b2"]]
    f = params["ffn"]
    inputs += [f["w1"], f["b1"], f["w2"], f["b2"], f["w3"], f["b3"]]

    kernel = functools.partial(disc_kernel, num_layers=len(params["convs"]), k=k)
    return pl.pallas_call(
        kernel,
        out_shape=jax.ShapeDtypeStruct((num_graphs, 1), jnp.float32),
        in_specs=[_VMEM] * len(inputs),
        out_specs=_VMEM,
        compiler_params=pltpu.CompilerParams(vmem_limit_bytes=32 * 1024 * 1024),
    )(*inputs)


# ----------------------------------------------------------------------------
# Parameter init (deterministic, synthetic); matmul weights in bf16, biases f32
# ----------------------------------------------------------------------------
def init_params(key, hc):
    params = {"convs": []}
    layer_dims = [(hc[0], hc[0] * 2, hc[1])]
    for in_c, out_c in zip(hc[1:-1], hc[2:]):
        layer_dims.append((in_c, in_c * 2, out_c))

    for (in_c, hid, out_c) in layer_dims:
        key, k1, k2, k3 = jax.random.split(key, 4)
        w1a = 0.2 * jax.random.normal(k1, (in_c, hid), jnp.float32)
        w1b = 0.2 * jax.random.normal(k2, (in_c, hid), jnp.float32)
        params["convs"].append({
            "w1d": (w1a - w1b).astype(jnp.bfloat16),   # Lin1 folded: acts on x_i
            "w1b": w1b.astype(jnp.bfloat16),           # acts on x_j
            "b1": 0.01 * jnp.ones((1, hid), jnp.float32),
            "w2": (0.2 * jax.random.normal(k3, (hid, out_c), jnp.float32)).astype(jnp.bfloat16),
            "b2": 0.01 * jnp.ones((1, out_c), jnp.float32),
        })

    c = hc[-1]
    key, k1, k2, k3 = jax.random.split(key, 4)
    params["ffn"] = {
        "w1": (0.2 * jax.random.normal(k1, (c, 2 * c), jnp.float32)).astype(jnp.bfloat16),
        "b1": 0.01 * jnp.ones((1, 2 * c), jnp.float32),
        "w2": (0.2 * jax.random.normal(k2, (2 * c, 2 * c), jnp.float32)).astype(jnp.bfloat16),
        "b2": 0.01 * jnp.ones((1, 2 * c), jnp.float32),
        "w3": (0.2 * jax.random.normal(k3, (2 * c, 1), jnp.float32)).astype(jnp.bfloat16),
        "b3": jnp.zeros((1, 1), jnp.float32),
    }
    return params


if __name__ == "__main__":
    # Config: hidden_channels = [3, 16, 32], k = 4, aggr = 'max'
    hc = [3, 16, 32]
    k = 4
    num_graphs = 2
    nodes_per_graph = 8
    n = num_graphs * nodes_per_graph

    key = jax.random.PRNGKey(0)
    key, kpos = jax.random.split(key)
    pos = jax.random.normal(kpos, (n, hc[0]), jnp.float32)            # data.pos
    batch = jnp.repeat(jnp.arange(num_graphs, dtype=jnp.int32), nodes_per_graph)

    params = init_params(jax.random.PRNGKey(1), hc)

    out = discriminator_forward(pos, batch, num_graphs, params, k)
    out = jax.block_until_ready(out)
    assert out.shape == (num_graphs, 1)
    assert bool(jnp.all(jnp.isfinite(out)))
    print("KERNEL_OK")
</pallas_src>

<mosaic_0001>
module attributes {stable_mosaic.version = 11 : i64} {
  func.func @disc_kernel(%arg0: memref<16x1xi32, #tpu.memory_space<vmem>>, %arg1: memref<1x16xi32, #tpu.memory_space<vmem>>, %arg2: memref<16x3xf32, #tpu.memory_space<vmem>>, %arg3: memref<3x6xbf16, #tpu.memory_space<vmem>>, %arg4: memref<3x6xbf16, #tpu.memory_space<vmem>>, %arg5: memref<1x6xf32, #tpu.memory_space<vmem>>, %arg6: memref<6x16xbf16, #tpu.memory_space<vmem>>, %arg7: memref<1x16xf32, #tpu.memory_space<vmem>>, %arg8: memref<16x32xbf16, #tpu.memory_space<vmem>>, %arg9: memref<16x32xbf16, #tpu.memory_space<vmem>>, %arg10: memref<1x32xf32, #tpu.memory_space<vmem>>, %arg11: memref<32x32xbf16, #tpu.memory_space<vmem>>, %arg12: memref<1x32xf32, #tpu.memory_space<vmem>>, %arg13: memref<32x64xbf16, #tpu.memory_space<vmem>>, %arg14: memref<1x64xf32, #tpu.memory_space<vmem>>, %arg15: memref<64x64xbf16, #tpu.memory_space<vmem>>, %arg16: memref<1x64xf32, #tpu.memory_space<vmem>>, %arg17: memref<64x1xbf16, #tpu.memory_space<vmem>>, %arg18: memref<1x1xf32, #tpu.memory_space<vmem>>, %arg19: memref<2x1xf32, #tpu.memory_space<vmem>>) attributes {dimension_semantics = [], scalar_prefetch = 0 : i64, scratch_operands = 0 : i64, tpu.core_type = #tpu.core_type<tc>} {
    %c0 = arith.constant 0 : index
    %c0_0 = arith.constant 0 : index
    %0 = vector.load %arg0[%c0, %c0_0] : memref<16x1xi32, #tpu.memory_space<vmem>>, vector<16x1xi32>
    %c0_1 = arith.constant 0 : index
    %c0_2 = arith.constant 0 : index
    %1 = vector.load %arg1[%c0_1, %c0_2] : memref<1x16xi32, #tpu.memory_space<vmem>>, vector<1x16xi32>
    %2 = tpu.iota {dimensions = array<i32: 0>} : vector<16x16xi32>
    %3 = tpu.iota {dimensions = array<i32: 1>} : vector<16x16xi32>
    %4 = vector.broadcast %0 : vector<16x1xi32> to vector<16x16xi32>
    %5 = vector.broadcast %1 : vector<1x16xi32> to vector<16x16xi32>
    %6 = arith.cmpi eq, %4, %5 : vector<16x16xi32>
    %7 = arith.cmpi ne, %2, %3 : vector<16x16xi32>
    %8 = arith.andi %6, %7 : vector<16x16xi1>
    %cst = arith.constant 0.000000e+00 : f32
    %cst_3 = arith.constant 1.000000e+30 : f32
    %9 = vector.broadcast %cst : f32 to vector<16x16xf32>
    %10 = vector.broadcast %cst_3 : f32 to vector<16x16xf32>
    %11 = arith.select %8, %9, %10 : vector<16x16xi1>, vector<16x16xf32>
    %c0_4 = arith.constant 0 : index
    %c0_5 = arith.constant 0 : index
    %12 = vector.load %arg2[%c0_4, %c0_5] : memref<16x3xf32, #tpu.memory_space<vmem>>, vector<16x3xf32>
    %c0_6 = arith.constant 0 : index
    %c0_7 = arith.constant 0 : index
    %13 = vector.load %arg3[%c0_6, %c0_7] : memref<3x6xbf16, #tpu.memory_space<vmem>>, vector<3x6xbf16>
    %c0_8 = arith.constant 0 : index
    %c0_9 = arith.constant 0 : index
    %14 = vector.load %arg4[%c0_8, %c0_9] : memref<3x6xbf16, #tpu.memory_space<vmem>>, vector<3x6xbf16>
    %c0_10 = arith.constant 0 : index
    %c0_11 = arith.constant 0 : index
    %15 = vector.load %arg5[%c0_10, %c0_11] : memref<1x6xf32, #tpu.memory_space<vmem>>, vector<1x6xf32>
    %c0_12 = arith.constant 0 : index
    %c0_13 = arith.constant 0 : index
    %16 = vector.load %arg6[%c0_12, %c0_13] : memref<6x16xbf16, #tpu.memory_space<vmem>>, vector<6x16xbf16>
    %c0_14 = arith.constant 0 : index
    %c0_15 = arith.constant 0 : index
    %17 = vector.load %arg7[%c0_14, %c0_15] : memref<1x16xf32, #tpu.memory_space<vmem>>, vector<1x16xf32>
    %18 = arith.mulf %12, %12 : vector<16x3xf32>
    %cst_16 = arith.constant dense<0.000000e+00> : vector<16xf32>
    %19 = vector.multi_reduction <add>, %18, %cst_16 [1] : vector<16x3xf32> to vector<16xf32>
    %20 = vector.shape_cast %19 : vector<16xf32> to vector<16x1xf32>
    %21 = tpu.transpose %20, [1, 0] : vector<16x1xf32> -> vector<1x16xf32>
    %22 = vector.broadcast %20 : vector<16x1xf32> to vector<16x16xf32>
    %23 = vector.broadcast %21 : vector<1x16xf32> to vector<16x16xf32>
    %24 = arith.addf %22, %23 : vector<16x16xf32>
    %25 = tpu.transpose %12, [1, 0] : vector<16x3xf32> -> vector<3x16xf32>
    %cst_17 = arith.constant dense<0.000000e+00> : vector<16x16xf32>
    %26 = tpu.matmul %12, %25, %cst_17 {dimension_numbers = #tpu.dot_dimension_numbers<[1], [0], [0], [1], [0, 0, 1, 1], [], []>} : vector<16x3xf32>, vector<3x16xf32>, vector<16x16xf32> -> vector<16x16xf32>
    %cst_18 = arith.constant 2.000000e+00 : f32
    %27 = vector.broadcast %cst_18 : f32 to vector<16x16xf32>
    %28 = arith.mulf %27, %26 : vector<16x16xf32>
    %29 = arith.subf %24, %28 : vector<16x16xf32>
    %30 = arith.addf %29, %11 : vector<16x16xf32>
    %31 = arith.truncf %12 : vector<16x3xf32> to vector<16x3xbf16>
    %cst_19 = arith.constant dense<0.000000e+00> : vector<16x6xf32>
    %32 = tpu.matmul %31, %13, %cst_19 {dimension_numbers = #tpu.dot_dimension_numbers<[1], [0], [0], [1], [0, 0, 1, 1], [], []>} : vector<16x3xbf16>, vector<3x6xbf16>, vector<16x6xf32> -> vector<16x6xf32>
    %33 = vector.broadcast %15 : vector<1x6xf32> to vector<16x6xf32>
    %34 = arith.addf %32, %33 : vector<16x6xf32>
    %cst_20 = arith.constant -1.000000e+30 : f32
    %35 = vector.broadcast %cst_20 : f32 to vector<16x16xf32>
    %c0_i32 = arith.constant 0 : i32
    %cst_21 = arith.constant dense<0x7F800000> : vector<16xf32>
    %36 = vector.multi_reduction <minimumf>, %30, %cst_21 [1] : vector<16x16xf32> to vector<16xf32>
    %37 = vector.shape_cast %36 : vector<16xf32> to vector<16x1xf32>
    %38 = vector.broadcast %37 : vector<16x1xf32> to vector<16x16xf32>
    %39 = arith.cmpf ole, %30, %38 : vector<16x16xf32>
    %c16_i32 = arith.constant 16 : i32
    %40 = vector.broadcast %c16_i32 : i32 to vector<16x16xi32>
    %41 = arith.select %39, %3, %40 : vector<16x16xi1>, vector<16x16xi32>
    %cst_22 = arith.constant dense<2147483647> : vector<16xi32>
    %42 = vector.multi_reduction <minsi>, %41, %cst_22 [1] : vector<16x16xi32> to vector<16xi32>
    %43 = vector.shape_cast %42 : vector<16xi32> to vector<16x1xi32>
    %44 = vector.broadcast %43 : vector<16x1xi32> to vector<16x16xi32>
    %45 = arith.cmpi eq, %3, %44 : vector<16x16xi32>
    %cst_23 = arith.constant 1.000000e+30 : f32
    %46 = vector.broadcast %cst_23 : f32 to vector<16x16xf32>
    %47 = arith.select %45, %46, %30 : vector<16x16xi1>, vector<16x16xf32>
    %cst_24 = arith.constant 1.000000e+00 : f32
    %cst_25 = arith.constant 0.000000e+00 : f32
    %48 = vector.broadcast %cst_24 : f32 to vector<16x16xf32>
    %49 = vector.broadcast %cst_25 : f32 to vector<16x16xf32>
    %50 = arith.select %45, %48, %49 : vector<16x16xi1>, vector<16x16xf32>
    %51 = arith.truncf %50 : vector<16x16xf32> to vector<16x16xbf16>
    %cst_26 = arith.constant dense<0.000000e+00> : vector<16x3xf32>
    %52 = tpu.matmul %51, %31, %cst_26 {dimension_numbers = #tpu.dot_dimension_numbers<[1], [0], [0], [1], [0, 0, 1, 1], [], []>} : vector<16x16xbf16>, vector<16x3xbf16>, vector<16x3xf32> -> vector<16x3xf32>
    %53 = arith.truncf %52 : vector<16x3xf32> to vector<16x3xbf16>
    %cst_27 = arith.constant dense<0.000000e+00> : vector<16x6xf32>
    %54 = tpu.matmul %53, %14, %cst_27 {dimension_numbers = #tpu.dot_dimension_numbers<[1], [0], [0], [1], [0, 0, 1, 1], [], []>} : vector<16x3xbf16>, vector<3x6xbf16>, vector<16x6xf32> -> vector<16x6xf32>
    %55 = arith.addf %34, %54 : vector<16x6xf32>
    %cst_28 = arith.constant 0.000000e+00 : f32
    %56 = vector.broadcast %cst_28 : f32 to vector<16x6xf32>
    %57 = arith.cmpf ogt, %55, %56 : vector<16x6xf32>
    %cst_29 = arith.constant 2.000000e-01 : f32
    %58 = vector.broadcast %cst_29 : f32 to vector<16x6xf32>
    %59 = arith.mulf %58, %55 : vector<16x6xf32>
    %60 = arith.select %57, %55, %59 : vector<16x6xi1>, vector<16x6xf32>
    %61 = arith.truncf %60 : vector<16x6xf32> to vector<16x6xbf16>
    %cst_30 = arith.constant dense<0.000000e+00> : vector<16x16xf32>
    %62 = tpu.matmul %61, %16, %cst_30 {dimension_numbers = #tpu.dot_dimension_numbers<[1], [0], [0], [1], [0, 0, 1, 1], [], []>} : vector<16x6xbf16>, vector<6x16xbf16>, vector<16x16xf32> -> vector<16x16xf32>
    %cst_31 = arith.constant 5.000000e+29 : f32
    %63 = vector.broadcast %cst_31 : f32 to vector<16x1xf32>
    %64 = arith.cmpf olt, %37, %63 : vector<16x1xf32>
    %cst_32 = arith.constant -1.000000e+30 : f32
    %65 = vector.shape_cast %64 : vector<16x1xi1> to vector<16x1xi1>
    %66 = vector.broadcast %65 : vector<16x1xi1> to vector<16x16xi1>
    %67 = vector.broadcast %cst_32 : f32 to vector<16x16xf32>
    %68 = arith.select %66, %62, %67 : vector<16x16xi1>, vector<16x16xf32>
    %69 = arith.maximumf %35, %68 : vector<16x16xf32>
    %c1_i32 = arith.constant 1 : i32
    %cst_33 = arith.constant dense<0x7F800000> : vector<16xf32>
    %70 = vector.multi_reduction <minimumf>, %47, %cst_33 [1] : vector<16x16xf32> to vector<16xf32>
    %71 = vector.shape_cast %70 : vector<16xf32> to vector<16x1xf32>
    %72 = vector.broadcast %71 : vector<16x1xf32> to vector<16x16xf32>
    %73 = arith.cmpf ole, %47, %72 : vector<16x16xf32>
    %c16_i32_34 = arith.constant 16 : i32
    %74 = vector.broadcast %c16_i32_34 : i32 to vector<16x16xi32>
    %75 = arith.select %73, %3, %74 : vector<16x16xi1>, vector<16x16xi32>
    %cst_35 = arith.constant dense<2147483647> : vector<16xi32>
    %76 = vector.multi_reduction <minsi>, %75, %cst_35 [1] : vector<16x16xi32> to vector<16xi32>
    %77 = vector.shape_cast %76 : vector<16xi32> to vector<16x1xi32>
    %78 = vector.broadcast %77 : vector<16x1xi32> to vector<16x16xi32>
    %79 = arith.cmpi eq, %3, %78 : vector<16x16xi32>
    %cst_36 = arith.constant 1.000000e+30 : f32
    %80 = vector.broadcast %cst_36 : f32 to vector<16x16xf32>
    %81 = arith.select %79, %80, %47 : vector<16x16xi1>, vector<16x16xf32>
    %cst_37 = arith.constant 1.000000e+00 : f32
    %cst_38 = arith.constant 0.000000e+00 : f32
    %82 = vector.broadcast %cst_37 : f32 to vector<16x16xf32>
    %83 = vector.broadcast %cst_38 : f32 to vector<16x16xf32>
    %84 = arith.select %79, %82, %83 : vector<16x16xi1>, vector<16x16xf32>
    %85 = arith.truncf %84 : vector<16x16xf32> to vector<16x16xbf16>
    %cst_39 = arith.constant dense<0.000000e+00> : vector<16x3xf32>
    %86 = tpu.matmul %85, %31, %cst_39 {dimension_numbers = #tpu.dot_dimension_numbers<[1], [0], [0], [1], [0, 0, 1, 1], [], []>} : vector<16x16xbf16>, vector<16x3xbf16>, vector<16x3xf32> -> vector<16x3xf32>
    %87 = arith.truncf %86 : vector<16x3xf32> to vector<16x3xbf16>
    %cst_40 = arith.constant dense<0.000000e+00> : vector<16x6xf32>
    %88 = tpu.matmul %87, %14, %cst_40 {dimension_numbers = #tpu.dot_dimension_numbers<[1], [0], [0], [1], [0, 0, 1, 1], [], []>} : vector<16x3xbf16>, vector<3x6xbf16>, vector<16x6xf32> -> vector<16x6xf32>
    %89 = arith.addf %34, %88 : vector<16x6xf32>
    %cst_41 = arith.constant 0.000000e+00 : f32
    %90 = vector.broadcast %cst_41 : f32 to vector<16x6xf32>
    %91 = arith.cmpf ogt, %89, %90 : vector<16x6xf32>
    %cst_42 = arith.constant 2.000000e-01 : f32
    %92 = vector.broadcast %cst_42 : f32 to vector<16x6xf32>
    %93 = arith.mulf %92, %89 : vector<16x6xf32>
    %94 = arith.select %91, %89, %93 : vector<16x6xi1>, vector<16x6xf32>
    %95 = arith.truncf %94 : vector<16x6xf32> to vector<16x6xbf16>
    %cst_43 = arith.constant dense<0.000000e+00> : vector<16x16xf32>
    %96 = tpu.matmul %95, %16, %cst_43 {dimension_numbers = #tpu.dot_dimension_numbers<[1], [0], [0], [1], [0, 0, 1, 1], [], []>} : vector<16x6xbf16>, vector<6x16xbf16>, vector<16x16xf32> -> vector<16x16xf32>
    %cst_44 = arith.constant 5.000000e+29 : f32
    %97 = vector.broadcast %cst_44 : f32 to vector<16x1xf32>
    %98 = arith.cmpf olt, %71, %97 : vector<16x1xf32>
    %cst_45 = arith.constant -1.000000e+30 : f32
    %99 = vector.shape_cast %98 : vector<16x1xi1> to vector<16x1xi1>
    %100 = vector.broadcast %99 : vector<16x1xi1> to vector<16x16xi1>
    %101 = vector.broadcast %cst_45 : f32 to vector<16x16xf32>
    %102 = arith.select %100, %96, %101 : vector<16x16xi1>, vector<16x16xf32>
    %103 = arith.maximumf %69, %102 : vector<16x16xf32>
    %c2_i32 = arith.constant 2 : i32
    %cst_46 = arith.constant dense<0x7F800000> : vector<16xf32>
    %104 = vector.multi_reduction <minimumf>, %81, %cst_46 [1] : vector<16x16xf32> to vector<16xf32>
    %105 = vector.shape_cast %104 : vector<16xf32> to vector<16x1xf32>
    %106 = vector.broadcast %105 : vector<16x1xf32> to vector<16x16xf32>
    %107 = arith.cmpf ole, %81, %106 : vector<16x16xf32>
    %c16_i32_47 = arith.constant 16 : i32
    %108 = vector.broadcast %c16_i32_47 : i32 to vector<16x16xi32>
    %109 = arith.select %107, %3, %108 : vector<16x16xi1>, vector<16x16xi32>
    %cst_48 = arith.constant dense<2147483647> : vector<16xi32>
    %110 = vector.multi_reduction <minsi>, %109, %cst_48 [1] : vector<16x16xi32> to vector<16xi32>
    %111 = vector.shape_cast %110 : vector<16xi32> to vector<16x1xi32>
    %112 = vector.broadcast %111 : vector<16x1xi32> to vector<16x16xi32>
    %113 = arith.cmpi eq, %3, %112 : vector<16x16xi32>
    %cst_49 = arith.constant 1.000000e+30 : f32
    %114 = vector.broadcast %cst_49 : f32 to vector<16x16xf32>
    %115 = arith.select %113, %114, %81 : vector<16x16xi1>, vector<16x16xf32>
    %cst_50 = arith.constant 1.000000e+00 : f32
    %cst_51 = arith.constant 0.000000e+00 : f32
    %116 = vector.broadcast %cst_50 : f32 to vector<16x16xf32>
    %117 = vector.broadcast %cst_51 : f32 to vector<16x16xf32>
    %118 = arith.select %113, %116, %117 : vector<16x16xi1>, vector<16x16xf32>
    %119 = arith.truncf %118 : vector<16x16xf32> to vector<16x16xbf16>
    %cst_52 = arith.constant dense<0.000000e+00> : vector<16x3xf32>
    %120 = tpu.matmul %119, %31, %cst_52 {dimension_numbers = #tpu.dot_dimension_numbers<[1], [0], [0], [1], [0, 0, 1, 1], [], []>} : vector<16x16xbf16>, vector<16x3xbf16>, vector<16x3xf32> -> vector<16x3xf32>
    %121 = arith.truncf %120 : vector<16x3xf32> to vector<16x3xbf16>
    %cst_53 = arith.constant dense<0.000000e+00> : vector<16x6xf32>
    %122 = tpu.matmul %121, %14, %cst_53 {dimension_numbers = #tpu.dot_dimension_numbers<[1], [0], [0], [1], [0, 0, 1, 1], [], []>} : vector<16x3xbf16>, vector<3x6xbf16>, vector<16x6xf32> -> vector<16x6xf32>
    %123 = arith.addf %34, %122 : vector<16x6xf32>
    %cst_54 = arith.constant 0.000000e+00 : f32
    %124 = vector.broadcast %cst_54 : f32 to vector<16x6xf32>
    %125 = arith.cmpf ogt, %123, %124 : vector<16x6xf32>
    %cst_55 = arith.constant 2.000000e-01 : f32
    %126 = vector.broadcast %cst_55 : f32 to vector<16x6xf32>
    %127 = arith.mulf %126, %123 : vector<16x6xf32>
    %128 = arith.select %125, %123, %127 : vector<16x6xi1>, vector<16x6xf32>
    %129 = arith.truncf %128 : vector<16x6xf32> to vector<16x6xbf16>
    %cst_56 = arith.constant dense<0.000000e+00> : vector<16x16xf32>
    %130 = tpu.matmul %129, %16, %cst_56 {dimension_numbers = #tpu.dot_dimension_numbers<[1], [0], [0], [1], [0, 0, 1, 1], [], []>} : vector<16x6xbf16>, vector<6x16xbf16>, vector<16x16xf32> -> vector<16x16xf32>
    %cst_57 = arith.constant 5.000000e+29 : f32
    %131 = vector.broadcast %cst_57 : f32 to vector<16x1xf32>
    %132 = arith.cmpf olt, %105, %131 : vector<16x1xf32>
    %cst_58 = arith.constant -1.000000e+30 : f32
    %133 = vector.shape_cast %132 : vector<16x1xi1> to vector<16x1xi1>
    %134 = vector.broadcast %133 : vector<16x1xi1> to vector<16x16xi1>
    %135 = vector.broadcast %cst_58 : f32 to vector<16x16xf32>
    %136 = arith.select %134, %130, %135 : vector<16x16xi1>, vector<16x16xf32>
    %137 = arith.maximumf %103, %136 : vector<16x16xf32>
    %c3_i32 = arith.constant 3 : i32
    %cst_59 = arith.constant dense<0x7F800000> : vector<16xf32>
    %138 = vector.multi_reduction <minimumf>, %115, %cst_59 [1] : vector<16x16xf32> to vector<16xf32>
    %139 = vector.shape_cast %138 : vector<16xf32> to vector<16x1xf32>
    %140 = vector.broadcast %139 : vector<16x1xf32> to vector<16x16xf32>
    %141 = arith.cmpf ole, %115, %140 : vector<16x16xf32>
    %c16_i32_60 = arith.constant 16 : i32
    %142 = vector.broadcast %c16_i32_60 : i32 to vector<16x16xi32>
    %143 = arith.select %141, %3, %142 : vector<16x16xi1>, vector<16x16xi32>
    %cst_61 = arith.constant dense<2147483647> : vector<16xi32>
    %144 = vector.multi_reduction <minsi>, %143, %cst_61 [1] : vector<16x16xi32> to vector<16xi32>
    %145 = vector.shape_cast %144 : vector<16xi32> to vector<16x1xi32>
    %146 = vector.broadcast %145 : vector<16x1xi32> to vector<16x16xi32>
    %147 = arith.cmpi eq, %3, %146 : vector<16x16xi32>
    %cst_62 = arith.constant 1.000000e+30 : f32
    %148 = vector.broadcast %cst_62 : f32 to vector<16x16xf32>
    %149 = arith.select %147, %148, %115 : vector<16x16xi1>, vector<16x16xf32>
    %cst_63 = arith.constant 1.000000e+00 : f32
    %cst_64 = arith.constant 0.000000e+00 : f32
    %150 = vector.broadcast %cst_63 : f32 to vector<16x16xf32>
    %151 = vector.broadcast %cst_64 : f32 to vector<16x16xf32>
    %152 = arith.select %147, %150, %151 : vector<16x16xi1>, vector<16x16xf32>
    %153 = arith.truncf %152 : vector<16x16xf32> to vector<16x16xbf16>
    %cst_65 = arith.constant dense<0.000000e+00> : vector<16x3xf32>
    %154 = tpu.matmul %153, %31, %cst_65 {dimension_numbers = #tpu.dot_dimension_numbers<[1], [0], [0], [1], [0, 0, 1, 1], [], []>} : vector<16x16xbf16>, vector<16x3xbf16>, vector<16x3xf32> -> vector<16x3xf32>
    %155 = arith.truncf %154 : vector<16x3xf32> to vector<16x3xbf16>
    %cst_66 = arith.constant dense<0.000000e+00> : vector<16x6xf32>
    %156 = tpu.matmul %155, %14, %cst_66 {dimension_numbers = #tpu.dot_dimension_numbers<[1], [0], [0], [1], [0, 0, 1, 1], [], []>} : vector<16x3xbf16>, vector<3x6xbf16>, vector<16x6xf32> -> vector<16x6xf32>
    %157 = arith.addf %34, %156 : vector<16x6xf32>
    %cst_67 = arith.constant 0.000000e+00 : f32
    %158 = vector.broadcast %cst_67 : f32 to vector<16x6xf32>
    %159 = arith.cmpf ogt, %157, %158 : vector<16x6xf32>
    %cst_68 = arith.constant 2.000000e-01 : f32
    %160 = vector.broadcast %cst_68 : f32 to vector<16x6xf32>
    %161 = arith.mulf %160, %157 : vector<16x6xf32>
    %162 = arith.select %159, %157, %161 : vector<16x6xi1>, vector<16x6xf32>
    %163 = arith.truncf %162 : vector<16x6xf32> to vector<16x6xbf16>
    %cst_69 = arith.constant dense<0.000000e+00> : vector<16x16xf32>
    %164 = tpu.matmul %163, %16, %cst_69 {dimension_numbers = #tpu.dot_dimension_numbers<[1], [0], [0], [1], [0, 0, 1, 1], [], []>} : vector<16x6xbf16>, vector<6x16xbf16>, vector<16x16xf32> -> vector<16x16xf32>
    %cst_70 = arith.constant 5.000000e+29 : f32
    %165 = vector.broadcast %cst_70 : f32 to vector<16x1xf32>
    %166 = arith.cmpf olt, %139, %165 : vector<16x1xf32>
    %cst_71 = arith.constant -1.000000e+30 : f32
    %167 = vector.shape_cast %166 : vector<16x1xi1> to vector<16x1xi1>
    %168 = vector.broadcast %167 : vector<16x1xi1> to vector<16x16xi1>
    %169 = vector.broadcast %cst_71 : f32 to vector<16x16xf32>
    %170 = arith.select %168, %164, %169 : vector<16x16xi1>, vector<16x16xf32>
    %171 = arith.maximumf %137, %170 : vector<16x16xf32>
    %172 = vector.extract_strided_slice %171 {offsets = [0, 0], sizes = [16, 1], strides = [1, 1]} : vector<16x16xf32> to vector<16x1xf32>
    %cst_72 = arith.constant -5.000000e+29 : f32
    %173 = vector.broadcast %cst_72 : f32 to vector<16x1xf32>
    %174 = arith.cmpf ogt, %172, %173 : vector<16x1xf32>
    %175 = vector.broadcast %17 : vector<1x16xf32> to vector<16x16xf32>
    %176 = arith.addf %171, %175 : vector<16x16xf32>
    %cst_73 = arith.constant 0.000000e+00 : f32
    %177 = vector.shape_cast %174 : vector<16x1xi1> to vector<16x1xi1>
    %178 = vector.broadcast %177 : vector<16x1xi1> to vector<16x16xi1>
    %179 = vector.broadcast %cst_73 : f32 to vector<16x16xf32>
    %180 = arith.select %178, %176, %179 : vector<16x16xi1>, vector<16x16xf32>
    %cst_74 = arith.constant 0.000000e+00 : f32
    %181 = vector.broadcast %cst_74 : f32 to vector<16x16xf32>
    %182 = arith.cmpf ogt, %180, %181 : vector<16x16xf32>
    %cst_75 = arith.constant 2.000000e-01 : f32
    %183 = vector.broadcast %cst_75 : f32 to vector<16x16xf32>
    %184 = arith.mulf %183, %180 : vector<16x16xf32>
    %185 = arith.select %182, %180, %184 : vector<16x16xi1>, vector<16x16xf32>
    %c0_76 = arith.constant 0 : index
    %c0_77 = arith.constant 0 : index
    %186 = vector.load %arg8[%c0_76, %c0_77] : memref<16x32xbf16, #tpu.memory_space<vmem>>, vector<16x32xbf16>
    %c0_78 = arith.constant 0 : index
    %c0_79 = arith.constant 0 : index
    %187 = vector.load %arg9[%c0_78, %c0_79] : memref<16x32xbf16, #tpu.memory_space<vmem>>, vector<16x32xbf16>
    %c0_80 = arith.constant 0 : index
    %c0_81 = arith.constant 0 : index
    %188 = vector.load %arg10[%c0_80, %c0_81] : memref<1x32xf32, #tpu.memory_space<vmem>>, vector<1x32xf32>
    %c0_82 = arith.constant 0 : index
    %c0_83 = arith.constant 0 : index
    %189 = vector.load %arg11[%c0_82, %c0_83] : memref<32x32xbf16, #tpu.memory_space<vmem>>, vector<32x32xbf16>
    %c0_84 = arith.constant 0 : index
    %c0_85 = arith.constant 0 : index
    %190 = vector.load %arg12[%c0_84, %c0_85] : memref<1x32xf32, #tpu.memory_space<vmem>>, vector<1x32xf32>
    %191 = arith.mulf %185, %185 : vector<16x16xf32>
    %cst_86 = arith.constant dense<0.000000e+00> : vector<16xf32>
    %192 = vector.multi_reduction <add>, %191, %cst_86 [1] : vector<16x16xf32> to vector<16xf32>
    %193 = vector.shape_cast %192 : vector<16xf32> to vector<16x1xf32>
    %194 = tpu.transpose %193, [1, 0] : vector<16x1xf32> -> vector<1x16xf32>
    %195 = vector.broadcast %193 : vector<16x1xf32> to vector<16x16xf32>
    %196 = vector.broadcast %194 : vector<1x16xf32> to vector<16x16xf32>
    %197 = arith.addf %195, %196 : vector<16x16xf32>
    %198 = tpu.transpose %185, [1, 0] : vector<16x16xf32> -> vector<16x16xf32>
    %cst_87 = arith.constant dense<0.000000e+00> : vector<16x16xf32>
    %199 = tpu.matmul %185, %198, %cst_87 {dimension_numbers = #tpu.dot_dimension_numbers<[1], [0], [0], [1], [0, 0, 1, 1], [], []>} : vector<16x16xf32>, vector<16x16xf32>, vector<16x16xf32> -> vector<16x16xf32>
    %cst_88 = arith.constant 2.000000e+00 : f32
    %200 = vector.broadcast %cst_88 : f32 to vector<16x16xf32>
    %201 = arith.mulf %200, %199 : vector<16x16xf32>
    %202 = arith.subf %197, %201 : vector<16x16xf32>
    %203 = arith.addf %202, %11 : vector<16x16xf32>
    %204 = arith.truncf %185 : vector<16x16xf32> to vector<16x16xbf16>
    %cst_89 = arith.constant dense<0.000000e+00> : vector<16x32xf32>
    %205 = tpu.matmul %204, %186, %cst_89 {dimension_numbers = #tpu.dot_dimension_numbers<[1], [0], [0], [1], [0, 0, 1, 1], [], []>} : vector<16x16xbf16>, vector<16x32xbf16>, vector<16x32xf32> -> vector<16x32xf32>
    %206 = vector.broadcast %188 : vector<1x32xf32> to vector<16x32xf32>
    %207 = arith.addf %205, %206 : vector<16x32xf32>
    %cst_90 = arith.constant -1.000000e+30 : f32
    %208 = vector.broadcast %cst_90 : f32 to vector<16x32xf32>
    %c0_i32_91 = arith.constant 0 : i32
    %cst_92 = arith.constant dense<0x7F800000> : vector<16xf32>
    %209 = vector.multi_reduction <minimumf>, %203, %cst_92 [1] : vector<16x16xf32> to vector<16xf32>
    %210 = vector.shape_cast %209 : vector<16xf32> to vector<16x1xf32>
    %211 = vector.broadcast %210 : vector<16x1xf32> to vector<16x16xf32>
    %212 = arith.cmpf ole, %203, %211 : vector<16x16xf32>
    %c16_i32_93 = arith.constant 16 : i32
    %213 = vector.broadcast %c16_i32_93 : i32 to vector<16x16xi32>
    %214 = arith.select %212, %3, %213 : vector<16x16xi1>, vector<16x16xi32>
    %cst_94 = arith.constant dense<2147483647> : vector<16xi32>
    %215 = vector.multi_reduction <minsi>, %214, %cst_94 [1] : vector<16x16xi32> to vector<16xi32>
    %216 = vector.shape_cast %215 : vector<16xi32> to vector<16x1xi32>
    %217 = vector.broadcast %216 : vector<16x1xi32> to vector<16x16xi32>
    %218 = arith.cmpi eq, %3, %217 : vector<16x16xi32>
    %cst_95 = arith.constant 1.000000e+30 : f32
    %219 = vector.broadcast %cst_95 : f32 to vector<16x16xf32>
    %220 = arith.select %218, %219, %203 : vector<16x16xi1>, vector<16x16xf32>
    %cst_96 = arith.constant 1.000000e+00 : f32
    %cst_97 = arith.constant 0.000000e+00 : f32
    %221 = vector.broadcast %cst_96 : f32 to vector<16x16xf32>
    %222 = vector.broadcast %cst_97 : f32 to vector<16x16xf32>
    %223 = arith.select %218, %221, %222 : vector<16x16xi1>, vector<16x16xf32>
    %224 = arith.truncf %223 : vector<16x16xf32> to vector<16x16xbf16>
    %cst_98 = arith.constant dense<0.000000e+00> : vector<16x16xf32>
    %225 = tpu.matmul %224, %204, %cst_98 {dimension_numbers = #tpu.dot_dimension_numbers<[1], [0], [0], [1], [0, 0, 1, 1], [], []>} : vector<16x16xbf16>, vector<16x16xbf16>, vector<16x16xf32> -> vector<16x16xf32>
    %226 = arith.truncf %225 : vector<16x16xf32> to vector<16x16xbf16>
    %cst_99 = arith.constant dense<0.000000e+00> : vector<16x32xf32>
    %227 = tpu.matmul %226, %187, %cst_99 {dimension_numbers = #tpu.dot_dimension_numbers<[1], [0], [0], [1], [0, 0, 1, 1], [], []>} : vector<16x16xbf16>, vector<16x32xbf16>, vector<16x32xf32> -> vector<16x32xf32>
    %228 = arith.addf %207, %227 : vector<16x32xf32>
    %cst_100 = arith.constant 0.000000e+00 : f32
    %229 = vector.broadcast %cst_100 : f32 to vector<16x32xf32>
    %230 = arith.cmpf ogt, %228, %229 : vector<16x32xf32>
    %cst_101 = arith.constant 2.000000e-01 : f32
    %231 = vector.broadcast %cst_101 : f32 to vector<16x32xf32>
    %232 = arith.mulf %231, %228 : vector<16x32xf32>
    %233 = arith.select %230, %228, %232 : vector<16x32xi1>, vector<16x32xf32>
    %234 = arith.truncf %233 : vector<16x32xf32> to vector<16x32xbf16>
    %cst_102 = arith.constant dense<0.000000e+00> : vector<16x32xf32>
    %235 = tpu.matmul %234, %189, %cst_102 {dimension_numbers = #tpu.dot_dimension_numbers<[1], [0], [0], [1], [0, 0, 1, 1], [], []>} : vector<16x32xbf16>, vector<32x32xbf16>, vector<16x32xf32> -> vector<16x32xf32>
    %cst_103 = arith.constant 5.000000e+29 : f32
    %236 = vector.broadcast %cst_103 : f32 to vector<16x1xf32>
    %237 = arith.cmpf olt, %210, %236 : vector<16x1xf32>
    %cst_104 = arith.constant -1.000000e+30 : f32
    %238 = vector.shape_cast %237 : vector<16x1xi1> to vector<16x1xi1>
    %239 = vector.broadcast %238 : vector<16x1xi1> to vector<16x32xi1>
    %240 = vector.broadcast %cst_104 : f32 to vector<16x32xf32>
    %241 = arith.select %239, %235, %240 : vector<16x32xi1>, vector<16x32xf32>
    %242 = arith.maximumf %208, %241 : vector<16x32xf32>
    %c1_i32_105 = arith.constant 1 : i32
    %cst_106 = arith.constant dense<0x7F800000> : vector<16xf32>
    %243 = vector.multi_reduction <minimumf>, %220, %cst_106 [1] : vector<16x16xf32> to vector<16xf32>
    %244 = vector.shape_cast %243 : vector<16xf32> to vector<16x1xf32>
    %245 = vector.broadcast %244 : vector<16x1xf32> to vector<16x16xf32>
    %246 = arith.cmpf ole, %220, %245 : vector<16x16xf32>
    %c16_i32_107 = arith.constant 16 : i32
    %247 = vector.broadcast %c16_i32_107 : i32 to vector<16x16xi32>
    %248 = arith.select %246, %3, %247 : vector<16x16xi1>, vector<16x16xi32>
    %cst_108 = arith.constant dense<2147483647> : vector<16xi32>
    %249 = vector.multi_reduction <minsi>, %248, %cst_108 [1] : vector<16x16xi32> to vector<16xi32>
    %250 = vector.shape_cast %249 : vector<16xi32> to vector<16x1xi32>
    %251 = vector.broadcast %250 : vector<16x1xi32> to vector<16x16xi32>
    %252 = arith.cmpi eq, %3, %251 : vector<16x16xi32>
    %cst_109 = arith.constant 1.000000e+30 : f32
    %253 = vector.broadcast %cst_109 : f32 to vector<16x16xf32>
    %254 = arith.select %252, %253, %220 : vector<16x16xi1>, vector<16x16xf32>
    %cst_110 = arith.constant 1.000000e+00 : f32
    %cst_111 = arith.constant 0.000000e+00 : f32
    %255 = vector.broadcast %cst_110 : f32 to vector<16x16xf32>
    %256 = vector.broadcast %cst_111 : f32 to vector<16x16xf32>
    %257 = arith.select %252, %255, %256 : vector<16x16xi1>, vector<16x16xf32>
    %258 = arith.truncf %257 : vector<16x16xf32> to vector<16x16xbf16>
    %cst_112 = arith.constant dense<0.000000e+00> : vector<16x16xf32>
    %259 = tpu.matmul %258, %204, %cst_112 {dimension_numbers = #tpu.dot_dimension_numbers<[1], [0], [0], [1], [0, 0, 1, 1], [], []>} : vector<16x16xbf16>, vector<16x16xbf16>, vector<16x16xf32> -> vector<16x16xf32>
    %260 = arith.truncf %259 : vector<16x16xf32> to vector<16x16xbf16>
    %cst_113 = arith.constant dense<0.000000e+00> : vector<16x32xf32>
    %261 = tpu.matmul %260, %187, %cst_113 {dimension_numbers = #tpu.dot_dimension_numbers<[1], [0], [0], [1], [0, 0, 1, 1], [], []>} : vector<16x16xbf16>, vector<16x32xbf16>, vector<16x32xf32> -> vector<16x32xf32>
    %262 = arith.addf %207, %261 : vector<16x32xf32>
    %cst_114 = arith.constant 0.000000e+00 : f32
    %263 = vector.broadcast %cst_114 : f32 to vector<16x32xf32>
    %264 = arith.cmpf ogt, %262, %263 : vector<16x32xf32>
    %cst_115 = arith.constant 2.000000e-01 : f32
    %265 = vector.broadcast %cst_115 : f32 to vector<16x32xf32>
    %266 = arith.mulf %265, %262 : vector<16x32xf32>
    %267 = arith.select %264, %262, %266 : vector<16x32xi1>, vector<16x32xf32>
    %268 = arith.truncf %267 : vector<16x32xf32> to vector<16x32xbf16>
    %cst_116 = arith.constant dense<0.000000e+00> : vector<16x32xf32>
    %269 = tpu.matmul %268, %189, %cst_116 {dimension_numbers = #tpu.dot_dimension_numbers<[1], [0], [0], [1], [0, 0, 1, 1], [], []>} : vector<16x32xbf16>, vector<32x32xbf16>, vector<16x32xf32> -> vector<16x32xf32>
    %cst_117 = arith.constant 5.000000e+29 : f32
    %270 = vector.broadcast %cst_117 : f32 to vector<16x1xf32>
    %271 = arith.cmpf olt, %244, %270 : vector<16x1xf32>
    %cst_118 = arith.constant -1.000000e+30 : f32
    %272 = vector.shape_cast %271 : vector<16x1xi1> to vector<16x1xi1>
    %273 = vector.broadcast %272 : vector<16x1xi1> to vector<16x32xi1>
    %274 = vector.broadcast %cst_118 : f32 to vector<16x32xf32>
    %275 = arith.select %273, %269, %274 : vector<16x32xi1>, vector<16x32xf32>
    %276 = arith.maximumf %242, %275 : vector<16x32xf32>
    %c2_i32_119 = arith.constant 2 : i32
    %cst_120 = arith.constant dense<0x7F800000> : vector<16xf32>
    %277 = vector.multi_reduction <minimumf>, %254, %cst_120 [1] : vector<16x16xf32> to vector<16xf32>
    %278 = vector.shape_cast %277 : vector<16xf32> to vector<16x1xf32>
    %279 = vector.broadcast %278 : vector<16x1xf32> to vector<16x16xf32>
    %280 = arith.cmpf ole, %254, %279 : vector<16x16xf32>
    %c16_i32_121 = arith.constant 16 : i32
    %281 = vector.broadcast %c16_i32_121 : i32 to vector<16x16xi32>
    %282 = arith.select %280, %3, %281 : vector<16x16xi1>, vector<16x16xi32>
    %cst_122 = arith.constant dense<2147483647> : vector<16xi32>
    %283 = vector.multi_reduction <minsi>, %282, %cst_122 [1] : vector<16x16xi32> to vector<16xi32>
    %284 = vector.shape_cast %283 : vector<16xi32> to vector<16x1xi32>
    %285 = vector.broadcast %284 : vector<16x1xi32> to vector<16x16xi32>
    %286 = arith.cmpi eq, %3, %285 : vector<16x16xi32>
    %cst_123 = arith.constant 1.000000e+30 : f32
    %287 = vector.broadcast %cst_123 : f32 to vector<16x16xf32>
    %288 = arith.select %286, %287, %254 : vector<16x16xi1>, vector<16x16xf32>
    %cst_124 = arith.constant 1.000000e+00 : f32
    %cst_125 = arith.constant 0.000000e+00 : f32
    %289 = vector.broadcast %cst_124 : f32 to vector<16x16xf32>
    %290 = vector.broadcast %cst_125 : f32 to vector<16x16xf32>
    %291 = arith.select %286, %289, %290 : vector<16x16xi1>, vector<16x16xf32>
    %292 = arith.truncf %291 : vector<16x16xf32> to vector<16x16xbf16>
    %cst_126 = arith.constant dense<0.000000e+00> : vector<16x16xf32>
    %293 = tpu.matmul %292, %204, %cst_126 {dimension_numbers = #tpu.dot_dimension_numbers<[1], [0], [0], [1], [0, 0, 1, 1], [], []>} : vector<16x16xbf16>, vector<16x16xbf16>, vector<16x16xf32> -> vector<16x16xf32>
    %294 = arith.truncf %293 : vector<16x16xf32> to vector<16x16xbf16>
    %cst_127 = arith.constant dense<0.000000e+00> : vector<16x32xf32>
    %295 = tpu.matmul %294, %187, %cst_127 {dimension_numbers = #tpu.dot_dimension_numbers<[1], [0], [0], [1], [0, 0, 1, 1], [], []>} : vector<16x16xbf16>, vector<16x32xbf16>, vector<16x32xf32> -> vector<16x32xf32>
    %296 = arith.addf %207, %295 : vector<16x32xf32>
    %cst_128 = arith.constant 0.000000e+00 : f32
    %297 = vector.broadcast %cst_128 : f32 to vector<16x32xf32>
    %298 = arith.cmpf ogt, %296, %297 : vector<16x32xf32>
    %cst_129 = arith.constant 2.000000e-01 : f32
    %299 = vector.broadcast %cst_129 : f32 to vector<16x32xf32>
    %300 = arith.mulf %299, %296 : vector<16x32xf32>
    %301 = arith.select %298, %296, %300 : vector<16x32xi1>, vector<16x32xf32>
    %302 = arith.truncf %301 : vector<16x32xf32> to vector<16x32xbf16>
    %cst_130 = arith.constant dense<0.000000e+00> : vector<16x32xf32>
    %303 = tpu.matmul %302, %189, %cst_130 {dimension_numbers = #tpu.dot_dimension_numbers<[1], [0], [0], [1], [0, 0, 1, 1], [], []>} : vector<16x32xbf16>, vector<32x32xbf16>, vector<16x32xf32> -> vector<16x32xf32>
    %cst_131 = arith.constant 5.000000e+29 : f32
    %304 = vector.broadcast %cst_131 : f32 to vector<16x1xf32>
    %305 = arith.cmpf olt, %278, %304 : vector<16x1xf32>
    %cst_132 = arith.constant -1.000000e+30 : f32
    %306 = vector.shape_cast %305 : vector<16x1xi1> to vector<16x1xi1>
    %307 = vector.broadcast %306 : vector<16x1xi1> to vector<16x32xi1>
    %308 = vector.broadcast %cst_132 : f32 to vector<16x32xf32>
    %309 = arith.select %307, %303, %308 : vector<16x32xi1>, vector<16x32xf32>
    %310 = arith.maximumf %276, %309 : vector<16x32xf32>
    %c3_i32_133 = arith.constant 3 : i32
    %cst_134 = arith.constant dense<0x7F800000> : vector<16xf32>
    %311 = vector.multi_reduction <minimumf>, %288, %cst_134 [1] : vector<16x16xf32> to vector<16xf32>
    %312 = vector.shape_cast %311 : vector<16xf32> to vector<16x1xf32>
    %313 = vector.broadcast %312 : vector<16x1xf32> to vector<16x16xf32>
    %314 = arith.cmpf ole, %288, %313 : vector<16x16xf32>
    %c16_i32_135 = arith.constant 16 : i32
    %315 = vector.broadcast %c16_i32_135 : i32 to vector<16x16xi32>
    %316 = arith.select %314, %3, %315 : vector<16x16xi1>, vector<16x16xi32>
    %cst_136 = arith.constant dense<2147483647> : vector<16xi32>
    %317 = vector.multi_reduction <minsi>, %316, %cst_136 [1] : vector<16x16xi32> to vector<16xi32>
    %318 = vector.shape_cast %317 : vector<16xi32> to vector<16x1xi32>
    %319 = vector.broadcast %318 : vector<16x1xi32> to vector<16x16xi32>
    %320 = arith.cmpi eq, %3, %319 : vector<16x16xi32>
    %cst_137 = arith.constant 1.000000e+30 : f32
    %321 = vector.broadcast %cst_137 : f32 to vector<16x16xf32>
    %322 = arith.select %320, %321, %288 : vector<16x16xi1>, vector<16x16xf32>
    %cst_138 = arith.constant 1.000000e+00 : f32
    %cst_139 = arith.constant 0.000000e+00 : f32
    %323 = vector.broadcast %cst_138 : f32 to vector<16x16xf32>
    %324 = vector.broadcast %cst_139 : f32 to vector<16x16xf32>
    %325 = arith.select %320, %323, %324 : vector<16x16xi1>, vector<16x16xf32>
    %326 = arith.truncf %325 : vector<16x16xf32> to vector<16x16xbf16>
    %cst_140 = arith.constant dense<0.000000e+00> : vector<16x16xf32>
    %327 = tpu.matmul %326, %204, %cst_140 {dimension_numbers = #tpu.dot_dimension_numbers<[1], [0], [0], [1], [0, 0, 1, 1], [], []>} : vector<16x16xbf16>, vector<16x16xbf16>, vector<16x16xf32> -> vector<16x16xf32>
    %328 = arith.truncf %327 : vector<16x16xf32> to vector<16x16xbf16>
    %cst_141 = arith.constant dense<0.000000e+00> : vector<16x32xf32>
    %329 = tpu.matmul %328, %187, %cst_141 {dimension_numbers = #tpu.dot_dimension_numbers<[1], [0], [0], [1], [0, 0, 1, 1], [], []>} : vector<16x16xbf16>, vector<16x32xbf16>, vector<16x32xf32> -> vector<16x32xf32>
    %330 = arith.addf %207, %329 : vector<16x32xf32>
    %cst_142 = arith.constant 0.000000e+00 : f32
    %331 = vector.broadcast %cst_142 : f32 to vector<16x32xf32>
    %332 = arith.cmpf ogt, %330, %331 : vector<16x32xf32>
    %cst_143 = arith.constant 2.000000e-01 : f32
    %333 = vector.broadcast %cst_143 : f32 to vector<16x32xf32>
    %334 = arith.mulf %333, %330 : vector<16x32xf32>
    %335 = arith.select %332, %330, %334 : vector<16x32xi1>, vector<16x32xf32>
    %336 = arith.truncf %335 : vector<16x32xf32> to vector<16x32xbf16>
    %cst_144 = arith.constant dense<0.000000e+00> : vector<16x32xf32>
    %337 = tpu.matmul %336, %189, %cst_144 {dimension_numbers = #tpu.dot_dimension_numbers<[1], [0], [0], [1], [0, 0, 1, 1], [], []>} : vector<16x32xbf16>, vector<32x32xbf16>, vector<16x32xf32> -> vector<16x32xf32>
    %cst_145 = arith.constant 5.000000e+29 : f32
    %338 = vector.broadcast %cst_145 : f32 to vector<16x1xf32>
    %339 = arith.cmpf olt, %312, %338 : vector<16x1xf32>
    %cst_146 = arith.constant -1.000000e+30 : f32
    %340 = vector.shape_cast %339 : vector<16x1xi1> to vector<16x1xi1>
    %341 = vector.broadcast %340 : vector<16x1xi1> to vector<16x32xi1>
    %342 = vector.broadcast %cst_146 : f32 to vector<16x32xf32>
    %343 = arith.select %341, %337, %342 : vector<16x32xi1>, vector<16x32xf32>
    %344 = arith.maximumf %310, %343 : vector<16x32xf32>
    %345 = vector.extract_strided_slice %344 {offsets = [0, 0], sizes = [16, 1], strides = [1, 1]} : vector<16x32xf32> to vector<16x1xf32>
    %cst_147 = arith.constant -5.000000e+29 : f32
    %346 = vector.broadcast %cst_147 : f32 to vector<16x1xf32>
    %347 = arith.cmpf ogt, %345, %346 : vector<16x1xf32>
    %348 = vector.broadcast %190 : vector<1x32xf32> to vector<16x32xf32>
    %349 = arith.addf %344, %348 : vector<16x32xf32>
    %cst_148 = arith.constant 0.000000e+00 : f32
    %350 = vector.shape_cast %347 : vector<16x1xi1> to vector<16x1xi1>
    %351 = vector.broadcast %350 : vector<16x1xi1> to vector<16x32xi1>
    %352 = vector.broadcast %cst_148 : f32 to vector<16x32xf32>
    %353 = arith.select %351, %349, %352 : vector<16x32xi1>, vector<16x32xf32>
    %cst_149 = arith.constant 0.000000e+00 : f32
    %354 = vector.broadcast %cst_149 : f32 to vector<16x32xf32>
    %355 = arith.cmpf ogt, %353, %354 : vector<16x32xf32>
    %cst_150 = arith.constant 2.000000e-01 : f32
    %356 = vector.broadcast %cst_150 : f32 to vector<16x32xf32>
    %357 = arith.mulf %356, %353 : vector<16x32xf32>
    %358 = arith.select %355, %353, %357 : vector<16x32xi1>, vector<16x32xf32>
    %359 = tpu.iota {dimensions = array<i32: 0>} : vector<2x16xi32>
    %360 = vector.broadcast %1 : vector<1x16xi32> to vector<2x16xi32>
    %361 = arith.cmpi eq, %359, %360 : vector<2x16xi32>
    %cst_151 = arith.constant 1.000000e+00 : f32
    %cst_152 = arith.constant 0.000000e+00 : f32
    %362 = vector.broadcast %cst_151 : f32 to vector<2x16xf32>
    %363 = vector.broadcast %cst_152 : f32 to vector<2x16xf32>
    %364 = arith.select %361, %362, %363 : vector<2x16xi1>, vector<2x16xf32>
    %cst_153 = arith.constant dense<0.000000e+00> : vector<2xf32>
    %365 = vector.multi_reduction <add>, %364, %cst_153 [1] : vector<2x16xf32> to vector<2xf32>
    %366 = vector.shape_cast %365 : vector<2xf32> to vector<2x1xf32>
    %cst_154 = arith.constant 1.000000e+00 : f32
    %367 = vector.broadcast %cst_154 : f32 to vector<2x1xf32>
    %368 = arith.maximumf %366, %367 : vector<2x1xf32>
    %cst_155 = arith.constant dense<0.000000e+00> : vector<2x32xf32>
    %369 = tpu.matmul %364, %358, %cst_155 {dimension_numbers = #tpu.dot_dimension_numbers<[1], [0], [0], [1], [0, 0, 1, 1], [], []>} : vector<2x16xf32>, vector<16x32xf32>, vector<2x32xf32> -> vector<2x32xf32>
    %370 = vector.broadcast %368 : vector<2x1xf32> to vector<2x32xf32>
    %371 = arith.divf %369, %370 : vector<2x32xf32>
    %c0_156 = arith.constant 0 : index
    %c0_157 = arith.constant 0 : index
    %372 = vector.load %arg13[%c0_156, %c0_157] : memref<32x64xbf16, #tpu.memory_space<vmem>>, vector<32x64xbf16>
    %c0_158 = arith.constant 0 : index
    %c0_159 = arith.constant 0 : index
    %373 = vector.load %arg14[%c0_158, %c0_159] : memref<1x64xf32, #tpu.memory_space<vmem>>, vector<1x64xf32>
    %c0_160 = arith.constant 0 : index
    %c0_161 = arith.constant 0 : index
    %374 = vector.load %arg15[%c0_160, %c0_161] : memref<64x64xbf16, #tpu.memory_space<vmem>>, vector<64x64xbf16>
    %c0_162 = arith.constant 0 : index
    %c0_163 = arith.constant 0 : index
    %375 = vector.load %arg16[%c0_162, %c0_163] : memref<1x64xf32, #tpu.memory_space<vmem>>, vector<1x64xf32>
    %c0_164 = arith.constant 0 : index
    %c0_165 = arith.constant 0 : index
    %376 = vector.load %arg17[%c0_164, %c0_165] : memref<64x1xbf16, #tpu.memory_space<vmem>>, vector<64x1xbf16>
    %c0_166 = arith.constant 0 : index
    %c0_167 = arith.constant 0 : index
    %377 = vector.load %arg18[%c0_166, %c0_167] : memref<1x1xf32, #tpu.memory_space<vmem>>, vector<1x1xf32>
    %378 = arith.truncf %371 : vector<2x32xf32> to vector<2x32xbf16>
    %cst_168 = arith.constant dense<0.000000e+00> : vector<2x64xf32>
    %379 = tpu.matmul %378, %372, %cst_168 {dimension_numbers = #tpu.dot_dimension_numbers<[1], [0], [0], [1], [0, 0, 1, 1], [], []>} : vector<2x32xbf16>, vector<32x64xbf16>, vector<2x64xf32> -> vector<2x64xf32>
    %380 = vector.broadcast %373 : vector<1x64xf32> to vector<2x64xf32>
    %381 = arith.addf %379, %380 : vector<2x64xf32>
    %cst_169 = arith.constant 0.000000e+00 : f32
    %382 = vector.broadcast %cst_169 : f32 to vector<2x64xf32>
    %383 = arith.cmpf ogt, %381, %382 : vector<2x64xf32>
    %cst_170 = arith.constant 2.000000e-01 : f32
    %384 = vector.broadcast %cst_170 : f32 to vector<2x64xf32>
    %385 = arith.mulf %384, %381 : vector<2x64xf32>
    %386 = arith.select %383, %381, %385 : vector<2x64xi1>, vector<2x64xf32>
    %387 = arith.truncf %386 : vector<2x64xf32> to vector<2x64xbf16>
    %cst_171 = arith.constant dense<0.000000e+00> : vector<2x64xf32>
    %388 = tpu.matmul %387, %374, %cst_171 {dimension_numbers = #tpu.dot_dimension_numbers<[1], [0], [0], [1], [0, 0, 1, 1], [], []>} : vector<2x64xbf16>, vector<64x64xbf16>, vector<2x64xf32> -> vector<2x64xf32>
    %389 = vector.broadcast %375 : vector<1x64xf32> to vector<2x64xf32>
    %390 = arith.addf %388, %389 : vector<2x64xf32>
    %cst_172 = arith.constant 0.000000e+00 : f32
    %391 = vector.broadcast %cst_172 : f32 to vector<2x64xf32>
    %392 = arith.cmpf ogt, %390, %391 : vector<2x64xf32>
    %cst_173 = arith.constant 2.000000e-01 : f32
    %393 = vector.broadcast %cst_173 : f32 to vector<2x64xf32>
    %394 = arith.mulf %393, %390 : vector<2x64xf32>
    %395 = arith.select %392, %390, %394 : vector<2x64xi1>, vector<2x64xf32>
    %396 = arith.truncf %395 : vector<2x64xf32> to vector<2x64xbf16>
    %cst_174 = arith.constant dense<0.000000e+00> : vector<2x1xf32>
    %397 = tpu.matmul %396, %376, %cst_174 {dimension_numbers = #tpu.dot_dimension_numbers<[1], [0], [0], [1], [0, 0, 1, 1], [], []>} : vector<2x64xbf16>, vector<64x1xbf16>, vector<2x1xf32> -> vector<2x1xf32>
    %398 = vector.broadcast %377 : vector<1x1xf32> to vector<2x1xf32>
    %399 = arith.addf %397, %398 : vector<2x1xf32>
    %c0_175 = arith.constant 0 : index
    %c0_176 = arith.constant 0 : index
    %400 = vector.load %arg19[%c0_175, %c0_176] : memref<2x1xf32, #tpu.memory_space<vmem>>, vector<2x1xf32>
    tpu.vector_store %arg19[%c0_175, %c0_176], %399 {strides = array<i32>} : memref<2x1xf32, #tpu.memory_space<vmem>>, vector<2x1xf32>,
    return
  }
}

</mosaic_0001>

<llo_original>
// kernel: tpu_custom_call.1
$region0: #{tpu_custom_call.1}
  #allocation0 [shape = 'u32[]', space=smem, size = 0x4, offset = 0x4, fixed_abs, tag = 'smem constant byte address 0x4 - core index']
  #allocation1 [shape = 'u32[144,128]{1,0:T(1,128)}', space=vmem, size = 0x12000, scoped, tag = 'internal scratch']
  #allocation2 [shape = 'f32[1,1]{1,0:T(1,128)S(1)}', space=vmem, size = 0x200, scoped, tag = 'scoped memory for tpu_custom_call.1']
  %s0 = inlined_call_operand.vmem [shape: s32[16,1], index: 0, kind: input, shape index: {}]
  %s1 = inlined_call_operand.hbm [shape: s32[1,16], index: 1, kind: input, shape index: {}]
  %s2 = inlined_call_operand.vmem [shape: f32[16,3], index: 2, kind: input, shape index: {}]
  %s3 = inlined_call_operand.hbm [shape: bf16[3,6], index: 3, kind: input, shape index: {}]
  %s4 = inlined_call_operand.vmem [shape: bf16[3,6], index: 4, kind: input, shape index: {}]
  %s5 = inlined_call_operand.vmem [shape: f32[1,6], index: 5, kind: input, shape index: {}]
  %s6 = inlined_call_operand.vmem [shape: bf16[6,16], index: 6, kind: input, shape index: {}]
  %s7 = inlined_call_operand.vmem [shape: f32[1,16], index: 7, kind: input, shape index: {}]
  %s8 = inlined_call_operand.vmem [shape: bf16[16,32], index: 8, kind: input, shape index: {}]
  %s9 = inlined_call_operand.vmem [shape: bf16[16,32], index: 9, kind: input, shape index: {}]
  %s10 = inlined_call_operand.vmem [shape: f32[1,32], index: 10, kind: input, shape index: {}]
  %s11 = inlined_call_operand.vmem [shape: bf16[32,32], index: 11, kind: input, shape index: {}]
  %s12 = inlined_call_operand.vmem [shape: f32[1,32], index: 12, kind: input, shape index: {}]
  %s13 = inlined_call_operand.vmem [shape: bf16[32,64], index: 13, kind: input, shape index: {}]
  %s14 = inlined_call_operand.vmem [shape: f32[1,64], index: 14, kind: input, shape index: {}]
  %s15 = inlined_call_operand.vmem [shape: bf16[64,64], index: 15, kind: input, shape index: {}]
  %s16 = inlined_call_operand.vmem [shape: f32[1,64], index: 16, kind: input, shape index: {}]
  %s17 = inlined_call_operand.vmem [shape: bf16[64,1], index: 17, kind: input, shape index: {}]
  %s18 = inlined_call_operand.<no memory space> [shape: f32[1,1], index: 18, kind: input, shape index: {}]
  %s19 = inlined_call_operand.vmem [shape: f32[2,1], index: 19, kind: output, shape index: {}]
  %s20 = sld [smem:[#allocation0]]
  $region94: #{tpu_custom_call.1} parent=0
    _
  %s22 = ssub.s32 1, %s20
  %s23 = scalar_select 0, %s22, %s20
  %v24 = vstv %s18
  %25 = vst [vmem:[#allocation2] sm:$0x1] %v24
  $region1: #{tpu_custom_call.1} parent=0
    #allocation3 [shape = 'u8[512]{0}', space=vmem, size = 0x400, scoped, tag = 'input window, operand 1, single buffered']
    #allocation4 [shape = 's32[1]{0}', space=sflag, size = 0x4, scoped, tag = 'scoped memory for tpu_custom_call.1']
    #allocation5 [shape = 'u8[1024]{0}', space=vmem, size = 0x400, scoped, tag = 'input window, operand 3, single buffered']
    #allocation6 [shape = 's32[1]{0}', space=sflag, size = 0x4, scoped, tag = 'scoped memory for tpu_custom_call.1']
    %26 = vsyncpa [#allocation4], 0
    %27 = vsyncpa [#allocation6], 0
    // Predicated region
    $region2: #{tpu_custom_call.1} parent=1 // pred_check
      _
    $region3: #{tpu_custom_call.1} parent=1 // pred_check_branch
      %29 = sbr.rel (0) target = $region5
    $region4: #{tpu_custom_call.1} parent=1 // pred_region
      _
    $region5: #{tpu_custom_call.1} parent=1 // pred_fallthru
      _
    // Predicated region
    $region6: #{tpu_custom_call.1} parent=1 // pred_check
      _
    $region7: #{tpu_custom_call.1} parent=1 // pred_check_branch
      %31 = sbr.rel (0) target = $region9
    $region8: #{tpu_custom_call.1} parent=1 // pred_region
      %s33 = ssub.s32 16, 16
      %34 = vsyncadd [#allocation4], %s33
      %s36 = sshll.u32 [#allocation3], 4
      %s37 = int_to_ptr.vmem [resolvable:$true] %s36
      %39 = dma.hbm_to_vmem [thread:$0]  %s1, 16, %s37, [#allocation4]
    $region9: #{tpu_custom_call.1} parent=1 // pred_fallthru
      _
    // Predicated region
    $region10: #{tpu_custom_call.1} parent=1 // pred_check
      _
    $region11: #{tpu_custom_call.1} parent=1 // pred_check_branch
      %41 = sbr.rel (0) target = $region13
    $region12: #{tpu_custom_call.1} parent=1 // pred_region
      _
    $region13: #{tpu_custom_call.1} parent=1 // pred_fallthru
      _
    // Predicated region
    $region14: #{tpu_custom_call.1} parent=1 // pred_check
      _
    $region15: #{tpu_custom_call.1} parent=1 // pred_check_branch
      %43 = sbr.rel (0) target = $region17
    $region16: #{tpu_custom_call.1} parent=1 // pred_region
      %s45 = ssub.s32 32, 32
      %46 = vsyncadd [#allocation6], %s45
      %s48 = sshll.u32 [#allocation5], 4
      %s49 = int_to_ptr.vmem [resolvable:$true] %s48
      %51 = dma.hbm_to_vmem [thread:$0]  %s3, 32, %s49, [#allocation6]
    $region17: #{tpu_custom_call.1} parent=1 // pred_fallthru
      _
    // Predicated region
    $region18: #{tpu_custom_call.1} parent=1 // pred_check
      _
    $region19: #{tpu_custom_call.1} parent=1 // pred_check_branch
      %53 = sbr.rel (0) target = $region21
    $region20: #{tpu_custom_call.1} parent=1 // pred_region
      _
    $region21: #{tpu_custom_call.1} parent=1 // pred_fallthru
      _
    // Predicated region
    $region22: #{tpu_custom_call.1} parent=1 // pred_check
      _
    $region23: #{tpu_custom_call.1} parent=1 // pred_check_branch
      %55 = sbr.rel (0) target = $region25
    $region24: #{tpu_custom_call.1} parent=1 // pred_region
      _
    $region25: #{tpu_custom_call.1} parent=1 // pred_fallthru
      _
    // Predicated region
    $region26: #{tpu_custom_call.1} parent=1 // pred_check
      _
    $region27: #{tpu_custom_call.1} parent=1 // pred_check_branch
      %57 = sbr.rel (0) target = $region29
    $region28: #{tpu_custom_call.1} parent=1 // pred_region
      _
    $region29: #{tpu_custom_call.1} parent=1 // pred_fallthru
      _
    // Predicated region
    $region30: #{tpu_custom_call.1} parent=1 // pred_check
      _
    $region31: #{tpu_custom_call.1} parent=1 // pred_check_branch
      %59 = sbr.rel (0) target = $region33
    $region32: #{tpu_custom_call.1} parent=1 // pred_region
      _
    $region33: #{tpu_custom_call.1} parent=1 // pred_fallthru
      _
    // Predicated region
    $region34: #{tpu_custom_call.1} parent=1 // pred_check
      _
    $region35: #{tpu_custom_call.1} parent=1 // pred_check_branch
      %61 = sbr.rel (0) target = $region37
    $region36: #{tpu_custom_call.1} parent=1 // pred_region
      _
    $region37: #{tpu_custom_call.1} parent=1 // pred_fallthru
      _
    // Predicated region
    $region38: #{tpu_custom_call.1} parent=1 // pred_check
      _
    $region39: #{tpu_custom_call.1} parent=1 // pred_check_branch
      %63 = sbr.rel (0) target = $region41
    $region40: #{tpu_custom_call.1} parent=1 // pred_region
      _
    $region41: #{tpu_custom_call.1} parent=1 // pred_fallthru
      _
    // Predicated region
    $region42: #{tpu_custom_call.1} parent=1 // pred_check
      _
    $region43: #{tpu_custom_call.1} parent=1 // pred_check_branch
      %65 = sbr.rel (0) target = $region45
    $region44: #{tpu_custom_call.1} parent=1 // pred_region
      _
    $region45: #{tpu_custom_call.1} parent=1 // pred_fallthru
      _
    // Predicated region
    $region46: #{tpu_custom_call.1} parent=1 // pred_check
      _
    $region47: #{tpu_custom_call.1} parent=1 // pred_check_branch
      %67 = sbr.rel (0) target = $region49
    $region48: #{tpu_custom_call.1} parent=1 // pred_region
      _
    $region49: #{tpu_custom_call.1} parent=1 // pred_fallthru
      _
    // Predicated region
    $region50: #{tpu_custom_call.1} parent=1 // pred_check
      _
    $region51: #{tpu_custom_call.1} parent=1 // pred_check_branch
      %69 = sbr.rel (0) target = $region53
    $region52: #{tpu_custom_call.1} parent=1 // pred_region
      _
    $region53: #{tpu_custom_call.1} parent=1 // pred_fallthru
      _
    // Predicated region
    $region54: #{tpu_custom_call.1} parent=1 // pred_check
      _
    $region55: #{tpu_custom_call.1} parent=1 // pred_check_branch
      %71 = sbr.rel (0) target = $region57
    $region56: #{tpu_custom_call.1} parent=1 // pred_region
      _
    $region57: #{tpu_custom_call.1} parent=1 // pred_fallthru
      _
    // Predicated region
    $region58: #{tpu_custom_call.1} parent=1 // pred_check
      _
    $region59: #{tpu_custom_call.1} parent=1 // pred_check_branch
      %73 = sbr.rel (0) target = $region61
    $region60: #{tpu_custom_call.1} parent=1 // pred_region
      _
    $region61: #{tpu_custom_call.1} parent=1 // pred_fallthru
      _
    // Predicated region
    $region62: #{tpu_custom_call.1} parent=1 // pred_check
      _
    $region63: #{tpu_custom_call.1} parent=1 // pred_check_branch
      %75 = sbr.rel (0) target = $region65
    $region64: #{tpu_custom_call.1} parent=1 // pred_region
      _
    $region65: #{tpu_custom_call.1} parent=1 // pred_fallthru
      _
    // Predicated region
    $region66: #{tpu_custom_call.1} parent=1 // pred_check
      _
    $region67: #{tpu_custom_call.1} parent=1 // pred_check_branch
      %77 = sbr.rel (0) target = $region69
    $region68: #{tpu_custom_call.1} parent=1 // pred_region
      _
    $region69: #{tpu_custom_call.1} parent=1 // pred_fallthru
      _
    // Predicated region
    $region70: #{tpu_custom_call.1} parent=1 // pred_check
      _
    $region71: #{tpu_custom_call.1} parent=1 // pred_check_branch
      %79 = sbr.rel (0) target = $region73
    $region72: #{tpu_custom_call.1} parent=1 // pred_region
      _
    $region73: #{tpu_custom_call.1} parent=1 // pred_fallthru
      _
    // Predicated region
    $region74: #{tpu_custom_call.1} parent=1 // pred_check
      _
    $region75: #{tpu_custom_call.1} parent=1 // pred_check_branch
      %81 = sbr.rel (0) target = $region77
    $region76: #{tpu_custom_call.1} parent=1 // pred_region
      _
    $region77: #{tpu_custom_call.1} parent=1 // pred_fallthru
      _
    // Predicated region
    $region78: #{tpu_custom_call.1} parent=1 // pred_check
      _
    $region79: #{tpu_custom_call.1} parent=1 // pred_check_branch
      %83 = sbr.rel (0) target = $region81
    $region80: #{tpu_custom_call.1} parent=1 // pred_region
      %84 = dma.done [#allocation4], 16
    $region81: #{tpu_custom_call.1} parent=1 // pred_fallthru
      _
    // Predicated region
    $region82: #{tpu_custom_call.1} parent=1 // pred_check
      _
    $region83: #{tpu_custom_call.1} parent=1 // pred_check_branch
      %86 = sbr.rel (0) target = $region85
    $region84: #{tpu_custom_call.1} parent=1 // pred_region
      %87 = dma.done [#allocation6], 32
    $region85: #{tpu_custom_call.1} parent=1 // pred_fallthru
      _
    %v89 = vld [vmem:[%s0] sm:$0xff]
    %v90 = vld [vmem:[%s0 + $0x8] sm:$0xff]
    %v91 = vld [vmem:[#allocation3] sm:$0x1]
    %v92 = vlaneseq
    %v93 = vshrl.u32 %v92, 7
    %v94 = vadd.s32 %v93, 8
    %v95 = vlaneseq
    %v96 = vand.u32 %v95, 127
    %97 = vset.pattern.permute.xlu0 0
    %98 = vperm.xlu0 %97, %v89
    %v99 = vpop.permute.xlu0 %98
    %100 = vset.pattern.permute.xlu0 0
    %101 = vperm.xlu0 %100, %v90
    %v102 = vpop.permute.xlu0 %101
    %v103 = vlaneseq
    %v104 = vshrl.u32 %v103, 7
    %v105 = vsub.s32 0, %v104
    %v106 = vrot.slane %v91, %v105
    %vm107 = vcmp.eq.s32.totalorder %v99, %v106
    %vm108 = vcmp.eq.s32.totalorder %v102, %v106
    %vm109 = vcmp.ne.s32.totalorder %v93, %v96
    %vm110 = vcmp.ne.s32.totalorder %v94, %v96
    %vm111 = vmand %vm107, %vm109
    %vm112 = vmand %vm108, %vm110
    %v113 = vsel %vm111, 0.0, 1e+30
    %v114 = vsel %vm112, 0.0, 1e+30
    %v115 = vld [vmem:[%s2] sm:$0xff]
    %v116 = vld [vmem:[%s2 + $0x8] sm:$0xff]
    %v117 = vld [vmem:[#allocation5] sm:$0x3]
    %v118 = vld [vmem:[%s4] sm:$0x3]
    %v119 = vld [vmem:[%s5] sm:$0x1]
    %v120 = vld [vmem:[%s6] sm:$0x7]
    %v121 = vld [vmem:[%s7] sm:$0x1]
    %v122 = vmul.f32 %v115, %v115
    %v123 = vmul.f32 %v116, %v116
    %vm124 = vcmask 23552
    %v125 = vsel %vm124, %v122, 0.0
    %126 = vadd.xlane.f32.xlu0 %v125
    %v127 = vpop.xlane.xlu0 %126
    %v128 = vsel %vm124, %v123, 0.0
    %129 = vadd.xlane.f32.xlu0 %v128
    %v130 = vpop.xlane.xlu0 %129
    %131 = vxpose.xlu0.b32.start [1/16] %v127, 128
    %132 = vxpose.xlu0.b32.cont [2/16] %v130, 128
    %133 = vxpose.xlu0.b32.cont [3/16] 0.0, 128
    %134 = vxpose.xlu0.b32.cont [4/16] 0.0, 128
    %135 = vxpose.xlu0.b32.cont [5/16] 0.0, 128
    %136 = vxpose.xlu0.b32.cont [6/16] 0.0, 128
    %137 = vxpose.xlu0.b32.cont [7/16] 0.0, 128
    %138 = vxpose.xlu0.b32.cont [8/16] 0.0, 128
    %139 = vxpose.xlu0.b32.cont [9/16] 0.0, 128
    %140 = vxpose.xlu0.b32.cont [10/16] 0.0, 128
    %141 = vxpose.xlu0.b32.cont [11/16] 0.0, 128
    %142 = vxpose.xlu0.b32.cont [12/16] 0.0, 128
    %143 = vxpose.xlu0.b32.cont [13/16] 0.0, 128
    %144 = vxpose.xlu0.b32.cont [14/16] 0.0, 128
    %145 = vxpose.xlu0.b32.cont [15/16] 0.0, 128
    %146 = vxpose.xlu0.b32.end [16/16] 0.0, 128
    %v147 = vpop.trf.xlu0
    %v148 = vpop.trf.xlu0
    %v149 = vpop.trf.xlu0
    %v150 = vpop.trf.xlu0
    %v151 = vpop.trf.xlu0
    %v152 = vpop.trf.xlu0
    %v153 = vpop.trf.xlu0
    %v154 = vpop.trf.xlu0
    %v155 = vpop.trf.xlu0
    %v156 = vpop.trf.xlu0
    %v157 = vpop.trf.xlu0
    %v158 = vpop.trf.xlu0
    %v159 = vpop.trf.xlu0
    %v160 = vpop.trf.xlu0
    %v161 = vpop.trf.xlu0
    %v162 = vpop.trf.xlu0
    %v163 = vlaneseq
    %v164 = vshrl.u32 %v163, 7
    %v165 = vsub.s32 0, %v164
    %v166 = vrot.slane %v147, %v165
    %v167 = vadd.f32 %v127, %v166
    %v168 = vadd.f32 %v130, %v166
    %v170 = vsel %vm124, %v115, 0
    %v173 = vsel %vm124, %v116, 0
    %175 = vmatprep.subr.mxu0 0.0
    %176 = vmatpush1.xpose.msra.mxu0 %v170
    %177 = vmatprep.subr.mxu0 0.0
    %178 = vmatpush1.xpose.msra.mxu0 %v173
    %179 = vmatprep.subr.mxu0 0.0
    %180 = vmatpush1.xpose.msra.mxu0 0.0
    %181 = vmatprep.subr.mxu0 0.0
    %182 = vmatpush1.xpose.msra.mxu0 0.0
    %183 = vmatprep.subr.mxu0 0.0
    %184 = vmatpush1.xpose.msra.mxu0 0.0
    %185 = vmatprep.subr.mxu0 0.0
    %186 = vmatpush1.xpose.msra.mxu0 0.0
    %187 = vmatprep.subr.mxu0 0.0
    %188 = vmatpush1.xpose.msra.mxu0 0.0
    %189 = vmatprep.subr.mxu0 0.0
    %190 = vmatpush1.xpose.msra.mxu0 0.0
    %191 = vmatprep.subr.mxu0 0.0
    %192 = vmatpush1.xpose.msra.mxu0 0.0
    %193 = vmatprep.subr.mxu0 0.0
    %194 = vmatpush1.xpose.msra.mxu0 0.0
    %195 = vmatprep.subr.mxu0 0.0
    %196 = vmatpush1.xpose.msra.mxu0 0.0
    %197 = vmatprep.subr.mxu0 0.0
    %198 = vmatpush1.xpose.msra.mxu0 0.0
    %199 = vmatprep.subr.mxu0 0.0
    %200 = vmatpush1.xpose.msra.mxu0 0.0
    %201 = vmatprep.subr.mxu0 0.0
    %202 = vmatpush1.xpose.msra.mxu0 0.0
    %203 = vmatprep.subr.mxu0 0.0
    %204 = vmatpush1.xpose.msra.mxu0 0.0
    %205 = vmatprep.subr.mxu0 0.0
    %206 = vmatpush1.xpose.msra.mxu0 0.0
    %207 = vmatprep.subr.mxu0 0.0
    %208 = vmatpush1.xpose.msra.mxu0 0.0
    %209 = vmatprep.subr.mxu0 0.0
    %210 = vmatpush1.xpose.msra.mxu0 0.0
    %211 = vmatprep.subr.mxu0 0.0
    %212 = vmatpush1.xpose.msra.mxu0 0.0
    %213 = vmatprep.subr.mxu0 0.0
    %214 = vmatpush1.xpose.msra.mxu0 0.0
    %215 = vmatprep.subr.mxu0 0.0
    %216 = vmatpush1.xpose.msra.mxu0 0.0
    %217 = vmatprep.subr.mxu0 0.0
    %218 = vmatpush1.xpose.msra.mxu0 0.0
    %219 = vmatprep.subr.mxu0 0.0
    %220 = vmatpush1.xpose.msra.mxu0 0.0
    %221 = vmatprep.subr.mxu0 0.0
    %222 = vmatpush1.xpose.msra.mxu0 0.0
    %223 = vmatprep.subr.mxu0 0.0
    %224 = vmatpush1.xpose.msra.mxu0 0.0
    %225 = vmatprep.subr.mxu0 0.0
    %226 = vmatpush1.xpose.msra.mxu0 0.0
    %227 = vmatprep.subr.mxu0 0.0
    %228 = vmatpush1.xpose.msra.mxu0 0.0
    %229 = vmatprep.subr.mxu0 0.0
    %230 = vmatpush1.xpose.msra.mxu0 0.0
    %231 = vmatprep.subr.mxu0 0.0
    %232 = vmatpush1.xpose.msra.mxu0 0.0
    %233 = vmatprep.subr.mxu0 0.0
    %234 = vmatpush1.xpose.msra.mxu0 0.0
    %235 = vmatprep.subr.mxu0 0.0
    %236 = vmatpush1.xpose.msra.mxu0 0.0
    %237 = vmatprep.subr.mxu0 0.0
    %238 = vmatpush1.xpose.msra.mxu0 0.0
    %239 = vmatprep.mubr.f32.mxu0 0.0
    %240 = vmatmul.mubr.f32.gmra.mrb[0].mxu0 %v170
    %v241 = vpop.f32.mrb[0].mxu0
    %v242 = vadd.f32 0.0, %v241
    %v243 = vpop.f32.mrb[0].mxu0
    %244 = vmatprep.mubr.f32.mxu0 0.0
    %245 = vmatmul.mubr.f32.gmra.mrb[0].mxu0 %v173
    %v246 = vpop.f32.mrb[0].mxu0
    %v247 = vadd.f32 0.0, %v246
    %v248 = vpop.f32.mrb[0].mxu0
    %249 = vdwg.mxu0
    %v250 = vmul.f32 %v242, 2.0
    %v251 = vmul.f32 %v247, 2.0
    %v252 = vsub.f32 %v167, %v250
    %v253 = vsub.f32 %v168, %v251
    %v254 = vadd.f32 %v252, %v113
    %v255 = vadd.f32 %v253, %v114
    %v256 = vpack.c.bf16 %v116, %v115
    %v258 = vlaneseq
    %v259 = vshrl.u32 %v258, 7
    %v260 = vsub.s32 0, %v259
    %v261 = vrot.slane %v119, %v260
    %v264 = vsel %vm124, %v256, 0
    %vm266 = vcmask 1040384
    %vm267 = vcmask 1041408
    %v268 = vsel %vm266, 4294967295, 65535
    %v269 = vsel %vm267, %v268, 0
    %v271 = vand.u32 %v117, %v269
    %273 = vmatprep.subr.bf16.mxu0 0
    %274 = vmatpush1.bf16.msra.mxu0 %v271
    %275 = vmatprep.subr.bf16.mxu0 0
    %276 = vmatpush1.bf16.msra.mxu0 0
    %277 = vmatprep.subr.bf16.mxu0 0
    %278 = vmatpush1.bf16.msra.mxu0 0
    %279 = vmatprep.subr.bf16.mxu0 0
    %280 = vmatpush1.bf16.msra.mxu0 0
    %281 = vmatprep.subr.bf16.mxu0 0
    %282 = vmatpush1.bf16.msra.mxu0 0
    %283 = vmatprep.subr.bf16.mxu0 0
    %284 = vmatpush1.bf16.msra.mxu0 0
    %285 = vmatprep.subr.bf16.mxu0 0
    %286 = vmatpush1.bf16.msra.mxu0 0
    %287 = vmatprep.subr.bf16.mxu0 0
    %288 = vmatpush1.bf16.msra.mxu0 0
    %289 = vmatprep.subr.bf16.mxu0 0
    %290 = vmatpush1.bf16.msra.mxu0 0
    %291 = vmatprep.subr.bf16.mxu0 0
    %292 = vmatpush1.bf16.msra.mxu0 0
    %293 = vmatprep.subr.bf16.mxu0 0
    %294 = vmatpush1.bf16.msra.mxu0 0
    %295 = vmatprep.subr.bf16.mxu0 0
    %296 = vmatpush1.bf16.msra.mxu0 0
    %297 = vmatprep.subr.bf16.mxu0 0
    %298 = vmatpush1.bf16.msra.mxu0 0
    %299 = vmatprep.subr.bf16.mxu0 0
    %300 = vmatpush1.bf16.msra.mxu0 0
    %301 = vmatprep.subr.bf16.mxu0 0
    %302 = vmatpush1.bf16.msra.mxu0 0
    %303 = vmatprep.subr.bf16.mxu0 0
    %304 = vmatpush1.bf16.msra.mxu0 0
    %305 = vmatprep.mubr.bf16.mxu0 0
    %306 = vmatmul.mubr.bf16.gmra.mrb[0].mxu0 %v264
    %v307 = vpop.f32.mrb[0].mxu0
    %v308 = vadd.f32 %v261, %v307
    %v309 = vpop.f32.mrb[0].mxu0
    %v310 = vpop.f32.mrb[0].mxu0
    %v311 = vadd.f32 %v261, %v310
    %v312 = vpop.f32.mrb[0].mxu0
    %313 = vdwg.mxu0
    %vm314 = vcmask 130048
    %v315 = vsel %vm314, %v254, inf
    %316 = vmin.xlane.f32.xlu0 %v315
    %v317 = vpop.xlane.xlu0 %316
    %v318 = vsel %vm314, %v255, inf
    %319 = vmin.xlane.f32.xlu0 %v318
    %v320 = vpop.xlane.xlu0 %319
    %vm321 = vcmp.le.f32.partialorder %v254, %v317
    %vm322 = vcmp.le.f32.partialorder %v255, %v320
    %v323 = vsel %vm321, %v96, 16
    %v324 = vsel %vm322, %v96, 16
    %v325 = vsel %vm314, %v323, 2147483647
    %v326 = vand.u32 %v325, 65535
    %v327 = vshra.s32 %v325, 16
    %v328 = vcvt.s32.f32 %v326
    %v329 = vcvt.s32.f32 %v327
    %330 = vmin.xlane.f32.xlu0 %v329
    %v331 = vpop.xlane.xlu0 %330
    %vm332 = vcmp.eq.f32.partialorder %v329, %v331
    %v333 = vsel %vm332, %v328, inf
    %334 = vmin.xlane.f32.xlu0 %v333
    %v335 = vpop.xlane.xlu0 %334
    %v336 = vcvt.f32.s32 %v335
    %v337 = vcvt.f32.s32 %v331
    %v338 = vshll.u32 %v337, 16
    %v339 = vadd.s32 %v338, %v336
    %v340 = vsel %vm314, %v324, 2147483647
    %v341 = vand.u32 %v340, 65535
    %v342 = vshra.s32 %v340, 16
    %v343 = vcvt.s32.f32 %v341
    %v344 = vcvt.s32.f32 %v342
    %345 = vmin.xlane.f32.xlu0 %v344
    %v346 = vpop.xlane.xlu0 %345
    %vm347 = vcmp.eq.f32.partialorder %v344, %v346
    %v348 = vsel %vm347, %v343, inf
    %349 = vmin.xlane.f32.xlu0 %v348
    %v350 = vpop.xlane.xlu0 %349
    %v351 = vcvt.f32.s32 %v350
    %v352 = vcvt.f32.s32 %v346
    %v353 = vshll.u32 %v352, 16
    %v354 = vadd.s32 %v353, %v351
    %vm355 = vcmp.eq.s32.totalorder %v96, %v339
    %vm356 = vcmp.eq.s32.totalorder %v96, %v354
    %v357 = vsel %vm355, 1e+30, %v254
    %v358 = vsel %vm356, 1e+30, %v255
    %v359 = vsel %vm355, 1.0, 0.0
    %v360 = vsel %vm356, 1.0, 0.0
    %v361 = vpack.c.bf16 %v360, %v359
    %v363 = vsel %vm314, %v361, 0
    %365 = vmatprep.subr.bf16.mxu0 0
    %366 = vmatpush1.bf16.msra.mxu0 %v256
    %367 = vmatprep.subr.bf16.mxu0 0
    %368 = vmatpush1.bf16.msra.mxu0 0
    %369 = vmatprep.subr.bf16.mxu0 0
    %370 = vmatpush1.bf16.msra.mxu0 0
    %371 = vmatprep.subr.bf16.mxu0 0
    %372 = vmatpush1.bf16.msra.mxu0 0
    %373 = vmatprep.subr.bf16.mxu0 0
    %374 = vmatpush1.bf16.msra.mxu0 0
    %375 = vmatprep.subr.bf16.mxu0 0
    %376 = vmatpush1.bf16.msra.mxu0 0
    %377 = vmatprep.subr.bf16.mxu0 0
    %378 = vmatpush1.bf16.msra.mxu0 0
    %379 = vmatprep.subr.bf16.mxu0 0
    %380 = vmatpush1.bf16.msra.mxu0 0
    %381 = vmatprep.subr.bf16.mxu0 0
    %382 = vmatpush1.bf16.msra.mxu0 0
    %383 = vmatprep.subr.bf16.mxu0 0
    %384 = vmatpush1.bf16.msra.mxu0 0
    %385 = vmatprep.subr.bf16.mxu0 0
    %386 = vmatpush1.bf16.msra.mxu0 0
    %387 = vmatprep.subr.bf16.mxu0 0
    %388 = vmatpush1.bf16.msra.mxu0 0
    %389 = vmatprep.subr.bf16.mxu0 0
    %390 = vmatpush1.bf16.msra.mxu0 0
    %391 = vmatprep.subr.bf16.mxu0 0
    %392 = vmatpush1.bf16.msra.mxu0 0
    %393 = vmatprep.subr.bf16.mxu0 0
    %394 = vmatpush1.bf16.msra.mxu0 0
    %395 = vmatprep.subr.bf16.mxu0 0
    %396 = vmatpush1.bf16.msra.mxu0 0
    %397 = vmatprep.mubr.bf16.mxu0 0
    %398 = vmatmul.mubr.bf16.gmra.mrb[0].mxu0 %v363
    %v399 = vpop.f32.mrb[0].mxu0
    %v400 = vadd.f32 0.0, %v399
    %v401 = vpop.f32.mrb[0].mxu0
    %v402 = vpop.f32.mrb[0].mxu0
    %v403 = vadd.f32 0.0, %v402
    %v404 = vpop.f32.mrb[0].mxu0
    %405 = vdwg.mxu0
    %v406 = vpack.c.bf16 %v403, %v400
    %v408 = vsel %vm124, %v406, 0
    %v411 = vand.u32 %v118, %v269
    %413 = vmatprep.subr.bf16.mxu0 0
    %414 = vmatpush1.bf16.msra.mxu0 %v411
    %415 = vmatprep.subr.bf16.mxu0 0
    %416 = vmatpush1.bf16.msra.mxu0 0
    %417 = vmatprep.subr.bf16.mxu0 0
    %418 = vmatpush1.bf16.msra.mxu0 0
    %419 = vmatprep.subr.bf16.mxu0 0
    %420 = vmatpush1.bf16.msra.mxu0 0
    %421 = vmatprep.subr.bf16.mxu0 0
    %422 = vmatpush1.bf16.msra.mxu0 0
    %423 = vmatprep.subr.bf16.mxu0 0
    %424 = vmatpush1.bf16.msra.mxu0 0
    %425 = vmatprep.subr.bf16.mxu0 0
    %426 = vmatpush1.bf16.msra.mxu0 0
    %427 = vmatprep.subr.bf16.mxu0 0
    %428 = vmatpush1.bf16.msra.mxu0 0
    %429 = vmatprep.subr.bf16.mxu0 0
    %430 = vmatpush1.bf16.msra.mxu0 0
    %431 = vmatprep.subr.bf16.mxu0 0
    %432 = vmatpush1.bf16.msra.mxu0 0
    %433 = vmatprep.subr.bf16.mxu0 0
    %434 = vmatpush1.bf16.msra.mxu0 0
    %435 = vmatprep.subr.bf16.mxu0 0
    %436 = vmatpush1.bf16.msra.mxu0 0
    %437 = vmatprep.subr.bf16.mxu0 0
    %438 = vmatpush1.bf16.msra.mxu0 0
    %439 = vmatprep.subr.bf16.mxu0 0
    %440 = vmatpush1.bf16.msra.mxu0 0
    %441 = vmatprep.subr.bf16.mxu0 0
    %442 = vmatpush1.bf16.msra.mxu0 0
    %443 = vmatprep.subr.bf16.mxu0 0
    %444 = vmatpush1.bf16.msra.mxu0 0
    %445 = vmatprep.mubr.bf16.mxu0 0
    %446 = vmatmul.mubr.bf16.gmra.mrb[0].mxu0 %v408
    %v447 = vpop.f32.mrb[0].mxu0
    %v448 = vadd.f32 0.0, %v447
    %v449 = vpop.f32.mrb[0].mxu0
    %v450 = vpop.f32.mrb[0].mxu0
    %v451 = vadd.f32 0.0, %v450
    %v452 = vpop.f32.mrb[0].mxu0
    %453 = vdwg.mxu0
    %v454 = vadd.f32 %v308, %v448
    %v455 = vadd.f32 %v311, %v451
    %vm456 = vcmp.gt.f32.partialorder %v454, 0.0
    %vm457 = vcmp.gt.f32.partialorder %v455, 0.0
    %v458 = vmul.f32 %v454, 0.2
    %v459 = vmul.f32 %v455, 0.2
    %v460 = vsel %vm456, %v454, %v458
    %v461 = vsel %vm457, %v455, %v459
    %v462 = vpack.c.bf16 %v461, %v460
    %vm463 = vcmask 48128
    %v465 = vsel %vm463, %v462, 0
    %vm467 = vcmask 1042432
    %v469 = vsel %vm467, %v120, 0
    %471 = vmatprep.subr.bf16.mxu0 0
    %472 = vmatpush1.bf16.msra.mxu0 %v469
    %473 = vmatprep.subr.bf16.mxu0 0
    %474 = vmatpush1.bf16.msra.mxu0 0
    %475 = vmatprep.subr.bf16.mxu0 0
    %476 = vmatpush1.bf16.msra.mxu0 0
    %477 = vmatprep.subr.bf16.mxu0 0
    %478 = vmatpush1.bf16.msra.mxu0 0
    %479 = vmatprep.subr.bf16.mxu0 0
    %480 = vmatpush1.bf16.msra.mxu0 0
    %481 = vmatprep.subr.bf16.mxu0 0
    %482 = vmatpush1.bf16.msra.mxu0 0
    %483 = vmatprep.subr.bf16.mxu0 0
    %484 = vmatpush1.bf16.msra.mxu0 0
    %485 = vmatprep.subr.bf16.mxu0 0
    %486 = vmatpush1.bf16.msra.mxu0 0
    %487 = vmatprep.subr.bf16.mxu0 0
    %488 = vmatpush1.bf16.msra.mxu0 0
    %489 = vmatprep.subr.bf16.mxu0 0
    %490 = vmatpush1.bf16.msra.mxu0 0
    %491 = vmatprep.subr.bf16.mxu0 0
    %492 = vmatpush1.bf16.msra.mxu0 0
    %493 = vmatprep.subr.bf16.mxu0 0
    %494 = vmatpush1.bf16.msra.mxu0 0
    %495 = vmatprep.subr.bf16.mxu0 0
    %496 = vmatpush1.bf16.msra.mxu0 0
    %497 = vmatprep.subr.bf16.mxu0 0
    %498 = vmatpush1.bf16.msra.mxu0 0
    %499 = vmatprep.subr.bf16.mxu0 0
    %500 = vmatpush1.bf16.msra.mxu0 0
    %501 = vmatprep.subr.bf16.mxu0 0
    %502 = vmatpush1.bf16.msra.mxu0 0
    %503 = vmatprep.mubr.bf16.mxu0 0
    %504 = vmatmul.mubr.bf16.gmra.mrb[0].mxu0 %v465
    %v505 = vpop.f32.mrb[0].mxu0
    %v506 = vadd.f32 0.0, %v505
    %v507 = vpop.f32.mrb[0].mxu0
    %v508 = vpop.f32.mrb[0].mxu0
    %v509 = vadd.f32 0.0, %v508
    %v510 = vpop.f32.mrb[0].mxu0
    %511 = vdwg.mxu0
    %vm512 = vcmp.lt.f32.partialorder %v317, 5e+29
    %vm513 = vcmp.lt.f32.partialorder %v320, 5e+29
    %v514 = vsel %vm512, 1, 0
    %v515 = vsel %vm513, 1, 0
    %vm516 = vcmp.eq.s32.totalorder %v514, 1
    %vm517 = vcmp.eq.s32.totalorder %v515, 1
    %v518 = vsel %vm516, %v506, -1e+30
    %v519 = vsel %vm517, %v509, -1e+30
    %v520 = vmax.f32 %v518, -1e+30
    %v521 = vmax.f32 %v519, -1e+30
    %v522 = vsel %vm314, %v357, inf
    %523 = vmin.xlane.f32.xlu0 %v522
    %v524 = vpop.xlane.xlu0 %523
    %v525 = vsel %vm314, %v358, inf
    %526 = vmin.xlane.f32.xlu0 %v525
    %v527 = vpop.xlane.xlu0 %526
    %vm528 = vcmp.le.f32.partialorder %v357, %v524
    %vm529 = vcmp.le.f32.partialorder %v358, %v527
    %v530 = vsel %vm528, %v96, 16
    %v531 = vsel %vm529, %v96, 16
    %v532 = vsel %vm314, %v530, 2147483647
    %v533 = vand.u32 %v532, 65535
    %v534 = vshra.s32 %v532, 16
    %v535 = vcvt.s32.f32 %v533
    %v536 = vcvt.s32.f32 %v534
    %537 = vmin.xlane.f32.xlu0 %v536
    %v538 = vpop.xlane.xlu0 %537
    %vm539 = vcmp.eq.f32.partialorder %v536, %v538
    %v540 = vsel %vm539, %v535, inf
    %541 = vmin.xlane.f32.xlu0 %v540
    %v542 = vpop.xlane.xlu0 %541
    %v543 = vcvt.f32.s32 %v542
    %v544 = vcvt.f32.s32 %v538
    %v545 = vshll.u32 %v544, 16
    %v546 = vadd.s32 %v545, %v543
    %v547 = vsel %vm314, %v531, 2147483647
    %v548 = vand.u32 %v547, 65535
    %v549 = vshra.s32 %v547, 16
    %v550 = vcvt.s32.f32 %v548
    %v551 = vcvt.s32.f32 %v549
    %552 = vmin.xlane.f32.xlu0 %v551
    %v553 = vpop.xlane.xlu0 %552
    %vm554 = vcmp.eq.f32.partialorder %v551, %v553
    %v555 = vsel %vm554, %v550, inf
    %556 = vmin.xlane.f32.xlu0 %v555
    %v557 = vpop.xlane.xlu0 %556
    %v558 = vcvt.f32.s32 %v557
    %v559 = vcvt.f32.s32 %v553
    %v560 = vshll.u32 %v559, 16
    %v561 = vadd.s32 %v560, %v558
    %vm562 = vcmp.eq.s32.totalorder %v96, %v546
    %vm563 = vcmp.eq.s32.totalorder %v96, %v561
    %v564 = vsel %vm562, 1e+30, %v357
    %v565 = vsel %vm563, 1e+30, %v358
    %v566 = vsel %vm562, 1.0, 0.0
    %v567 = vsel %vm563, 1.0, 0.0
    %v568 = vpack.c.bf16 %v567, %v566
    %v570 = vsel %vm314, %v568, 0
    %572 = vmatprep.subr.bf16.mxu0 0
    %573 = vmatpush1.bf16.msra.mxu0 %v256
    %574 = vmatprep.subr.bf16.mxu0 0
    %575 = vmatpush1.bf16.msra.mxu0 0
    %576 = vmatprep.subr.bf16.mxu0 0
    %577 = vmatpush1.bf16.msra.mxu0 0
    %578 = vmatprep.subr.bf16.mxu0 0
    %579 = vmatpush1.bf16.msra.mxu0 0
    %580 = vmatprep.subr.bf16.mxu0 0
    %581 = vmatpush1.bf16.msra.mxu0 0
    %582 = vmatprep.subr.bf16.mxu0 0
    %583 = vmatpush1.bf16.msra.mxu0 0
    %584 = vmatprep.subr.bf16.mxu0 0
    %585 = vmatpush1.bf16.msra.mxu0 0
    %586 = vmatprep.subr.bf16.mxu0 0
    %587 = vmatpush1.bf16.msra.mxu0 0
    %588 = vmatprep.subr.bf16.mxu0 0
    %589 = vmatpush1.bf16.msra.mxu0 0
    %590 = vmatprep.subr.bf16.mxu0 0
    %591 = vmatpush1.bf16.msra.mxu0 0
    %592 = vmatprep.subr.bf16.mxu0 0
    %593 = vmatpush1.bf16.msra.mxu0 0
    %594 = vmatprep.subr.bf16.mxu0 0
    %595 = vmatpush1.bf16.msra.mxu0 0
    %596 = vmatprep.subr.bf16.mxu0 0
    %597 = vmatpush1.bf16.msra.mxu0 0
    %598 = vmatprep.subr.bf16.mxu0 0
    %599 = vmatpush1.bf16.msra.mxu0 0
    %600 = vmatprep.subr.bf16.mxu0 0
    %601 = vmatpush1.bf16.msra.mxu0 0
    %602 = vmatprep.subr.bf16.mxu0 0
    %603 = vmatpush1.bf16.msra.mxu0 0
    %604 = vmatprep.mubr.bf16.mxu0 0
    %605 = vmatmul.mubr.bf16.gmra.mrb[0].mxu0 %v570
    %v606 = vpop.f32.mrb[0].mxu0
    %v607 = vadd.f32 0.0, %v606
    %v608 = vpop.f32.mrb[0].mxu0
    %v609 = vpop.f32.mrb[0].mxu0
    %v610 = vadd.f32 0.0, %v609
    %v611 = vpop.f32.mrb[0].mxu0
    %612 = vdwg.mxu0
    %v613 = vpack.c.bf16 %v610, %v607
    %v615 = vsel %vm124, %v613, 0
    %617 = vmatprep.subr.bf16.mxu0 0
    %618 = vmatpush1.bf16.msra.mxu0 %v411
    %619 = vmatprep.subr.bf16.mxu0 0
    %620 = vmatpush1.bf16.msra.mxu0 0
    %621 = vmatprep.subr.bf16.mxu0 0
    %622 = vmatpush1.bf16.msra.mxu0 0
    %623 = vmatprep.subr.bf16.mxu0 0
    %624 = vmatpush1.bf16.msra.mxu0 0
    %625 = vmatprep.subr.bf16.mxu0 0
    %626 = vmatpush1.bf16.msra.mxu0 0
    %627 = vmatprep.subr.bf16.mxu0 0
    %628 = vmatpush1.bf16.msra.mxu0 0
    %629 = vmatprep.subr.bf16.mxu0 0
    %630 = vmatpush1.bf16.msra.mxu0 0
    %631 = vmatprep.subr.bf16.mxu0 0
    %632 = vmatpush1.bf16.msra.mxu0 0
    %633 = vmatprep.subr.bf16.mxu0 0
    %634 = vmatpush1.bf16.msra.mxu0 0
    %635 = vmatprep.subr.bf16.mxu0 0
    %636 = vmatpush1.bf16.msra.mxu0 0
    %637 = vmatprep.subr.bf16.mxu0 0
    %638 = vmatpush1.bf16.msra.mxu0 0
    %639 = vmatprep.subr.bf16.mxu0 0
    %640 = vmatpush1.bf16.msra.mxu0 0
    %641 = vmatprep.subr.bf16.mxu0 0
    %642 = vmatpush1.bf16.msra.mxu0 0
    %643 = vmatprep.subr.bf16.mxu0 0
    %644 = vmatpush1.bf16.msra.mxu0 0
    %645 = vmatprep.subr.bf16.mxu0 0
    %646 = vmatpush1.bf16.msra.mxu0 0
    %647 = vmatprep.subr.bf16.mxu0 0
    %648 = vmatpush1.bf16.msra.mxu0 0
    %649 = vmatprep.mubr.bf16.mxu0 0
    %650 = vmatmul.mubr.bf16.gmra.mrb[0].mxu0 %v615
    %v651 = vpop.f32.mrb[0].mxu0
    %v652 = vadd.f32 0.0, %v651
    %v653 = vpop.f32.mrb[0].mxu0
    %v654 = vpop.f32.mrb[0].mxu0
    %v655 = vadd.f32 0.0, %v654
    %v656 = vpop.f32.mrb[0].mxu0
    %657 = vdwg.mxu0
    %v658 = vadd.f32 %v308, %v652
    %v659 = vadd.f32 %v311, %v655
    %vm660 = vcmp.gt.f32.partialorder %v658, 0.0
    %vm661 = vcmp.gt.f32.partialorder %v659, 0.0
    %v662 = vmul.f32 %v658, 0.2
    %v663 = vmul.f32 %v659, 0.2
    %v664 = vsel %vm660, %v658, %v662
    %v665 = vsel %vm661, %v659, %v663
    %v666 = vpack.c.bf16 %v665, %v664
    %v668 = vsel %vm463, %v666, 0
    %670 = vmatprep.subr.bf16.mxu0 0
    %671 = vmatpush1.bf16.msra.mxu0 %v469
    %672 = vmatprep.subr.bf16.mxu0 0
    %673 = vmatpush1.bf16.msra.mxu0 0
    %674 = vmatprep.subr.bf16.mxu0 0
    %675 = vmatpush1.bf16.msra.mxu0 0
    %676 = vmatprep.subr.bf16.mxu0 0
    %677 = vmatpush1.bf16.msra.mxu0 0
    %678 = vmatprep.subr.bf16.mxu0 0
    %679 = vmatpush1.bf16.msra.mxu0 0
    %680 = vmatprep.subr.bf16.mxu0 0
    %681 = vmatpush1.bf16.msra.mxu0 0
    %682 = vmatprep.subr.bf16.mxu0 0
    %683 = vmatpush1.bf16.msra.mxu0 0
    %684 = vmatprep.subr.bf16.mxu0 0
    %685 = vmatpush1.bf16.msra.mxu0 0
    %686 = vmatprep.subr.bf16.mxu0 0
    %687 = vmatpush1.bf16.msra.mxu0 0
    %688 = vmatprep.subr.bf16.mxu0 0
    %689 = vmatpush1.bf16.msra.mxu0 0
    %690 = vmatprep.subr.bf16.mxu0 0
    %691 = vmatpush1.bf16.msra.mxu0 0
    %692 = vmatprep.subr.bf16.mxu0 0
    %693 = vmatpush1.bf16.msra.mxu0 0
    %694 = vmatprep.subr.bf16.mxu0 0
    %695 = vmatpush1.bf16.msra.mxu0 0
    %696 = vmatprep.subr.bf16.mxu0 0
    %697 = vmatpush1.bf16.msra.mxu0 0
    %698 = vmatprep.subr.bf16.mxu0 0
    %699 = vmatpush1.bf16.msra.mxu0 0
    %700 = vmatprep.subr.bf16.mxu0 0
    %701 = vmatpush1.bf16.msra.mxu0 0
    %702 = vmatprep.mubr.bf16.mxu0 0
    %703 = vmatmul.mubr.bf16.gmra.mrb[0].mxu0 %v668
    %v704 = vpop.f32.mrb[0].mxu0
    %v705 = vadd.f32 0.0, %v704
    %v706 = vpop.f32.mrb[0].mxu0
    %v707 = vpop.f32.mrb[0].mxu0
    %v708 = vadd.f32 0.0, %v707
    %v709 = vpop.f32.mrb[0].mxu0
    %710 = vdwg.mxu0
    %vm711 = vcmp.lt.f32.partialorder %v524, 5e+29
    %vm712 = vcmp.lt.f32.partialorder %v527, 5e+29
    %v713 = vsel %vm711, 1, 0
    %v714 = vsel %vm712, 1, 0
    %vm715 = vcmp.eq.s32.totalorder %v713, 1
    %vm716 = vcmp.eq.s32.totalorder %v714, 1
    %v717 = vsel %vm715, %v705, -1e+30
    %v718 = vsel %vm716, %v708, -1e+30
    %v719 = vmax.f32 %v520, %v717
    %v720 = vmax.f32 %v521, %v718
    %v721 = vsel %vm314, %v564, inf
    %722 = vmin.xlane.f32.xlu0 %v721
    %v723 = vpop.xlane.xlu0 %722
    %v724 = vsel %vm314, %v565, inf
    %725 = vmin.xlane.f32.xlu0 %v724
    %v726 = vpop.xlane.xlu0 %725
    %vm727 = vcmp.le.f32.partialorder %v564, %v723
    %vm728 = vcmp.le.f32.partialorder %v565, %v726
    %v729 = vsel %vm727, %v96, 16
    %v730 = vsel %vm728, %v96, 16
    %v731 = vsel %vm314, %v729, 2147483647
    %v732 = vand.u32 %v731, 65535
    %v733 = vshra.s32 %v731, 16
    %v734 = vcvt.s32.f32 %v732
    %v735 = vcvt.s32.f32 %v733
    %736 = vmin.xlane.f32.xlu0 %v735
    %v737 = vpop.xlane.xlu0 %736
    %vm738 = vcmp.eq.f32.partialorder %v735, %v737
    %v739 = vsel %vm738, %v734, inf
    %740 = vmin.xlane.f32.xlu0 %v739
    %v741 = vpop.xlane.xlu0 %740
    %v742 = vcvt.f32.s32 %v741
    %v743 = vcvt.f32.s32 %v737
    %v744 = vshll.u32 %v743, 16
    %v745 = vadd.s32 %v744, %v742
    %v746 = vsel %vm314, %v730, 2147483647
    %v747 = vand.u32 %v746, 65535
    %v748 = vshra.s32 %v746, 16
    %v749 = vcvt.s32.f32 %v747
    %v750 = vcvt.s32.f32 %v748
    %751 = vmin.xlane.f32.xlu0 %v750
    %v752 = vpop.xlane.xlu0 %751
    %vm753 = vcmp.eq.f32.partialorder %v750, %v752
    %v754 = vsel %vm753, %v749, inf
    %755 = vmin.xlane.f32.xlu0 %v754
    %v756 = vpop.xlane.xlu0 %755
    %v757 = vcvt.f32.s32 %v756
    %v758 = vcvt.f32.s32 %v752
    %v759 = vshll.u32 %v758, 16
    %v760 = vadd.s32 %v759, %v757
    %vm761 = vcmp.eq.s32.totalorder %v96, %v745
    %vm762 = vcmp.eq.s32.totalorder %v96, %v760
    %v763 = vsel %vm761, 1e+30, %v564
    %v764 = vsel %vm762, 1e+30, %v565
    %v765 = vsel %vm761, 1.0, 0.0
    %v766 = vsel %vm762, 1.0, 0.0
    %v767 = vpack.c.bf16 %v766, %v765
    %v769 = vsel %vm314, %v767, 0
    %771 = vmatprep.subr.bf16.mxu0 0
    %772 = vmatpush1.bf16.msra.mxu0 %v256
    %773 = vmatprep.subr.bf16.mxu0 0
    %774 = vmatpush1.bf16.msra.mxu0 0
    %775 = vmatprep.subr.bf16.mxu0 0
    %776 = vmatpush1.bf16.msra.mxu0 0
    %777 = vmatprep.subr.bf16.mxu0 0
    %778 = vmatpush1.bf16.msra.mxu0 0
    %779 = vmatprep.subr.bf16.mxu0 0
    %780 = vmatpush1.bf16.msra.mxu0 0
    %781 = vmatprep.subr.bf16.mxu0 0
    %782 = vmatpush1.bf16.msra.mxu0 0
    %783 = vmatprep.subr.bf16.mxu0 0
    %784 = vmatpush1.bf16.msra.mxu0 0
    %785 = vmatprep.subr.bf16.mxu0 0
    %786 = vmatpush1.bf16.msra.mxu0 0
    %787 = vmatprep.subr.bf16.mxu0 0
    %788 = vmatpush1.bf16.msra.mxu0 0
    %789 = vmatprep.subr.bf16.mxu0 0
    %790 = vmatpush1.bf16.msra.mxu0 0
    %791 = vmatprep.subr.bf16.mxu0 0
    %792 = vmatpush1.bf16.msra.mxu0 0
    %793 = vmatprep.subr.bf16.mxu0 0
    %794 = vmatpush1.bf16.msra.mxu0 0
    %795 = vmatprep.subr.bf16.mxu0 0
    %796 = vmatpush1.bf16.msra.mxu0 0
    %797 = vmatprep.subr.bf16.mxu0 0
    %798 = vmatpush1.bf16.msra.mxu0 0
    %799 = vmatprep.subr.bf16.mxu0 0
    %800 = vmatpush1.bf16.msra.mxu0 0
    %801 = vmatprep.subr.bf16.mxu0 0
    %802 = vmatpush1.bf16.msra.mxu0 0
    %803 = vmatprep.mubr.bf16.mxu0 0
    %804 = vmatmul.mubr.bf16.gmra.mrb[0].mxu0 %v769
    %v805 = vpop.f32.mrb[0].mxu0
    %v806 = vadd.f32 0.0, %v805
    %v807 = vpop.f32.mrb[0].mxu0
    %v808 = vpop.f32.mrb[0].mxu0
    %v809 = vadd.f32 0.0, %v808
    %v810 = vpop.f32.mrb[0].mxu0
    %811 = vdwg.mxu0
    %v812 = vpack.c.bf16 %v809, %v806
    %v814 = vsel %vm124, %v812, 0
    %816 = vmatprep.subr.bf16.mxu0 0
    %817 = vmatpush1.bf16.msra.mxu0 %v411
    %818 = vmatprep.subr.bf16.mxu0 0
    %819 = vmatpush1.bf16.msra.mxu0 0
    %820 = vmatprep.subr.bf16.mxu0 0
    %821 = vmatpush1.bf16.msra.mxu0 0
    %822 = vmatprep.subr.bf16.mxu0 0
    %823 = vmatpush1.bf16.msra.mxu0 0
    %824 = vmatprep.subr.bf16.mxu0 0
    %825 = vmatpush1.bf16.msra.mxu0 0
    %826 = vmatprep.subr.bf16.mxu0 0
    %827 = vmatpush1.bf16.msra.mxu0 0
    %828 = vmatprep.subr.bf16.mxu0 0
    %829 = vmatpush1.bf16.msra.mxu0 0
    %830 = vmatprep.subr.bf16.mxu0 0
    %831 = vmatpush1.bf16.msra.mxu0 0
    %832 = vmatprep.subr.bf16.mxu0 0
    %833 = vmatpush1.bf16.msra.mxu0 0
    %834 = vmatprep.subr.bf16.mxu0 0
    %835 = vmatpush1.bf16.msra.mxu0 0
    %836 = vmatprep.subr.bf16.mxu0 0
    %837 = vmatpush1.bf16.msra.mxu0 0
    %838 = vmatprep.subr.bf16.mxu0 0
    %839 = vmatpush1.bf16.msra.mxu0 0
    %840 = vmatprep.subr.bf16.mxu0 0
    %841 = vmatpush1.bf16.msra.mxu0 0
    %842 = vmatprep.subr.bf16.mxu0 0
    %843 = vmatpush1.bf16.msra.mxu0 0
    %844 = vmatprep.subr.bf16.mxu0 0
    %845 = vmatpush1.bf16.msra.mxu0 0
    %846 = vmatprep.subr.bf16.mxu0 0
    %847 = vmatpush1.bf16.msra.mxu0 0
    %848 = vmatprep.mubr.bf16.mxu0 0
    %849 = vmatmul.mubr.bf16.gmra.mrb[0].mxu0 %v814
    %v850 = vpop.f32.mrb[0].mxu0
    %v851 = vadd.f32 0.0, %v850
    %v852 = vpop.f32.mrb[0].mxu0
    %v853 = vpop.f32.mrb[0].mxu0
    %v854 = vadd.f32 0.0, %v853
    %v855 = vpop.f32.mrb[0].mxu0
    %856 = vdwg.mxu0
    %v857 = vadd.f32 %v308, %v851
    %v858 = vadd.f32 %v311, %v854
    %vm859 = vcmp.gt.f32.partialorder %v857, 0.0
    %vm860 = vcmp.gt.f32.partialorder %v858, 0.0
    %v861 = vmul.f32 %v857, 0.2
    %v862 = vmul.f32 %v858, 0.2
    %v863 = vsel %vm859, %v857, %v861
    %v864 = vsel %vm860, %v858, %v862
    %v865 = vpack.c.bf16 %v864, %v863
    %v867 = vsel %vm463, %v865, 0
    %869 = vmatprep.subr.bf16.mxu0 0
    %870 = vmatpush1.bf16.msra.mxu0 %v469
    %871 = vmatprep.subr.bf16.mxu0 0
    %872 = vmatpush1.bf16.msra.mxu0 0
    %873 = vmatprep.subr.bf16.mxu0 0
    %874 = vmatpush1.bf16.msra.mxu0 0
    %875 = vmatprep.subr.bf16.mxu0 0
    %876 = vmatpush1.bf16.msra.mxu0 0
    %877 = vmatprep.subr.bf16.mxu0 0
    %878 = vmatpush1.bf16.msra.mxu0 0
    %879 = vmatprep.subr.bf16.mxu0 0
    %880 = vmatpush1.bf16.msra.mxu0 0
    %881 = vmatprep.subr.bf16.mxu0 0
    %882 = vmatpush1.bf16.msra.mxu0 0
    %883 = vmatprep.subr.bf16.mxu0 0
    %884 = vmatpush1.bf16.msra.mxu0 0
    %885 = vmatprep.subr.bf16.mxu0 0
    %886 = vmatpush1.bf16.msra.mxu0 0
    %887 = vmatprep.subr.bf16.mxu0 0
    %888 = vmatpush1.bf16.msra.mxu0 0
    %889 = vmatprep.subr.bf16.mxu0 0
    %890 = vmatpush1.bf16.msra.mxu0 0
    %891 = vmatprep.subr.bf16.mxu0 0
    %892 = vmatpush1.bf16.msra.mxu0 0
    %893 = vmatprep.subr.bf16.mxu0 0
    %894 = vmatpush1.bf16.msra.mxu0 0
    %895 = vmatprep.subr.bf16.mxu0 0
    %896 = vmatpush1.bf16.msra.mxu0 0
    %897 = vmatprep.subr.bf16.mxu0 0
    %898 = vmatpush1.bf16.msra.mxu0 0
    %899 = vmatprep.subr.bf16.mxu0 0
    %900 = vmatpush1.bf16.msra.mxu0 0
    %901 = vmatprep.mubr.bf16.mxu0 0
    %902 = vmatmul.mubr.bf16.gmra.mrb[0].mxu0 %v867
    %v903 = vpop.f32.mrb[0].mxu0
    %v904 = vadd.f32 0.0, %v903
    %v905 = vpop.f32.mrb[0].mxu0
    %v906 = vpop.f32.mrb[0].mxu0
    %v907 = vadd.f32 0.0, %v906
    %v908 = vpop.f32.mrb[0].mxu0
    %909 = vdwg.mxu0
    %vm910 = vcmp.lt.f32.partialorder %v723, 5e+29
    %vm911 = vcmp.lt.f32.partialorder %v726, 5e+29
    %v912 = vsel %vm910, 1, 0
    %v913 = vsel %vm911, 1, 0
    %vm914 = vcmp.eq.s32.totalorder %v912, 1
    %vm915 = vcmp.eq.s32.totalorder %v913, 1
    %v916 = vsel %vm914, %v904, -1e+30
    %v917 = vsel %vm915, %v907, -1e+30
    %v918 = vmax.f32 %v719, %v916
    %v919 = vmax.f32 %v720, %v917
    %v920 = vsel %vm314, %v763, inf
    %921 = vmin.xlane.f32.xlu0 %v920
    %v922 = vpop.xlane.xlu0 %921
    %v923 = vsel %vm314, %v764, inf
    %924 = vmin.xlane.f32.xlu0 %v923
    %v925 = vpop.xlane.xlu0 %924
    %vm926 = vcmp.le.f32.partialorder %v763, %v922
    %vm927 = vcmp.le.f32.partialorder %v764, %v925
    %v928 = vsel %vm926, %v96, 16
    %v929 = vsel %vm927, %v96, 16
    %v930 = vsel %vm314, %v928, 2147483647
    %v931 = vand.u32 %v930, 65535
    %v932 = vshra.s32 %v930, 16
    %v933 = vcvt.s32.f32 %v931
    %v934 = vcvt.s32.f32 %v932
    %935 = vmin.xlane.f32.xlu0 %v934
    %v936 = vpop.xlane.xlu0 %935
    %vm937 = vcmp.eq.f32.partialorder %v934, %v936
    %v938 = vsel %vm937, %v933, inf
    %939 = vmin.xlane.f32.xlu0 %v938
    %v940 = vpop.xlane.xlu0 %939
    %v941 = vcvt.f32.s32 %v940
    %v942 = vcvt.f32.s32 %v936
    %v943 = vshll.u32 %v942, 16
    %v944 = vadd.s32 %v943, %v941
    %v945 = vsel %vm314, %v929, 2147483647
    %v946 = vand.u32 %v945, 65535
    %v947 = vshra.s32 %v945, 16
    %v948 = vcvt.s32.f32 %v946
    %v949 = vcvt.s32.f32 %v947
    %950 = vmin.xlane.f32.xlu0 %v949
    %v951 = vpop.xlane.xlu0 %950
    %vm952 = vcmp.eq.f32.partialorder %v949, %v951
    %v953 = vsel %vm952, %v948, inf
    %954 = vmin.xlane.f32.xlu0 %v953
    %v955 = vpop.xlane.xlu0 %954
    %v956 = vcvt.f32.s32 %v955
    %v957 = vcvt.f32.s32 %v951
    %v958 = vshll.u32 %v957, 16
    %v959 = vadd.s32 %v958, %v956
    %vm960 = vcmp.eq.s32.totalorder %v96, %v944
    %vm961 = vcmp.eq.s32.totalorder %v96, %v959
    %v962 = vsel %vm960, 1.0, 0.0
    %v963 = vsel %vm961, 1.0, 0.0
    %v964 = vpack.c.bf16 %v963, %v962
    %v966 = vsel %vm314, %v964, 0
    %968 = vmatprep.subr.bf16.mxu0 0
    %969 = vmatpush1.bf16.msra.mxu0 %v256
    %970 = vmatprep.subr.bf16.mxu0 0
    %971 = vmatpush1.bf16.msra.mxu0 0
    %972 = vmatprep.subr.bf16.mxu0 0
    %973 = vmatpush1.bf16.msra.mxu0 0
    %974 = vmatprep.subr.bf16.mxu0 0
    %975 = vmatpush1.bf16.msra.mxu0 0
    %976 = vmatprep.subr.bf16.mxu0 0
    %977 = vmatpush1.bf16.msra.mxu0 0
    %978 = vmatprep.subr.bf16.mxu0 0
    %979 = vmatpush1.bf16.msra.mxu0 0
    %980 = vmatprep.subr.bf16.mxu0 0
    %981 = vmatpush1.bf16.msra.mxu0 0
    %982 = vmatprep.subr.bf16.mxu0 0
    %983 = vmatpush1.bf16.msra.mxu0 0
    %984 = vmatprep.subr.bf16.mxu0 0
    %985 = vmatpush1.bf16.msra.mxu0 0
    %986 = vmatprep.subr.bf16.mxu0 0
    %987 = vmatpush1.bf16.msra.mxu0 0
    %988 = vmatprep.subr.bf16.mxu0 0
    %989 = vmatpush1.bf16.msra.mxu0 0
    %990 = vmatprep.subr.bf16.mxu0 0
    %991 = vmatpush1.bf16.msra.mxu0 0
    %992 = vmatprep.subr.bf16.mxu0 0
    %993 = vmatpush1.bf16.msra.mxu0 0
    %994 = vmatprep.subr.bf16.mxu0 0
    %995 = vmatpush1.bf16.msra.mxu0 0
    %996 = vmatprep.subr.bf16.mxu0 0
    %997 = vmatpush1.bf16.msra.mxu0 0
    %998 = vmatprep.subr.bf16.mxu0 0
    %999 = vmatpush1.bf16.msra.mxu0 0
    %1000 = vmatprep.mubr.bf16.mxu0 0
    %1001 = vmatmul.mubr.bf16.gmra.mrb[0].mxu0 %v966
    %v1002 = vpop.f32.mrb[0].mxu0
    %v1003 = vadd.f32 0.0, %v1002
    %v1004 = vpop.f32.mrb[0].mxu0
    %v1005 = vpop.f32.mrb[0].mxu0
    %v1006 = vadd.f32 0.0, %v1005
    %v1007 = vpop.f32.mrb[0].mxu0
    %1008 = vdwg.mxu0
    %v1009 = vpack.c.bf16 %v1006, %v1003
    %v1011 = vsel %vm124, %v1009, 0
    %1013 = vmatprep.subr.bf16.mxu0 0
    %1014 = vmatpush1.bf16.msra.mxu0 %v411
    %1015 = vmatprep.subr.bf16.mxu0 0
    %1016 = vmatpush1.bf16.msra.mxu0 0
    %1017 = vmatprep.subr.bf16.mxu0 0
    %1018 = vmatpush1.bf16.msra.mxu0 0
    %1019 = vmatprep.subr.bf16.mxu0 0
    %1020 = vmatpush1.bf16.msra.mxu0 0
    %1021 = vmatprep.subr.bf16.mxu0 0
    %1022 = vmatpush1.bf16.msra.mxu0 0
    %1023 = vmatprep.subr.bf16.mxu0 0
    %1024 = vmatpush1.bf16.msra.mxu0 0
    %1025 = vmatprep.subr.bf16.mxu0 0
    %1026 = vmatpush1.bf16.msra.mxu0 0
    %1027 = vmatprep.subr.bf16.mxu0 0
    %1028 = vmatpush1.bf16.msra.mxu0 0
    %1029 = vmatprep.subr.bf16.mxu0 0
    %1030 = vmatpush1.bf16.msra.mxu0 0
    %1031 = vmatprep.subr.bf16.mxu0 0
    %1032 = vmatpush1.bf16.msra.mxu0 0
    %1033 = vmatprep.subr.bf16.mxu0 0
    %1034 = vmatpush1.bf16.msra.mxu0 0
    %1035 = vmatprep.subr.bf16.mxu0 0
    %1036 = vmatpush1.bf16.msra.mxu0 0
    %1037 = vmatprep.subr.bf16.mxu0 0
    %1038 = vmatpush1.bf16.msra.mxu0 0
    %1039 = vmatprep.subr.bf16.mxu0 0
    %1040 = vmatpush1.bf16.msra.mxu0 0
    %1041 = vmatprep.subr.bf16.mxu0 0
    %1042 = vmatpush1.bf16.msra.mxu0 0
    %1043 = vmatprep.subr.bf16.mxu0 0
    %1044 = vmatpush1.bf16.msra.mxu0 0
    %1045 = vmatprep.mubr.bf16.mxu0 0
    %1046 = vmatmul.mubr.bf16.gmra.mrb[0].mxu0 %v1011
    %v1047 = vpop.f32.mrb[0].mxu0
    %v1048 = vadd.f32 0.0, %v1047
    %v1049 = vpop.f32.mrb[0].mxu0
    %v1050 = vpop.f32.mrb[0].mxu0
    %v1051 = vadd.f32 0.0, %v1050
    %v1052 = vpop.f32.mrb[0].mxu0
    %1053 = vdwg.mxu0
    %v1054 = vadd.f32 %v308, %v1048
    %v1055 = vadd.f32 %v311, %v1051
    %vm1056 = vcmp.gt.f32.partialorder %v1054, 0.0
    %vm1057 = vcmp.gt.f32.partialorder %v1055, 0.0
    %v1058 = vmul.f32 %v1054, 0.2
    %v1059 = vmul.f32 %v1055, 0.2
    %v1060 = vsel %vm1056, %v1054, %v1058
    %v1061 = vsel %vm1057, %v1055, %v1059
    %v1062 = vpack.c.bf16 %v1061, %v1060
    %v1064 = vsel %vm463, %v1062, 0
    %1066 = vmatprep.subr.bf16.mxu0 0
    %1067 = vmatpush1.bf16.msra.mxu0 %v469
    %1068 = vmatprep.subr.bf16.mxu0 0
    %1069 = vmatpush1.bf16.msra.mxu0 0
    %1070 = vmatprep.subr.bf16.mxu0 0
    %1071 = vmatpush1.bf16.msra.mxu0 0
    %1072 = vmatprep.subr.bf16.mxu0 0
    %1073 = vmatpush1.bf16.msra.mxu0 0
    %1074 = vmatprep.subr.bf16.mxu0 0
    %1075 = vmatpush1.bf16.msra.mxu0 0
    %1076 = vmatprep.subr.bf16.mxu0 0
    %1077 = vmatpush1.bf16.msra.mxu0 0
    %1078 = vmatprep.subr.bf16.mxu0 0
    %1079 = vmatpush1.bf16.msra.mxu0 0
    %1080 = vmatprep.subr.bf16.mxu0 0
    %1081 = vmatpush1.bf16.msra.mxu0 0
    %1082 = vmatprep.subr.bf16.mxu0 0
    %1083 = vmatpush1.bf16.msra.mxu0 0
    %1084 = vmatprep.subr.bf16.mxu0 0
    %1085 = vmatpush1.bf16.msra.mxu0 0
    %1086 = vmatprep.subr.bf16.mxu0 0
    %1087 = vmatpush1.bf16.msra.mxu0 0
    %1088 = vmatprep.subr.bf16.mxu0 0
    %1089 = vmatpush1.bf16.msra.mxu0 0
    %1090 = vmatprep.subr.bf16.mxu0 0
    %1091 = vmatpush1.bf16.msra.mxu0 0
    %1092 = vmatprep.subr.bf16.mxu0 0
    %1093 = vmatpush1.bf16.msra.mxu0 0
    %1094 = vmatprep.subr.bf16.mxu0 0
    %1095 = vmatpush1.bf16.msra.mxu0 0
    %1096 = vmatprep.subr.bf16.mxu0 0
    %1097 = vmatpush1.bf16.msra.mxu0 0
    %1098 = vmatprep.mubr.bf16.mxu0 0
    %1099 = vmatmul.mubr.bf16.gmra.mrb[0].mxu0 %v1064
    %v1100 = vpop.f32.mrb[0].mxu0
    %v1101 = vadd.f32 0.0, %v1100
    %v1102 = vpop.f32.mrb[0].mxu0
    %v1103 = vpop.f32.mrb[0].mxu0
    %v1104 = vadd.f32 0.0, %v1103
    %v1105 = vpop.f32.mrb[0].mxu0
    %1106 = vdwg.mxu0
    %vm1107 = vcmp.lt.f32.partialorder %v922, 5e+29
    %vm1108 = vcmp.lt.f32.partialorder %v925, 5e+29
    %v1109 = vsel %vm1107, 1, 0
    %v1110 = vsel %vm1108, 1, 0
    %vm1111 = vcmp.eq.s32.totalorder %v1109, 1
    %vm1112 = vcmp.eq.s32.totalorder %v1110, 1
    %v1113 = vsel %vm1111, %v1101, -1e+30
    %v1114 = vsel %vm1112, %v1104, -1e+30
    %v1115 = vmax.f32 %v918, %v1113
    %v1116 = vmax.f32 %v919, %v1114
    %vm1117 = vcmp.gt.f32.partialorder %v1115, -5e+29
    %vm1118 = vcmp.gt.f32.partialorder %v1116, -5e+29
    %v1120 = vlaneseq
    %v1121 = vshrl.u32 %v1120, 7
    %v1122 = vsub.s32 0, %v1121
    %v1123 = vrot.slane %v121, %v1122
    %v1125 = vadd.f32 %v1115, %v1123
    %v1126 = vadd.f32 %v1116, %v1123
    %v1127 = vsel %vm1117, 1, 0
    %v1128 = vsel %vm1118, 1, 0
    %1129 = vset.pattern.permute.xlu0 0
    %1130 = vperm.xlu0 %1129, %v1127
    %v1131 = vpop.permute.xlu0 %1130
    %1132 = vset.pattern.permute.xlu0 0
    %1133 = vperm.xlu0 %1132, %v1128
    %v1134 = vpop.permute.xlu0 %1133
    %vm1135 = vcmp.eq.s32.totalorder %v1131, 1
    %vm1136 = vcmp.eq.s32.totalorder %v1134, 1
    %v1137 = vsel %vm1135, %v1125, 0.0
    %v1138 = vsel %vm1136, %v1126, 0.0
    %vm1139 = vcmp.gt.f32.partialorder %v1137, 0.0
    %vm1140 = vcmp.gt.f32.partialorder %v1138, 0.0
    %v1141 = vmul.f32 %v1137, 0.2
    %v1142 = vmul.f32 %v1138, 0.2
    %v1143 = vsel %vm1139, %v1137, %v1141
    %v1144 = vsel %vm1140, %v1138, %v1142
    %v1145 = vld [vmem:[%s8] sm:$0xf]
    %v1146 = vld [vmem:[%s8 + $0x4] sm:$0xf]
    %v1147 = vld [vmem:[%s9] sm:$0xf]
    %v1148 = vld [vmem:[%s9 + $0x4] sm:$0xf]
    %v1149 = vld [vmem:[%s10] sm:$0x1]
    %v1150 = vld [vmem:[%s11] sm:$0xf]
    %v1151 = vld [vmem:[%s11 + $0x4] sm:$0xf]
    %v1152 = vld [vmem:[%s11 + $0x8] sm:$0xf]
    %v1153 = vld [vmem:[%s11 + $0xc] sm:$0xf]
    %v1154 = vld [vmem:[%s12] sm:$0x1]
    %v1155 = vmul.f32 %v1143, %v1143
    %v1156 = vmul.f32 %v1144, %v1144
    %v1157 = vsel %vm314, %v1155, 0.0
    %1158 = vadd.xlane.f32.xlu0 %v1157
    %v1159 = vpop.xlane.xlu0 %1158
    %v1160 = vsel %vm314, %v1156, 0.0
    %1161 = vadd.xlane.f32.xlu0 %v1160
    %v1162 = vpop.xlane.xlu0 %1161
    %1163 = vxpose.xlu0.b32.start [1/16] %v1159, 128
    %1164 = vxpose.xlu0.b32.cont [2/16] %v1162, 128
    %1165 = vxpose.xlu0.b32.cont [3/16] 0.0, 128
    %1166 = vxpose.xlu0.b32.cont [4/16] 0.0, 128
    %1167 = vxpose.xlu0.b32.cont [5/16] 0.0, 128
    %1168 = vxpose.xlu0.b32.cont [6/16] 0.0, 128
    %1169 = vxpose.xlu0.b32.cont [7/16] 0.0, 128
    %1170 = vxpose.xlu0.b32.cont [8/16] 0.0, 128
    %1171 = vxpose.xlu0.b32.cont [9/16] 0.0, 128
    %1172 = vxpose.xlu0.b32.cont [10/16] 0.0, 128
    %1173 = vxpose.xlu0.b32.cont [11/16] 0.0, 128
    %1174 = vxpose.xlu0.b32.cont [12/16] 0.0, 128
    %1175 = vxpose.xlu0.b32.cont [13/16] 0.0, 128
    %1176 = vxpose.xlu0.b32.cont [14/16] 0.0, 128
    %1177 = vxpose.xlu0.b32.cont [15/16] 0.0, 128
    %1178 = vxpose.xlu0.b32.end [16/16] 0.0, 128
    %v1179 = vpop.trf.xlu0
    %v1180 = vpop.trf.xlu0
    %v1181 = vpop.trf.xlu0
    %v1182 = vpop.trf.xlu0
    %v1183 = vpop.trf.xlu0
    %v1184 = vpop.trf.xlu0
    %v1185 = vpop.trf.xlu0
    %v1186 = vpop.trf.xlu0
    %v1187 = vpop.trf.xlu0
    %v1188 = vpop.trf.xlu0
    %v1189 = vpop.trf.xlu0
    %v1190 = vpop.trf.xlu0
    %v1191 = vpop.trf.xlu0
    %v1192 = vpop.trf.xlu0
    %v1193 = vpop.trf.xlu0
    %v1194 = vpop.trf.xlu0
    %v1195 = vlaneseq
    %v1196 = vshrl.u32 %v1195, 7
    %v1197 = vsub.s32 0, %v1196
    %v1198 = vrot.slane %v1179, %v1197
    %v1199 = vadd.f32 %v1159, %v1198
    %v1200 = vadd.f32 %v1162, %v1198
    %v1202 = vsel %vm314, %v1143, 0
    %v1205 = vsel %vm314, %v1144, 0
    %1207 = vmatprep.subr.mxu0 0.0
    %1208 = vmatpush1.xpose.msra.mxu0 %v1202
    %1209 = vmatprep.subr.mxu0 0.0
    %1210 = vmatpush1.xpose.msra.mxu0 %v1205
    %1211 = vmatprep.subr.mxu0 0.0
    %1212 = vmatpush1.xpose.msra.mxu0 0.0
    %1213 = vmatprep.subr.mxu0 0.0
    %1214 = vmatpush1.xpose.msra.mxu0 0.0
    %1215 = vmatprep.subr.mxu0 0.0
    %1216 = vmatpush1.xpose.msra.mxu0 0.0
    %1217 = vmatprep.subr.mxu0 0.0
    %1218 = vmatpush1.xpose.msra.mxu0 0.0
    %1219 = vmatprep.subr.mxu0 0.0
    %1220 = vmatpush1.xpose.msra.mxu0 0.0
    %1221 = vmatprep.subr.mxu0 0.0
    %1222 = vmatpush1.xpose.msra.mxu0 0.0
    %1223 = vmatprep.subr.mxu0 0.0
    %1224 = vmatpush1.xpose.msra.mxu0 0.0
    %1225 = vmatprep.subr.mxu0 0.0
    %1226 = vmatpush1.xpose.msra.mxu0 0.0
    %1227 = vmatprep.subr.mxu0 0.0
    %1228 = vmatpush1.xpose.msra.mxu0 0.0
    %1229 = vmatprep.subr.mxu0 0.0
    %1230 = vmatpush1.xpose.msra.mxu0 0.0
    %1231 = vmatprep.subr.mxu0 0.0
    %1232 = vmatpush1.xpose.msra.mxu0 0.0
    %1233 = vmatprep.subr.mxu0 0.0
    %1234 = vmatpush1.xpose.msra.mxu0 0.0
    %1235 = vmatprep.subr.mxu0 0.0
    %1236 = vmatpush1.xpose.msra.mxu0 0.0
    %1237 = vmatprep.subr.mxu0 0.0
    %1238 = vmatpush1.xpose.msra.mxu0 0.0
    %1239 = vmatprep.subr.mxu0 0.0
    %1240 = vmatpush1.xpose.msra.mxu0 0.0
    %1241 = vmatprep.subr.mxu0 0.0
    %1242 = vmatpush1.xpose.msra.mxu0 0.0
    %1243 = vmatprep.subr.mxu0 0.0
    %1244 = vmatpush1.xpose.msra.mxu0 0.0
    %1245 = vmatprep.subr.mxu0 0.0
    %1246 = vmatpush1.xpose.msra.mxu0 0.0
    %1247 = vmatprep.subr.mxu0 0.0
    %1248 = vmatpush1.xpose.msra.mxu0 0.0
    %1249 = vmatprep.subr.mxu0 0.0
    %1250 = vmatpush1.xpose.msra.mxu0 0.0
    %1251 = vmatprep.subr.mxu0 0.0
    %1252 = vmatpush1.xpose.msra.mxu0 0.0
    %1253 = vmatprep.subr.mxu0 0.0
    %1254 = vmatpush1.xpose.msra.mxu0 0.0
    %1255 = vmatprep.subr.mxu0 0.0
    %1256 = vmatpush1.xpose.msra.mxu0 0.0
    %1257 = vmatprep.subr.mxu0 0.0
    %1258 = vmatpush1.xpose.msra.mxu0 0.0
    %1259 = vmatprep.subr.mxu0 0.0
    %1260 = vmatpush1.xpose.msra.mxu0 0.0
    %1261 = vmatprep.subr.mxu0 0.0
    %1262 = vmatpush1.xpose.msra.mxu0 0.0
    %1263 = vmatprep.subr.mxu0 0.0
    %1264 = vmatpush1.xpose.msra.mxu0 0.0
    %1265 = vmatprep.subr.mxu0 0.0
    %1266 = vmatpush1.xpose.msra.mxu0 0.0
    %1267 = vmatprep.subr.mxu0 0.0
    %1268 = vmatpush1.xpose.msra.mxu0 0.0
    %1269 = vmatprep.subr.mxu0 0.0
    %1270 = vmatpush1.xpose.msra.mxu0 0.0
    %1271 = vmatprep.mubr.f32.mxu0 0.0
    %1272 = vmatmul.mubr.f32.gmra.mrb[0].mxu0 %v1202
    %v1273 = vpop.f32.mrb[0].mxu0
    %v1274 = vadd.f32 0.0, %v1273
    %v1275 = vpop.f32.mrb[0].mxu0
    %1276 = vmatprep.mubr.f32.mxu0 0.0
    %1277 = vmatmul.mubr.f32.gmra.mrb[0].mxu0 %v1205
    %v1278 = vpop.f32.mrb[0].mxu0
    %v1279 = vadd.f32 0.0, %v1278
    %v1280 = vpop.f32.mrb[0].mxu0
    %1281 = vdwg.mxu0
    %v1282 = vmul.f32 %v1274, 2.0
    %v1283 = vmul.f32 %v1279, 2.0
    %v1284 = vsub.f32 %v1199, %v1282
    %v1285 = vsub.f32 %v1200, %v1283
    %v1286 = vadd.f32 %v1284, %v113
    %v1287 = vadd.f32 %v1285, %v114
    %v1288 = vpack.c.bf16 %v1144, %v1143
    %v1290 = vlaneseq
    %v1291 = vshrl.u32 %v1290, 7
    %v1292 = vsub.s32 0, %v1291
    %v1293 = vrot.slane %v1149, %v1292
    %v1297 = vunpack.c.l.b16 %v1145
    %v1298 = vunpack.c.l.b16 %v1146
    %v1299 = vpack.c.b16 %v1298, %v1297
    %v1302 = vsel %vm314, %v1288, 0
    %1304 = vmatprep.subr.bf16.mxu0 0
    %1305 = vmatpush1.bf16.msra.mxu0 %v1299
    %1306 = vmatprep.subr.bf16.mxu0 0
    %1307 = vmatpush1.bf16.msra.mxu0 0
    %1308 = vmatprep.subr.bf16.mxu0 0
    %1309 = vmatpush1.bf16.msra.mxu0 0
    %1310 = vmatprep.subr.bf16.mxu0 0
    %1311 = vmatpush1.bf16.msra.mxu0 0
    %1312 = vmatprep.subr.bf16.mxu0 0
    %1313 = vmatpush1.bf16.msra.mxu0 0
    %1314 = vmatprep.subr.bf16.mxu0 0
    %1315 = vmatpush1.bf16.msra.mxu0 0
    %1316 = vmatprep.subr.bf16.mxu0 0
    %1317 = vmatpush1.bf16.msra.mxu0 0
    %1318 = vmatprep.subr.bf16.mxu0 0
    %1319 = vmatpush1.bf16.msra.mxu0 0
    %1320 = vmatprep.subr.bf16.mxu0 0
    %1321 = vmatpush1.bf16.msra.mxu0 0
    %1322 = vmatprep.subr.bf16.mxu0 0
    %1323 = vmatpush1.bf16.msra.mxu0 0
    %1324 = vmatprep.subr.bf16.mxu0 0
    %1325 = vmatpush1.bf16.msra.mxu0 0
    %1326 = vmatprep.subr.bf16.mxu0 0
    %1327 = vmatpush1.bf16.msra.mxu0 0
    %1328 = vmatprep.subr.bf16.mxu0 0
    %1329 = vmatpush1.bf16.msra.mxu0 0
    %1330 = vmatprep.subr.bf16.mxu0 0
    %1331 = vmatpush1.bf16.msra.mxu0 0
    %1332 = vmatprep.subr.bf16.mxu0 0
    %1333 = vmatpush1.bf16.msra.mxu0 0
    %1334 = vmatprep.subr.bf16.mxu0 0
    %1335 = vmatpush1.bf16.msra.mxu0 0
    %1336 = vmatprep.mubr.bf16.mxu0 0
    %1337 = vmatmul.mubr.bf16.gmra.mrb[0].mxu0 %v1302
    %v1338 = vpop.f32.mrb[0].mxu0
    %v1339 = vadd.f32 %v1293, %v1338
    %v1340 = vpop.f32.mrb[0].mxu0
    %v1341 = vpop.f32.mrb[0].mxu0
    %v1342 = vadd.f32 %v1293, %v1341
    %v1343 = vpop.f32.mrb[0].mxu0
    %1344 = vdwg.mxu0
    %v1345 = vsel %vm314, %v1286, inf
    %1346 = vmin.xlane.f32.xlu0 %v1345
    %v1347 = vpop.xlane.xlu0 %1346
    %v1348 = vsel %vm314, %v1287, inf
    %1349 = vmin.xlane.f32.xlu0 %v1348
    %v1350 = vpop.xlane.xlu0 %1349
    %vm1351 = vcmp.le.f32.partialorder %v1286, %v1347
    %vm1352 = vcmp.le.f32.partialorder %v1287, %v1350
    %v1353 = vsel %vm1351, %v96, 16
    %v1354 = vsel %vm1352, %v96, 16
    %v1355 = vsel %vm314, %v1353, 2147483647
    %v1356 = vand.u32 %v1355, 65535
    %v1357 = vshra.s32 %v1355, 16
    %v1358 = vcvt.s32.f32 %v1356
    %v1359 = vcvt.s32.f32 %v1357
    %1360 = vmin.xlane.f32.xlu0 %v1359
    %v1361 = vpop.xlane.xlu0 %1360
    %vm1362 = vcmp.eq.f32.partialorder %v1359, %v1361
    %v1363 = vsel %vm1362, %v1358, inf
    %1364 = vmin.xlane.f32.xlu0 %v1363
    %v1365 = vpop.xlane.xlu0 %1364
    %v1366 = vcvt.f32.s32 %v1365
    %v1367 = vcvt.f32.s32 %v1361
    %v1368 = vshll.u32 %v1367, 16
    %v1369 = vadd.s32 %v1368, %v1366
    %v1370 = vsel %vm314, %v1354, 2147483647
    %v1371 = vand.u32 %v1370, 65535
    %v1372 = vshra.s32 %v1370, 16
    %v1373 = vcvt.s32.f32 %v1371
    %v1374 = vcvt.s32.f32 %v1372
    %1375 = vmin.xlane.f32.xlu0 %v1374
    %v1376 = vpop.xlane.xlu0 %1375
    %vm1377 = vcmp.eq.f32.partialorder %v1374, %v1376
    %v1378 = vsel %vm1377, %v1373, inf
    %1379 = vmin.xlane.f32.xlu0 %v1378
    %v1380 = vpop.xlane.xlu0 %1379
    %v1381 = vcvt.f32.s32 %v1380
    %v1382 = vcvt.f32.s32 %v1376
    %v1383 = vshll.u32 %v1382, 16
    %v1384 = vadd.s32 %v1383, %v1381
    %vm1385 = vcmp.eq.s32.totalorder %v96, %v1369
    %vm1386 = vcmp.eq.s32.totalorder %v96, %v1384
    %v1387 = vsel %vm1385, 1e+30, %v1286
    %v1388 = vsel %vm1386, 1e+30, %v1287
    %v1389 = vsel %vm1385, 1.0, 0.0
    %v1390 = vsel %vm1386, 1.0, 0.0
    %v1391 = vpack.c.bf16 %v1390, %v1389
    %v1393 = vsel %vm314, %v1391, 0
    %1395 = vmatprep.subr.bf16.mxu0 0
    %1396 = vmatpush1.bf16.msra.mxu0 %v1288
    %1397 = vmatprep.subr.bf16.mxu0 0
    %1398 = vmatpush1.bf16.msra.mxu0 0
    %1399 = vmatprep.subr.bf16.mxu0 0
    %1400 = vmatpush1.bf16.msra.mxu0 0
    %1401 = vmatprep.subr.bf16.mxu0 0
    %1402 = vmatpush1.bf16.msra.mxu0 0
    %1403 = vmatprep.subr.bf16.mxu0 0
    %1404 = vmatpush1.bf16.msra.mxu0 0
    %1405 = vmatprep.subr.bf16.mxu0 0
    %1406 = vmatpush1.bf16.msra.mxu0 0
    %1407 = vmatprep.subr.bf16.mxu0 0
    %1408 = vmatpush1.bf16.msra.mxu0 0
    %1409 = vmatprep.subr.bf16.mxu0 0
    %1410 = vmatpush1.bf16.msra.mxu0 0
    %1411 = vmatprep.subr.bf16.mxu0 0
    %1412 = vmatpush1.bf16.msra.mxu0 0
    %1413 = vmatprep.subr.bf16.mxu0 0
    %1414 = vmatpush1.bf16.msra.mxu0 0
    %1415 = vmatprep.subr.bf16.mxu0 0
    %1416 = vmatpush1.bf16.msra.mxu0 0
    %1417 = vmatprep.subr.bf16.mxu0 0
    %1418 = vmatpush1.bf16.msra.mxu0 0
    %1419 = vmatprep.subr.bf16.mxu0 0
    %1420 = vmatpush1.bf16.msra.mxu0 0
    %1421 = vmatprep.subr.bf16.mxu0 0
    %1422 = vmatpush1.bf16.msra.mxu0 0
    %1423 = vmatprep.subr.bf16.mxu0 0
    %1424 = vmatpush1.bf16.msra.mxu0 0
    %1425 = vmatprep.subr.bf16.mxu0 0
    %1426 = vmatpush1.bf16.msra.mxu0 0
    %1427 = vmatprep.mubr.bf16.mxu0 0
    %1428 = vmatmul.mubr.bf16.gmra.mrb[0].mxu0 %v1393
    %v1429 = vpop.f32.mrb[0].mxu0
    %v1430 = vadd.f32 0.0, %v1429
    %v1431 = vpop.f32.mrb[0].mxu0
    %v1432 = vpop.f32.mrb[0].mxu0
    %v1433 = vadd.f32 0.0, %v1432
    %v1434 = vpop.f32.mrb[0].mxu0
    %1435 = vdwg.mxu0
    %v1436 = vpack.c.bf16 %v1433, %v1430
    %v1439 = vunpack.c.l.b16 %v1147
    %v1440 = vunpack.c.l.b16 %v1148
    %v1441 = vpack.c.b16 %v1440, %v1439
    %v1444 = vsel %vm314, %v1436, 0
    %1446 = vmatprep.subr.bf16.mxu0 0
    %1447 = vmatpush1.bf16.msra.mxu0 %v1441
    %1448 = vmatprep.subr.bf16.mxu0 0
    %1449 = vmatpush1.bf16.msra.mxu0 0
    %1450 = vmatprep.subr.bf16.mxu0 0
    %1451 = vmatpush1.bf16.msra.mxu0 0
    %1452 = vmatprep.subr.bf16.mxu0 0
    %1453 = vmatpush1.bf16.msra.mxu0 0
    %1454 = vmatprep.subr.bf16.mxu0 0
    %1455 = vmatpush1.bf16.msra.mxu0 0
    %1456 = vmatprep.subr.bf16.mxu0 0
    %1457 = vmatpush1.bf16.msra.mxu0 0
    %1458 = vmatprep.subr.bf16.mxu0 0
    %1459 = vmatpush1.bf16.msra.mxu0 0
    %1460 = vmatprep.subr.bf16.mxu0 0
    %1461 = vmatpush1.bf16.msra.mxu0 0
    %1462 = vmatprep.subr.bf16.mxu0 0
    %1463 = vmatpush1.bf16.msra.mxu0 0
    %1464 = vmatprep.subr.bf16.mxu0 0
    %1465 = vmatpush1.bf16.msra.mxu0 0
    %1466 = vmatprep.subr.bf16.mxu0 0
    %1467 = vmatpush1.bf16.msra.mxu0 0
    %1468 = vmatprep.subr.bf16.mxu0 0
    %1469 = vmatpush1.bf16.msra.mxu0 0
    %1470 = vmatprep.subr.bf16.mxu0 0
    %1471 = vmatpush1.bf16.msra.mxu0 0
    %1472 = vmatprep.subr.bf16.mxu0 0
    %1473 = vmatpush1.bf16.msra.mxu0 0
    %1474 = vmatprep.subr.bf16.mxu0 0
    %1475 = vmatpush1.bf16.msra.mxu0 0
    %1476 = vmatprep.subr.bf16.mxu0 0
    %1477 = vmatpush1.bf16.msra.mxu0 0
    %1478 = vmatprep.mubr.bf16.mxu0 0
    %1479 = vmatmul.mubr.bf16.gmra.mrb[0].mxu0 %v1444
    %v1480 = vpop.f32.mrb[0].mxu0
    %v1481 = vadd.f32 0.0, %v1480
    %v1482 = vpop.f32.mrb[0].mxu0
    %v1483 = vpop.f32.mrb[0].mxu0
    %v1484 = vadd.f32 0.0, %v1483
    %v1485 = vpop.f32.mrb[0].mxu0
    %1486 = vdwg.mxu0
    %v1487 = vadd.f32 %v1339, %v1481
    %v1488 = vadd.f32 %v1342, %v1484
    %vm1489 = vcmp.gt.f32.partialorder %v1487, 0.0
    %vm1490 = vcmp.gt.f32.partialorder %v1488, 0.0
    %v1491 = vmul.f32 %v1487, 0.2
    %v1492 = vmul.f32 %v1488, 0.2
    %v1493 = vsel %vm1489, %v1487, %v1491
    %v1494 = vsel %vm1490, %v1488, %v1492
    %v1495 = vpack.c.bf16 %v1494, %v1493
    %v1500 = vunpack.c.l.b16 %v1150
    %v1501 = vunpack.c.l.b16 %v1151
    %v1502 = vunpack.c.l.b16 %v1152
    %v1503 = vunpack.c.l.b16 %v1153
    %v1504 = vpack.c.b16 %v1501, %v1500
    %v1505 = vpack.c.b16 %v1503, %v1502
    %vm1508 = vcmask 261120
    %v1510 = vsel %vm1508, %v1495, 0
    %1512 = vmatprep.subr.bf16.mxu0 0
    %1513 = vmatpush1.bf16.msra.mxu0 %v1504
    %1514 = vmatprep.subr.bf16.mxu0 0
    %1515 = vmatpush1.bf16.msra.mxu0 %v1505
    %1516 = vmatprep.subr.bf16.mxu0 0
    %1517 = vmatpush1.bf16.msra.mxu0 0
    %1518 = vmatprep.subr.bf16.mxu0 0
    %1519 = vmatpush1.bf16.msra.mxu0 0
    %1520 = vmatprep.subr.bf16.mxu0 0
    %1521 = vmatpush1.bf16.msra.mxu0 0
    %1522 = vmatprep.subr.bf16.mxu0 0
    %1523 = vmatpush1.bf16.msra.mxu0 0
    %1524 = vmatprep.subr.bf16.mxu0 0
    %1525 = vmatpush1.bf16.msra.mxu0 0
    %1526 = vmatprep.subr.bf16.mxu0 0
    %1527 = vmatpush1.bf16.msra.mxu0 0
    %1528 = vmatprep.subr.bf16.mxu0 0
    %1529 = vmatpush1.bf16.msra.mxu0 0
    %1530 = vmatprep.subr.bf16.mxu0 0
    %1531 = vmatpush1.bf16.msra.mxu0 0
    %1532 = vmatprep.subr.bf16.mxu0 0
    %1533 = vmatpush1.bf16.msra.mxu0 0
    %1534 = vmatprep.subr.bf16.mxu0 0
    %1535 = vmatpush1.bf16.msra.mxu0 0
    %1536 = vmatprep.subr.bf16.mxu0 0
    %1537 = vmatpush1.bf16.msra.mxu0 0
    %1538 = vmatprep.subr.bf16.mxu0 0
    %1539 = vmatpush1.bf16.msra.mxu0 0
    %1540 = vmatprep.subr.bf16.mxu0 0
    %1541 = vmatpush1.bf16.msra.mxu0 0
    %1542 = vmatprep.subr.bf16.mxu0 0
    %1543 = vmatpush1.bf16.msra.mxu0 0
    %1544 = vmatprep.mubr.bf16.mxu0 0
    %1545 = vmatmul.mubr.bf16.gmra.mrb[0].mxu0 %v1510
    %v1546 = vpop.f32.mrb[0].mxu0
    %v1547 = vadd.f32 0.0, %v1546
    %v1548 = vpop.f32.mrb[0].mxu0
    %v1549 = vpop.f32.mrb[0].mxu0
    %v1550 = vadd.f32 0.0, %v1549
    %v1551 = vpop.f32.mrb[0].mxu0
    %1552 = vdwg.mxu0
    %vm1553 = vcmp.lt.f32.partialorder %v1347, 5e+29
    %vm1554 = vcmp.lt.f32.partialorder %v1350, 5e+29
    %v1555 = vsel %vm1553, 1, 0
    %v1556 = vsel %vm1554, 1, 0
    %vm1557 = vcmp.eq.s32.totalorder %v1555, 1
    %vm1558 = vcmp.eq.s32.totalorder %v1556, 1
    %v1559 = vsel %vm1557, %v1547, -1e+30
    %v1560 = vsel %vm1558, %v1550, -1e+30
    %v1561 = vmax.f32 %v1559, -1e+30
    %v1562 = vmax.f32 %v1560, -1e+30
    %v1563 = vsel %vm314, %v1387, inf
    %1564 = vmin.xlane.f32.xlu0 %v1563
    %v1565 = vpop.xlane.xlu0 %1564
    %v1566 = vsel %vm314, %v1388, inf
    %1567 = vmin.xlane.f32.xlu0 %v1566
    %v1568 = vpop.xlane.xlu0 %1567
    %vm1569 = vcmp.le.f32.partialorder %v1387, %v1565
    %vm1570 = vcmp.le.f32.partialorder %v1388, %v1568
    %v1571 = vsel %vm1569, %v96, 16
    %v1572 = vsel %vm1570, %v96, 16
    %v1573 = vsel %vm314, %v1571, 2147483647
    %v1574 = vand.u32 %v1573, 65535
    %v1575 = vshra.s32 %v1573, 16
    %v1576 = vcvt.s32.f32 %v1574
    %v1577 = vcvt.s32.f32 %v1575
    %1578 = vmin.xlane.f32.xlu0 %v1577
    %v1579 = vpop.xlane.xlu0 %1578
    %vm1580 = vcmp.eq.f32.partialorder %v1577, %v1579
    %v1581 = vsel %vm1580, %v1576, inf
    %1582 = vmin.xlane.f32.xlu0 %v1581
    %v1583 = vpop.xlane.xlu0 %1582
    %v1584 = vcvt.f32.s32 %v1583
    %v1585 = vcvt.f32.s32 %v1579
    %v1586 = vshll.u32 %v1585, 16
    %v1587 = vadd.s32 %v1586, %v1584
    %v1588 = vsel %vm314, %v1572, 2147483647
    %v1589 = vand.u32 %v1588, 65535
    %v1590 = vshra.s32 %v1588, 16
    %v1591 = vcvt.s32.f32 %v1589
    %v1592 = vcvt.s32.f32 %v1590
    %1593 = vmin.xlane.f32.xlu0 %v1592
    %v1594 = vpop.xlane.xlu0 %1593
    %vm1595 = vcmp.eq.f32.partialorder %v1592, %v1594
    %v1596 = vsel %vm1595, %v1591, inf
    %1597 = vmin.xlane.f32.xlu0 %v1596
    %v1598 = vpop.xlane.xlu0 %1597
    %v1599 = vcvt.f32.s32 %v1598
    %v1600 = vcvt.f32.s32 %v1594
    %v1601 = vshll.u32 %v1600, 16
    %v1602 = vadd.s32 %v1601, %v1599
    %vm1603 = vcmp.eq.s32.totalorder %v96, %v1587
    %vm1604 = vcmp.eq.s32.totalorder %v96, %v1602
    %v1605 = vsel %vm1603, 1e+30, %v1387
    %v1606 = vsel %vm1604, 1e+30, %v1388
    %v1607 = vsel %vm1603, 1.0, 0.0
    %v1608 = vsel %vm1604, 1.0, 0.0
    %v1609 = vpack.c.bf16 %v1608, %v1607
    %v1611 = vsel %vm314, %v1609, 0
    %1613 = vmatprep.subr.bf16.mxu0 0
    %1614 = vmatpush1.bf16.msra.mxu0 %v1288
    %1615 = vmatprep.subr.bf16.mxu0 0
    %1616 = vmatpush1.bf16.msra.mxu0 0
    %1617 = vmatprep.subr.bf16.mxu0 0
    %1618 = vmatpush1.bf16.msra.mxu0 0
    %1619 = vmatprep.subr.bf16.mxu0 0
    %1620 = vmatpush1.bf16.msra.mxu0 0
    %1621 = vmatprep.subr.bf16.mxu0 0
    %1622 = vmatpush1.bf16.msra.mxu0 0
    %1623 = vmatprep.subr.bf16.mxu0 0
    %1624 = vmatpush1.bf16.msra.mxu0 0
    %1625 = vmatprep.subr.bf16.mxu0 0
    %1626 = vmatpush1.bf16.msra.mxu0 0
    %1627 = vmatprep.subr.bf16.mxu0 0
    %1628 = vmatpush1.bf16.msra.mxu0 0
    %1629 = vmatprep.subr.bf16.mxu0 0
    %1630 = vmatpush1.bf16.msra.mxu0 0
    %1631 = vmatprep.subr.bf16.mxu0 0
    %1632 = vmatpush1.bf16.msra.mxu0 0
    %1633 = vmatprep.subr.bf16.mxu0 0
    %1634 = vmatpush1.bf16.msra.mxu0 0
    %1635 = vmatprep.subr.bf16.mxu0 0
    %1636 = vmatpush1.bf16.msra.mxu0 0
    %1637 = vmatprep.subr.bf16.mxu0 0
    %1638 = vmatpush1.bf16.msra.mxu0 0
    %1639 = vmatprep.subr.bf16.mxu0 0
    %1640 = vmatpush1.bf16.msra.mxu0 0
    %1641 = vmatprep.subr.bf16.mxu0 0
    %1642 = vmatpush1.bf16.msra.mxu0 0
    %1643 = vmatprep.subr.bf16.mxu0 0
    %1644 = vmatpush1.bf16.msra.mxu0 0
    %1645 = vmatprep.mubr.bf16.mxu0 0
    %1646 = vmatmul.mubr.bf16.gmra.mrb[0].mxu0 %v1611
    %v1647 = vpop.f32.mrb[0].mxu0
    %v1648 = vadd.f32 0.0, %v1647
    %v1649 = vpop.f32.mrb[0].mxu0
    %v1650 = vpop.f32.mrb[0].mxu0
    %v1651 = vadd.f32 0.0, %v1650
    %v1652 = vpop.f32.mrb[0].mxu0
    %1653 = vdwg.mxu0
    %v1654 = vpack.c.bf16 %v1651, %v1648
    %v1656 = vsel %vm314, %v1654, 0
    %1658 = vmatprep.subr.bf16.mxu0 0
    %1659 = vmatpush1.bf16.msra.mxu0 %v1441
    %1660 = vmatprep.subr.bf16.mxu0 0
    %1661 = vmatpush1.bf16.msra.mxu0 0
    %1662 = vmatprep.subr.bf16.mxu0 0
    %1663 = vmatpush1.bf16.msra.mxu0 0
    %1664 = vmatprep.subr.bf16.mxu0 0
    %1665 = vmatpush1.bf16.msra.mxu0 0
    %1666 = vmatprep.subr.bf16.mxu0 0
    %1667 = vmatpush1.bf16.msra.mxu0 0
    %1668 = vmatprep.subr.bf16.mxu0 0
    %1669 = vmatpush1.bf16.msra.mxu0 0
    %1670 = vmatprep.subr.bf16.mxu0 0
    %1671 = vmatpush1.bf16.msra.mxu0 0
    %1672 = vmatprep.subr.bf16.mxu0 0
    %1673 = vmatpush1.bf16.msra.mxu0 0
    %1674 = vmatprep.subr.bf16.mxu0 0
    %1675 = vmatpush1.bf16.msra.mxu0 0
    %1676 = vmatprep.subr.bf16.mxu0 0
    %1677 = vmatpush1.bf16.msra.mxu0 0
    %1678 = vmatprep.subr.bf16.mxu0 0
    %1679 = vmatpush1.bf16.msra.mxu0 0
    %1680 = vmatprep.subr.bf16.mxu0 0
    %1681 = vmatpush1.bf16.msra.mxu0 0
    %1682 = vmatprep.subr.bf16.mxu0 0
    %1683 = vmatpush1.bf16.msra.mxu0 0
    %1684 = vmatprep.subr.bf16.mxu0 0
    %1685 = vmatpush1.bf16.msra.mxu0 0
    %1686 = vmatprep.subr.bf16.mxu0 0
    %1687 = vmatpush1.bf16.msra.mxu0 0
    %1688 = vmatprep.subr.bf16.mxu0 0
    %1689 = vmatpush1.bf16.msra.mxu0 0
    %1690 = vmatprep.mubr.bf16.mxu0 0
    %1691 = vmatmul.mubr.bf16.gmra.mrb[0].mxu0 %v1656
    %v1692 = vpop.f32.mrb[0].mxu0
    %v1693 = vadd.f32 0.0, %v1692
    %v1694 = vpop.f32.mrb[0].mxu0
    %v1695 = vpop.f32.mrb[0].mxu0
    %v1696 = vadd.f32 0.0, %v1695
    %v1697 = vpop.f32.mrb[0].mxu0
    %1698 = vdwg.mxu0
    %v1699 = vadd.f32 %v1339, %v1693
    %v1700 = vadd.f32 %v1342, %v1696
    %vm1701 = vcmp.gt.f32.partialorder %v1699, 0.0
    %vm1702 = vcmp.gt.f32.partialorder %v1700, 0.0
    %v1703 = vmul.f32 %v1699, 0.2
    %v1704 = vmul.f32 %v1700, 0.2
    %v1705 = vsel %vm1701, %v1699, %v1703
    %v1706 = vsel %vm1702, %v1700, %v1704
    %v1707 = vpack.c.bf16 %v1706, %v1705
    %v1709 = vsel %vm1508, %v1707, 0
    %1711 = vmatprep.subr.bf16.mxu0 0
    %1712 = vmatpush1.bf16.msra.mxu0 %v1504
    %1713 = vmatprep.subr.bf16.mxu0 0
    %1714 = vmatpush1.bf16.msra.mxu0 %v1505
    %1715 = vmatprep.subr.bf16.mxu0 0
    %1716 = vmatpush1.bf16.msra.mxu0 0
    %1717 = vmatprep.subr.bf16.mxu0 0
    %1718 = vmatpush1.bf16.msra.mxu0 0
    %1719 = vmatprep.subr.bf16.mxu0 0
    %1720 = vmatpush1.bf16.msra.mxu0 0
    %1721 = vmatprep.subr.bf16.mxu0 0
    %1722 = vmatpush1.bf16.msra.mxu0 0
    %1723 = vmatprep.subr.bf16.mxu0 0
    %1724 = vmatpush1.bf16.msra.mxu0 0
    %1725 = vmatprep.subr.bf16.mxu0 0
    %1726 = vmatpush1.bf16.msra.mxu0 0
    %1727 = vmatprep.subr.bf16.mxu0 0
    %1728 = vmatpush1.bf16.msra.mxu0 0
    %1729 = vmatprep.subr.bf16.mxu0 0
    %1730 = vmatpush1.bf16.msra.mxu0 0
    %1731 = vmatprep.subr.bf16.mxu0 0
    %1732 = vmatpush1.bf16.msra.mxu0 0
    %1733 = vmatprep.subr.bf16.mxu0 0
    %1734 = vmatpush1.bf16.msra.mxu0 0
    %1735 = vmatprep.subr.bf16.mxu0 0
    %1736 = vmatpush1.bf16.msra.mxu0 0
    %1737 = vmatprep.subr.bf16.mxu0 0
    %1738 = vmatpush1.bf16.msra.mxu0 0
    %1739 = vmatprep.subr.bf16.mxu0 0
    %1740 = vmatpush1.bf16.msra.mxu0 0
    %1741 = vmatprep.subr.bf16.mxu0 0
    %1742 = vmatpush1.bf16.msra.mxu0 0
    %1743 = vmatprep.mubr.bf16.mxu0 0
    %1744 = vmatmul.mubr.bf16.gmra.mrb[0].mxu0 %v1709
    %v1745 = vpop.f32.mrb[0].mxu0
    %v1746 = vadd.f32 0.0, %v1745
    %v1747 = vpop.f32.mrb[0].mxu0
    %v1748 = vpop.f32.mrb[0].mxu0
    %v1749 = vadd.f32 0.0, %v1748
    %v1750 = vpop.f32.mrb[0].mxu0
    %1751 = vdwg.mxu0
    %vm1752 = vcmp.lt.f32.partialorder %v1565, 5e+29
    %vm1753 = vcmp.lt.f32.partialorder %v1568, 5e+29
    %v1754 = vsel %vm1752, 1, 0
    %v1755 = vsel %vm1753, 1, 0
    %vm1756 = vcmp.eq.s32.totalorder %v1754, 1
    %vm1757 = vcmp.eq.s32.totalorder %v1755, 1
    %v1758 = vsel %vm1756, %v1746, -1e+30
    %v1759 = vsel %vm1757, %v1749, -1e+30
    %v1760 = vmax.f32 %v1561, %v1758
    %v1761 = vmax.f32 %v1562, %v1759
    %v1762 = vsel %vm314, %v1605, inf
    %1763 = vmin.xlane.f32.xlu0 %v1762
    %v1764 = vpop.xlane.xlu0 %1763
    %v1765 = vsel %vm314, %v1606, inf
    %1766 = vmin.xlane.f32.xlu0 %v1765
    %v1767 = vpop.xlane.xlu0 %1766
    %vm1768 = vcmp.le.f32.partialorder %v1605, %v1764
    %vm1769 = vcmp.le.f32.partialorder %v1606, %v1767
    %v1770 = vsel %vm1768, %v96, 16
    %v1771 = vsel %vm1769, %v96, 16
    %v1772 = vsel %vm314, %v1770, 2147483647
    %v1773 = vand.u32 %v1772, 65535
    %v1774 = vshra.s32 %v1772, 16
    %v1775 = vcvt.s32.f32 %v1773
    %v1776 = vcvt.s32.f32 %v1774
    %1777 = vmin.xlane.f32.xlu0 %v1776
    %v1778 = vpop.xlane.xlu0 %1777
    %vm1779 = vcmp.eq.f32.partialorder %v1776, %v1778
    %v1780 = vsel %vm1779, %v1775, inf
    %1781 = vmin.xlane.f32.xlu0 %v1780
    %v1782 = vpop.xlane.xlu0 %1781
    %v1783 = vcvt.f32.s32 %v1782
    %v1784 = vcvt.f32.s32 %v1778
    %v1785 = vshll.u32 %v1784, 16
    %v1786 = vadd.s32 %v1785, %v1783
    %v1787 = vsel %vm314, %v1771, 2147483647
    %v1788 = vand.u32 %v1787, 65535
    %v1789 = vshra.s32 %v1787, 16
    %v1790 = vcvt.s32.f32 %v1788
    %v1791 = vcvt.s32.f32 %v1789
    %1792 = vmin.xlane.f32.xlu0 %v1791
    %v1793 = vpop.xlane.xlu0 %1792
    %vm1794 = vcmp.eq.f32.partialorder %v1791, %v1793
    %v1795 = vsel %vm1794, %v1790, inf
    %1796 = vmin.xlane.f32.xlu0 %v1795
    %v1797 = vpop.xlane.xlu0 %1796
    %v1798 = vcvt.f32.s32 %v1797
    %v1799 = vcvt.f32.s32 %v1793
    %v1800 = vshll.u32 %v1799, 16
    %v1801 = vadd.s32 %v1800, %v1798
    %vm1802 = vcmp.eq.s32.totalorder %v96, %v1786
    %vm1803 = vcmp.eq.s32.totalorder %v96, %v1801
    %v1804 = vsel %vm1802, 1e+30, %v1605
    %v1805 = vsel %vm1803, 1e+30, %v1606
    %v1806 = vsel %vm1802, 1.0, 0.0
    %v1807 = vsel %vm1803, 1.0, 0.0
    %v1808 = vpack.c.bf16 %v1807, %v1806
    %v1810 = vsel %vm314, %v1808, 0
    %1812 = vmatprep.subr.bf16.mxu0 0
    %1813 = vmatpush1.bf16.msra.mxu0 %v1288
    %1814 = vmatprep.subr.bf16.mxu0 0
    %1815 = vmatpush1.bf16.msra.mxu0 0
    %1816 = vmatprep.subr.bf16.mxu0 0
    %1817 = vmatpush1.bf16.msra.mxu0 0
    %1818 = vmatprep.subr.bf16.mxu0 0
    %1819 = vmatpush1.bf16.msra.mxu0 0
    %1820 = vmatprep.subr.bf16.mxu0 0
    %1821 = vmatpush1.bf16.msra.mxu0 0
    %1822 = vmatprep.subr.bf16.mxu0 0
    %1823 = vmatpush1.bf16.msra.mxu0 0
    %1824 = vmatprep.subr.bf16.mxu0 0
    %1825 = vmatpush1.bf16.msra.mxu0 0
    %1826 = vmatprep.subr.bf16.mxu0 0
    %1827 = vmatpush1.bf16.msra.mxu0 0
    %1828 = vmatprep.subr.bf16.mxu0 0
    %1829 = vmatpush1.bf16.msra.mxu0 0
    %1830 = vmatprep.subr.bf16.mxu0 0
    %1831 = vmatpush1.bf16.msra.mxu0 0
    %1832 = vmatprep.subr.bf16.mxu0 0
    %1833 = vmatpush1.bf16.msra.mxu0 0
    %1834 = vmatprep.subr.bf16.mxu0 0
    %1835 = vmatpush1.bf16.msra.mxu0 0
    %1836 = vmatprep.subr.bf16.mxu0 0
    %1837 = vmatpush1.bf16.msra.mxu0 0
    %1838 = vmatprep.subr.bf16.mxu0 0
    %1839 = vmatpush1.bf16.msra.mxu0 0
    %1840 = vmatprep.subr.bf16.mxu0 0
    %1841 = vmatpush1.bf16.msra.mxu0 0
    %1842 = vmatprep.subr.bf16.mxu0 0
    %1843 = vmatpush1.bf16.msra.mxu0 0
    %1844 = vmatprep.mubr.bf16.mxu0 0
    %1845 = vmatmul.mubr.bf16.gmra.mrb[0].mxu0 %v1810
    %v1846 = vpop.f32.mrb[0].mxu0
    %v1847 = vadd.f32 0.0, %v1846
    %v1848 = vpop.f32.mrb[0].mxu0
    %v1849 = vpop.f32.mrb[0].mxu0
    %v1850 = vadd.f32 0.0, %v1849
    %v1851 = vpop.f32.mrb[0].mxu0
    %1852 = vdwg.mxu0
    %v1853 = vpack.c.bf16 %v1850, %v1847
    %v1855 = vsel %vm314, %v1853, 0
    %1857 = vmatprep.subr.bf16.mxu0 0
    %1858 = vmatpush1.bf16.msra.mxu0 %v1441
    %1859 = vmatprep.subr.bf16.mxu0 0
    %1860 = vmatpush1.bf16.msra.mxu0 0
    %1861 = vmatprep.subr.bf16.mxu0 0
    %1862 = vmatpush1.bf16.msra.mxu0 0
    %1863 = vmatprep.subr.bf16.mxu0 0
    %1864 = vmatpush1.bf16.msra.mxu0 0
    %1865 = vmatprep.subr.bf16.mxu0 0
    %1866 = vmatpush1.bf16.msra.mxu0 0
    %1867 = vmatprep.subr.bf16.mxu0 0
    %1868 = vmatpush1.bf16.msra.mxu0 0
    %1869 = vmatprep.subr.bf16.mxu0 0
    %1870 = vmatpush1.bf16.msra.mxu0 0
    %1871 = vmatprep.subr.bf16.mxu0 0
    %1872 = vmatpush1.bf16.msra.mxu0 0
    %1873 = vmatprep.subr.bf16.mxu0 0
    %1874 = vmatpush1.bf16.msra.mxu0 0
    %1875 = vmatprep.subr.bf16.mxu0 0
    %1876 = vmatpush1.bf16.msra.mxu0 0
    %1877 = vmatprep.subr.bf16.mxu0 0
    %1878 = vmatpush1.bf16.msra.mxu0 0
    %1879 = vmatprep.subr.bf16.mxu0 0
    %1880 = vmatpush1.bf16.msra.mxu0 0
    %1881 = vmatprep.subr.bf16.mxu0 0
    %1882 = vmatpush1.bf16.msra.mxu0 0
    %1883 = vmatprep.subr.bf16.mxu0 0
    %1884 = vmatpush1.bf16.msra.mxu0 0
    %1885 = vmatprep.subr.bf16.mxu0 0
    %1886 = vmatpush1.bf16.msra.mxu0 0
    %1887 = vmatprep.subr.bf16.mxu0 0
    %1888 = vmatpush1.bf16.msra.mxu0 0
    %1889 = vmatprep.mubr.bf16.mxu0 0
    %1890 = vmatmul.mubr.bf16.gmra.mrb[0].mxu0 %v1855
    %v1891 = vpop.f32.mrb[0].mxu0
    %v1892 = vadd.f32 0.0, %v1891
    %v1893 = vpop.f32.mrb[0].mxu0
    %v1894 = vpop.f32.mrb[0].mxu0
    %v1895 = vadd.f32 0.0, %v1894
    %v1896 = vpop.f32.mrb[0].mxu0
    %1897 = vdwg.mxu0
    %v1898 = vadd.f32 %v1339, %v1892
    %v1899 = vadd.f32 %v1342, %v1895
    %vm1900 = vcmp.gt.f32.partialorder %v1898, 0.0
    %vm1901 = vcmp.gt.f32.partialorder %v1899, 0.0
    %v1902 = vmul.f32 %v1898, 0.2
    %v1903 = vmul.f32 %v1899, 0.2
    %v1904 = vsel %vm1900, %v1898, %v1902
    %v1905 = vsel %vm1901, %v1899, %v1903
    %v1906 = vpack.c.bf16 %v1905, %v1904
    %v1908 = vsel %vm1508, %v1906, 0
    %1910 = vmatprep.subr.bf16.mxu0 0
    %1911 = vmatpush1.bf16.msra.mxu0 %v1504
    %1912 = vmatprep.subr.bf16.mxu0 0
    %1913 = vmatpush1.bf16.msra.mxu0 %v1505
    %1914 = vmatprep.subr.bf16.mxu0 0
    %1915 = vmatpush1.bf16.msra.mxu0 0
    %1916 = vmatprep.subr.bf16.mxu0 0
    %1917 = vmatpush1.bf16.msra.mxu0 0
    %1918 = vmatprep.subr.bf16.mxu0 0
    %1919 = vmatpush1.bf16.msra.mxu0 0
    %1920 = vmatprep.subr.bf16.mxu0 0
    %1921 = vmatpush1.bf16.msra.mxu0 0
    %1922 = vmatprep.subr.bf16.mxu0 0
    %1923 = vmatpush1.bf16.msra.mxu0 0
    %1924 = vmatprep.subr.bf16.mxu0 0
    %1925 = vmatpush1.bf16.msra.mxu0 0
    %1926 = vmatprep.subr.bf16.mxu0 0
    %1927 = vmatpush1.bf16.msra.mxu0 0
    %1928 = vmatprep.subr.bf16.mxu0 0
    %1929 = vmatpush1.bf16.msra.mxu0 0
    %1930 = vmatprep.subr.bf16.mxu0 0
    %1931 = vmatpush1.bf16.msra.mxu0 0
    %1932 = vmatprep.subr.bf16.mxu0 0
    %1933 = vmatpush1.bf16.msra.mxu0 0
    %1934 = vmatprep.subr.bf16.mxu0 0
    %1935 = vmatpush1.bf16.msra.mxu0 0
    %1936 = vmatprep.subr.bf16.mxu0 0
    %1937 = vmatpush1.bf16.msra.mxu0 0
    %1938 = vmatprep.subr.bf16.mxu0 0
    %1939 = vmatpush1.bf16.msra.mxu0 0
    %1940 = vmatprep.subr.bf16.mxu0 0
    %1941 = vmatpush1.bf16.msra.mxu0 0
    %1942 = vmatprep.mubr.bf16.mxu0 0
    %1943 = vmatmul.mubr.bf16.gmra.mrb[0].mxu0 %v1908
    %v1944 = vpop.f32.mrb[0].mxu0
    %v1945 = vadd.f32 0.0, %v1944
    %v1946 = vpop.f32.mrb[0].mxu0
    %v1947 = vpop.f32.mrb[0].mxu0
    %v1948 = vadd.f32 0.0, %v1947
    %v1949 = vpop.f32.mrb[0].mxu0
    %1950 = vdwg.mxu0
    %vm1951 = vcmp.lt.f32.partialorder %v1764, 5e+29
    %vm1952 = vcmp.lt.f32.partialorder %v1767, 5e+29
    %v1953 = vsel %vm1951, 1, 0
    %v1954 = vsel %vm1952, 1, 0
    %vm1955 = vcmp.eq.s32.totalorder %v1953, 1
    %vm1956 = vcmp.eq.s32.totalorder %v1954, 1
    %v1957 = vsel %vm1955, %v1945, -1e+30
    %v1958 = vsel %vm1956, %v1948, -1e+30
    %v1959 = vmax.f32 %v1760, %v1957
    %v1960 = vmax.f32 %v1761, %v1958
    %v1961 = vsel %vm314, %v1804, inf
    %1962 = vmin.xlane.f32.xlu0 %v1961
    %v1963 = vpop.xlane.xlu0 %1962
    %v1964 = vsel %vm314, %v1805, inf
    %1965 = vmin.xlane.f32.xlu0 %v1964
    %v1966 = vpop.xlane.xlu0 %1965
    %vm1967 = vcmp.le.f32.partialorder %v1804, %v1963
    %vm1968 = vcmp.le.f32.partialorder %v1805, %v1966
    %v1969 = vsel %vm1967, %v96, 16
    %v1970 = vsel %vm1968, %v96, 16
    %v1971 = vsel %vm314, %v1969, 2147483647
    %v1972 = vand.u32 %v1971, 65535
    %v1973 = vshra.s32 %v1971, 16
    %v1974 = vcvt.s32.f32 %v1972
    %v1975 = vcvt.s32.f32 %v1973
    %1976 = vmin.xlane.f32.xlu0 %v1975
    %v1977 = vpop.xlane.xlu0 %1976
    %vm1978 = vcmp.eq.f32.partialorder %v1975, %v1977
    %v1979 = vsel %vm1978, %v1974, inf
    %1980 = vmin.xlane.f32.xlu0 %v1979
    %v1981 = vpop.xlane.xlu0 %1980
    %v1982 = vcvt.f32.s32 %v1981
    %v1983 = vcvt.f32.s32 %v1977
    %v1984 = vshll.u32 %v1983, 16
    %v1985 = vadd.s32 %v1984, %v1982
    %v1986 = vsel %vm314, %v1970, 2147483647
    %v1987 = vand.u32 %v1986, 65535
    %v1988 = vshra.s32 %v1986, 16
    %v1989 = vcvt.s32.f32 %v1987
    %v1990 = vcvt.s32.f32 %v1988
    %1991 = vmin.xlane.f32.xlu0 %v1990
    %v1992 = vpop.xlane.xlu0 %1991
    %vm1993 = vcmp.eq.f32.partialorder %v1990, %v1992
    %v1994 = vsel %vm1993, %v1989, inf
    %1995 = vmin.xlane.f32.xlu0 %v1994
    %v1996 = vpop.xlane.xlu0 %1995
    %v1997 = vcvt.f32.s32 %v1996
    %v1998 = vcvt.f32.s32 %v1992
    %v1999 = vshll.u32 %v1998, 16
    %v2000 = vadd.s32 %v1999, %v1997
    %vm2001 = vcmp.eq.s32.totalorder %v96, %v1985
    %vm2002 = vcmp.eq.s32.totalorder %v96, %v2000
    %v2003 = vsel %vm2001, 1.0, 0.0
    %v2004 = vsel %vm2002, 1.0, 0.0
    %v2005 = vpack.c.bf16 %v2004, %v2003
    %v2007 = vsel %vm314, %v2005, 0
    %2009 = vmatprep.subr.bf16.mxu0 0
    %2010 = vmatpush1.bf16.msra.mxu0 %v1288
    %2011 = vmatprep.subr.bf16.mxu0 0
    %2012 = vmatpush1.bf16.msra.mxu0 0
    %2013 = vmatprep.subr.bf16.mxu0 0
    %2014 = vmatpush1.bf16.msra.mxu0 0
    %2015 = vmatprep.subr.bf16.mxu0 0
    %2016 = vmatpush1.bf16.msra.mxu0 0
    %2017 = vmatprep.subr.bf16.mxu0 0
    %2018 = vmatpush1.bf16.msra.mxu0 0
    %2019 = vmatprep.subr.bf16.mxu0 0
    %2020 = vmatpush1.bf16.msra.mxu0 0
    %2021 = vmatprep.subr.bf16.mxu0 0
    %2022 = vmatpush1.bf16.msra.mxu0 0
    %2023 = vmatprep.subr.bf16.mxu0 0
    %2024 = vmatpush1.bf16.msra.mxu0 0
    %2025 = vmatprep.subr.bf16.mxu0 0
    %2026 = vmatpush1.bf16.msra.mxu0 0
    %2027 = vmatprep.subr.bf16.mxu0 0
    %2028 = vmatpush1.bf16.msra.mxu0 0
    %2029 = vmatprep.subr.bf16.mxu0 0
    %2030 = vmatpush1.bf16.msra.mxu0 0
    %2031 = vmatprep.subr.bf16.mxu0 0
    %2032 = vmatpush1.bf16.msra.mxu0 0
    %2033 = vmatprep.subr.bf16.mxu0 0
    %2034 = vmatpush1.bf16.msra.mxu0 0
    %2035 = vmatprep.subr.bf16.mxu0 0
    %2036 = vmatpush1.bf16.msra.mxu0 0
    %2037 = vmatprep.subr.bf16.mxu0 0
    %2038 = vmatpush1.bf16.msra.mxu0 0
    %2039 = vmatprep.subr.bf16.mxu0 0
    %2040 = vmatpush1.bf16.msra.mxu0 0
    %2041 = vmatprep.mubr.bf16.mxu0 0
    %2042 = vmatmul.mubr.bf16.gmra.mrb[0].mxu0 %v2007
    %v2043 = vpop.f32.mrb[0].mxu0
    %v2044 = vadd.f32 0.0, %v2043
    %v2045 = vpop.f32.mrb[0].mxu0
    %v2046 = vpop.f32.mrb[0].mxu0
    %v2047 = vadd.f32 0.0, %v2046
    %v2048 = vpop.f32.mrb[0].mxu0
    %2049 = vdwg.mxu0
    %v2050 = vpack.c.bf16 %v2047, %v2044
    %v2052 = vsel %vm314, %v2050, 0
    %2054 = vmatprep.subr.bf16.mxu0 0
    %2055 = vmatpush1.bf16.msra.mxu0 %v1441
    %2056 = vmatprep.subr.bf16.mxu0 0
    %2057 = vmatpush1.bf16.msra.mxu0 0
    %2058 = vmatprep.subr.bf16.mxu0 0
    %2059 = vmatpush1.bf16.msra.mxu0 0
    %2060 = vmatprep.subr.bf16.mxu0 0
    %2061 = vmatpush1.bf16.msra.mxu0 0
    %2062 = vmatprep.subr.bf16.mxu0 0
    %2063 = vmatpush1.bf16.msra.mxu0 0
    %2064 = vmatprep.subr.bf16.mxu0 0
    %2065 = vmatpush1.bf16.msra.mxu0 0
    %2066 = vmatprep.subr.bf16.mxu0 0
    %2067 = vmatpush1.bf16.msra.mxu0 0
    %2068 = vmatprep.subr.bf16.mxu0 0
    %2069 = vmatpush1.bf16.msra.mxu0 0
    %2070 = vmatprep.subr.bf16.mxu0 0
    %2071 = vmatpush1.bf16.msra.mxu0 0
    %2072 = vmatprep.subr.bf16.mxu0 0
    %2073 = vmatpush1.bf16.msra.mxu0 0
    %2074 = vmatprep.subr.bf16.mxu0 0
    %2075 = vmatpush1.bf16.msra.mxu0 0
    %2076 = vmatprep.subr.bf16.mxu0 0
    %2077 = vmatpush1.bf16.msra.mxu0 0
    %2078 = vmatprep.subr.bf16.mxu0 0
    %2079 = vmatpush1.bf16.msra.mxu0 0
    %2080 = vmatprep.subr.bf16.mxu0 0
    %2081 = vmatpush1.bf16.msra.mxu0 0
    %2082 = vmatprep.subr.bf16.mxu0 0
    %2083 = vmatpush1.bf16.msra.mxu0 0
    %2084 = vmatprep.subr.bf16.mxu0 0
    %2085 = vmatpush1.bf16.msra.mxu0 0
    %2086 = vmatprep.mubr.bf16.mxu0 0
    %2087 = vmatmul.mubr.bf16.gmra.mrb[0].mxu0 %v2052
    %v2088 = vpop.f32.mrb[0].mxu0
    %v2089 = vadd.f32 0.0, %v2088
    %v2090 = vpop.f32.mrb[0].mxu0
    %v2091 = vpop.f32.mrb[0].mxu0
    %v2092 = vadd.f32 0.0, %v2091
    %v2093 = vpop.f32.mrb[0].mxu0
    %2094 = vdwg.mxu0
    %v2095 = vadd.f32 %v1339, %v2089
    %v2096 = vadd.f32 %v1342, %v2092
    %vm2097 = vcmp.gt.f32.partialorder %v2095, 0.0
    %vm2098 = vcmp.gt.f32.partialorder %v2096, 0.0
    %v2099 = vmul.f32 %v2095, 0.2
    %v2100 = vmul.f32 %v2096, 0.2
    %v2101 = vsel %vm2097, %v2095, %v2099
    %v2102 = vsel %vm2098, %v2096, %v2100
    %v2103 = vpack.c.bf16 %v2102, %v2101
    %v2105 = vsel %vm1508, %v2103, 0
    %2107 = vmatprep.subr.bf16.mxu0 0
    %2108 = vmatpush1.bf16.msra.mxu0 %v1504
    %2109 = vmatprep.subr.bf16.mxu0 0
    %2110 = vmatpush1.bf16.msra.mxu0 %v1505
    %2111 = vmatprep.subr.bf16.mxu0 0
    %2112 = vmatpush1.bf16.msra.mxu0 0
    %2113 = vmatprep.subr.bf16.mxu0 0
    %2114 = vmatpush1.bf16.msra.mxu0 0
    %2115 = vmatprep.subr.bf16.mxu0 0
    %2116 = vmatpush1.bf16.msra.mxu0 0
    %2117 = vmatprep.subr.bf16.mxu0 0
    %2118 = vmatpush1.bf16.msra.mxu0 0
    %2119 = vmatprep.subr.bf16.mxu0 0
    %2120 = vmatpush1.bf16.msra.mxu0 0
    %2121 = vmatprep.subr.bf16.mxu0 0
    %2122 = vmatpush1.bf16.msra.mxu0 0
    %2123 = vmatprep.subr.bf16.mxu0 0
    %2124 = vmatpush1.bf16.msra.mxu0 0
    %2125 = vmatprep.subr.bf16.mxu0 0
    %2126 = vmatpush1.bf16.msra.mxu0 0
    %2127 = vmatprep.subr.bf16.mxu0 0
    %2128 = vmatpush1.bf16.msra.mxu0 0
    %2129 = vmatprep.subr.bf16.mxu0 0
    %2130 = vmatpush1.bf16.msra.mxu0 0
    %2131 = vmatprep.subr.bf16.mxu0 0
    %2132 = vmatpush1.bf16.msra.mxu0 0
    %2133 = vmatprep.subr.bf16.mxu0 0
    %2134 = vmatpush1.bf16.msra.mxu0 0
    %2135 = vmatprep.subr.bf16.mxu0 0
    %2136 = vmatpush1.bf16.msra.mxu0 0
    %2137 = vmatprep.subr.bf16.mxu0 0
    %2138 = vmatpush1.bf16.msra.mxu0 0
    %2139 = vmatprep.mubr.bf16.mxu0 0
    %2140 = vmatmul.mubr.bf16.gmra.mrb[0].mxu0 %v2105
    %v2141 = vpop.f32.mrb[0].mxu0
    %v2142 = vadd.f32 0.0, %v2141
    %v2143 = vpop.f32.mrb[0].mxu0
    %v2144 = vpop.f32.mrb[0].mxu0
    %v2145 = vadd.f32 0.0, %v2144
    %v2146 = vpop.f32.mrb[0].mxu0
    %2147 = vdwg.mxu0
    %vm2148 = vcmp.lt.f32.partialorder %v1963, 5e+29
    %vm2149 = vcmp.lt.f32.partialorder %v1966, 5e+29
    %v2150 = vsel %vm2148, 1, 0
    %v2151 = vsel %vm2149, 1, 0
    %vm2152 = vcmp.eq.s32.totalorder %v2150, 1
    %vm2153 = vcmp.eq.s32.totalorder %v2151, 1
    %v2154 = vsel %vm2152, %v2142, -1e+30
    %v2155 = vsel %vm2153, %v2145, -1e+30
    %v2156 = vmax.f32 %v1959, %v2154
    %v2157 = vmax.f32 %v1960, %v2155
    %vm2158 = vcmp.gt.f32.partialorder %v2156, -5e+29
    %vm2159 = vcmp.gt.f32.partialorder %v2157, -5e+29
    %v2161 = vlaneseq
    %v2162 = vshrl.u32 %v2161, 7
    %v2163 = vsub.s32 0, %v2162
    %v2164 = vrot.slane %v1154, %v2163
    %v2166 = vadd.f32 %v2156, %v2164
    %v2167 = vadd.f32 %v2157, %v2164
    %v2168 = vsel %vm2158, 1, 0
    %v2169 = vsel %vm2159, 1, 0
    %2170 = vset.pattern.permute.xlu0 0
    %2171 = vperm.xlu0 %2170, %v2168
    %v2172 = vpop.permute.xlu0 %2171
    %2173 = vset.pattern.permute.xlu0 0
    %2174 = vperm.xlu0 %2173, %v2169
    %v2175 = vpop.permute.xlu0 %2174
    %vm2176 = vcmp.eq.s32.totalorder %v2172, 1
    %vm2177 = vcmp.eq.s32.totalorder %v2175, 1
    %v2178 = vsel %vm2176, %v2166, 0.0
    %v2179 = vsel %vm2177, %v2167, 0.0
    %vm2180 = vcmp.gt.f32.partialorder %v2178, 0.0
    %vm2181 = vcmp.gt.f32.partialorder %v2179, 0.0
    %v2182 = vmul.f32 %v2178, 0.2
    %v2183 = vmul.f32 %v2179, 0.2
    %v2184 = vsel %vm2180, %v2178, %v2182
    %v2185 = vsel %vm2181, %v2179, %v2183
    %vm2186 = vcmp.eq.s32.totalorder %v93, %v106
    %v2187 = vsel %vm2186, 1.0, 0.0
    %vm2188 = vcmask 123904
    %v2189 = vsel %vm2188, %v2187, 0.0
    %2190 = vadd.xlane.f32.xlu0 %v2189
    %v2191 = vpop.xlane.xlu0 %2190
    %v2192 = vmax.f32 %v2191, 1.0
    %v2194 = vsel %vm314, %v2187, 0
    %2196 = vmatprep.subr.mxu0 0.0
    %2197 = vmatpush1.msra.mxu0 %v2184
    %2198 = vmatprep.subr.mxu0 0.0
    %2199 = vmatpush1.msra.mxu0 %v2185
    %2200 = vmatprep.subr.mxu0 0.0
    %2201 = vmatpush1.msra.mxu0 0.0
    %2202 = vmatprep.subr.mxu0 0.0
    %2203 = vmatpush1.msra.mxu0 0.0
    %2204 = vmatprep.subr.mxu0 0.0
    %2205 = vmatpush1.msra.mxu0 0.0
    %2206 = vmatprep.subr.mxu0 0.0
    %2207 = vmatpush1.msra.mxu0 0.0
    %2208 = vmatprep.subr.mxu0 0.0
    %2209 = vmatpush1.msra.mxu0 0.0
    %2210 = vmatprep.subr.mxu0 0.0
    %2211 = vmatpush1.msra.mxu0 0.0
    %2212 = vmatprep.subr.mxu0 0.0
    %2213 = vmatpush1.msra.mxu0 0.0
    %2214 = vmatprep.subr.mxu0 0.0
    %2215 = vmatpush1.msra.mxu0 0.0
    %2216 = vmatprep.subr.mxu0 0.0
    %2217 = vmatpush1.msra.mxu0 0.0
    %2218 = vmatprep.subr.mxu0 0.0
    %2219 = vmatpush1.msra.mxu0 0.0
    %2220 = vmatprep.subr.mxu0 0.0
    %2221 = vmatpush1.msra.mxu0 0.0
    %2222 = vmatprep.subr.mxu0 0.0
    %2223 = vmatpush1.msra.mxu0 0.0
    %2224 = vmatprep.subr.mxu0 0.0
    %2225 = vmatpush1.msra.mxu0 0.0
    %2226 = vmatprep.subr.mxu0 0.0
    %2227 = vmatpush1.msra.mxu0 0.0
    %2228 = vmatprep.subr.mxu0 0.0
    %2229 = vmatpush1.msra.mxu0 0.0
    %2230 = vmatprep.subr.mxu0 0.0
    %2231 = vmatpush1.msra.mxu0 0.0
    %2232 = vmatprep.subr.mxu0 0.0
    %2233 = vmatpush1.msra.mxu0 0.0
    %2234 = vmatprep.subr.mxu0 0.0
    %2235 = vmatpush1.msra.mxu0 0.0
    %2236 = vmatprep.subr.mxu0 0.0
    %2237 = vmatpush1.msra.mxu0 0.0
    %2238 = vmatprep.subr.mxu0 0.0
    %2239 = vmatpush1.msra.mxu0 0.0
    %2240 = vmatprep.subr.mxu0 0.0
    %2241 = vmatpush1.msra.mxu0 0.0
    %2242 = vmatprep.subr.mxu0 0.0
    %2243 = vmatpush1.msra.mxu0 0.0
    %2244 = vmatprep.subr.mxu0 0.0
    %2245 = vmatpush1.msra.mxu0 0.0
    %2246 = vmatprep.subr.mxu0 0.0
    %2247 = vmatpush1.msra.mxu0 0.0
    %2248 = vmatprep.subr.mxu0 0.0
    %2249 = vmatpush1.msra.mxu0 0.0
    %2250 = vmatprep.subr.mxu0 0.0
    %2251 = vmatpush1.msra.mxu0 0.0
    %2252 = vmatprep.subr.mxu0 0.0
    %2253 = vmatpush1.msra.mxu0 0.0
    %2254 = vmatprep.subr.mxu0 0.0
    %2255 = vmatpush1.msra.mxu0 0.0
    %2256 = vmatprep.subr.mxu0 0.0
    %2257 = vmatpush1.msra.mxu0 0.0
    %2258 = vmatprep.subr.mxu0 0.0
    %2259 = vmatpush1.msra.mxu0 0.0
    %2260 = vmatprep.mubr.f32.mxu0 0.0
    %2261 = vmatmul.mubr.f32.gmra.mrb[0].mxu0 %v2194
    %v2262 = vpop.f32.mrb[0].mxu0
    %v2263 = vadd.f32 0.0, %v2262
    %v2264 = vpop.f32.mrb[0].mxu0
    %2265 = vdwg.mxu0
    %v2266 = vrcp.pop %v2192
    %v2267 = vmul.f32 %v2263, %v2266
    %v2268 = vld [vmem:[%s13] sm:$0xf]
    %v2269 = vld [vmem:[%s13 + $0x4] sm:$0xf]
    %v2270 = vld [vmem:[%s13 + $0x8] sm:$0xf]
    %v2271 = vld [vmem:[%s13 + $0xc] sm:$0xf]
    %v2272 = vld [vmem:[%s14] sm:$0x1]
    %v2273 = vld [vmem:[%s15] sm:$0xf]
    %v2274 = vld [vmem:[%s15 + $0x4] sm:$0xf]
    %v2275 = vld [vmem:[%s15 + $0x8] sm:$0xf]
    %v2276 = vld [vmem:[%s15 + $0xc] sm:$0xf]
    %v2277 = vld [vmem:[%s15 + $0x10] sm:$0xf]
    %v2278 = vld [vmem:[%s15 + $0x14] sm:$0xf]
    %v2279 = vld [vmem:[%s15 + $0x18] sm:$0xf]
    %v2280 = vld [vmem:[%s15 + $0x1c] sm:$0xf]
    %v2281 = vld [vmem:[%s16] sm:$0x1]
    %v2282 = vld [vmem:[%s17] sm:$0xf]
    %v2283 = vld [vmem:[%s17 + $0x4] sm:$0xf]
    %v2284 = vld [vmem:[%s17 + $0x8] sm:$0xf]
    %v2285 = vld [vmem:[%s17 + $0xc] sm:$0xf]
    %v2286 = vld [vmem:[%s17 + $0x10] sm:$0xf]
    %v2287 = vld [vmem:[%s17 + $0x14] sm:$0xf]
    %v2288 = vld [vmem:[%s17 + $0x18] sm:$0xf]
    %v2289 = vld [vmem:[%s17 + $0x1c] sm:$0xf]
    %v2290 = vld [vmem:[#allocation2] sm:$0x1]
    %v2291 = vpack.c.bf16 %v2267, %v2267
    %v2293 = vlaneseq
    %v2294 = vshrl.u32 %v2293, 7
    %v2295 = vsub.s32 0, %v2294
    %v2296 = vrot.slane %v2272, %v2295
    %v2302 = vunpack.c.l.b16 %v2268
    %v2303 = vunpack.c.l.b16 %v2269
    %v2304 = vunpack.c.l.b16 %v2270
    %v2305 = vunpack.c.l.b16 %v2271
    %v2306 = vpack.c.b16 %v2303, %v2302
    %v2307 = vpack.c.b16 %v2305, %v2304
    %v2311 = vsel %vm1508, %v2291, 0
    %2313 = vmatprep.subr.bf16.mxu0 0
    %2314 = vmatpush1.bf16.msra.mxu0 %v2306
    %2315 = vmatprep.subr.bf16.mxu0 0
    %2316 = vmatpush1.bf16.msra.mxu0 %v2307
    %2317 = vmatprep.subr.bf16.mxu0 0
    %2318 = vmatpush1.bf16.msra.mxu0 0
    %2319 = vmatprep.subr.bf16.mxu0 0
    %2320 = vmatpush1.bf16.msra.mxu0 0
    %2321 = vmatprep.subr.bf16.mxu0 0
    %2322 = vmatpush1.bf16.msra.mxu0 0
    %2323 = vmatprep.subr.bf16.mxu0 0
    %2324 = vmatpush1.bf16.msra.mxu0 0
    %2325 = vmatprep.subr.bf16.mxu0 0
    %2326 = vmatpush1.bf16.msra.mxu0 0
    %2327 = vmatprep.subr.bf16.mxu0 0
    %2328 = vmatpush1.bf16.msra.mxu0 0
    %2329 = vmatprep.subr.bf16.mxu0 0
    %2330 = vmatpush1.bf16.msra.mxu0 0
    %2331 = vmatprep.subr.bf16.mxu0 0
    %2332 = vmatpush1.bf16.msra.mxu0 0
    %2333 = vmatprep.subr.bf16.mxu0 0
    %2334 = vmatpush1.bf16.msra.mxu0 0
    %2335 = vmatprep.subr.bf16.mxu0 0
    %2336 = vmatpush1.bf16.msra.mxu0 0
    %2337 = vmatprep.subr.bf16.mxu0 0
    %2338 = vmatpush1.bf16.msra.mxu0 0
    %2339 = vmatprep.subr.bf16.mxu0 0
    %2340 = vmatpush1.bf16.msra.mxu0 0
    %2341 = vmatprep.subr.bf16.mxu0 0
    %2342 = vmatpush1.bf16.msra.mxu0 0
    %2343 = vmatprep.subr.bf16.mxu0 0
    %2344 = vmatpush1.bf16.msra.mxu0 0
    %2345 = vmatprep.mubr.bf16.mxu0 0
    %2346 = vmatmul.mubr.bf16.gmra.mrb[0].mxu0 %v2311
    %v2347 = vpop.f32.mrb[0].mxu0
    %v2348 = vadd.f32 %v2296, %v2347
    %v2349 = vpop.f32.mrb[0].mxu0
    %v2350 = vpop.f32.mrb[0].mxu0
    %v2351 = vpop.f32.mrb[0].mxu0
    %2352 = vdwg.mxu0
    %vm2353 = vcmp.gt.f32.partialorder %v2348, 0.0
    %v2354 = vmul.f32 %v2348, 0.2
    %v2355 = vsel %vm2353, %v2348, %v2354
    %v2356 = vpack.c.bf16 %v2355, %v2355
    %v2358 = vlaneseq
    %v2359 = vshrl.u32 %v2358, 7
    %v2360 = vsub.s32 0, %v2359
    %v2361 = vrot.slane %v2281, %v2360
    %v2371 = vunpack.c.l.b16 %v2273
    %v2372 = vunpack.c.l.b16 %v2274
    %v2373 = vunpack.c.l.b16 %v2275
    %v2374 = vunpack.c.l.b16 %v2276
    %v2375 = vunpack.c.l.b16 %v2277
    %v2376 = vunpack.c.l.b16 %v2278
    %v2377 = vunpack.c.l.b16 %v2279
    %v2378 = vunpack.c.l.b16 %v2280
    %v2379 = vpack.c.b16 %v2372, %v2371
    %v2380 = vpack.c.b16 %v2374, %v2373
    %v2381 = vpack.c.b16 %v2376, %v2375
    %v2382 = vpack.c.b16 %v2378, %v2377
    %vm2387 = vcmask 523264
    %v2389 = vsel %vm2387, %v2356, 0
    %2391 = vmatprep.subr.bf16.mxu0 0
    %2392 = vmatpush1.bf16.msra.mxu0 %v2379
    %2393 = vmatprep.subr.bf16.mxu0 0
    %2394 = vmatpush1.bf16.msra.mxu0 %v2380
    %2395 = vmatprep.subr.bf16.mxu0 0
    %2396 = vmatpush1.bf16.msra.mxu0 %v2381
    %2397 = vmatprep.subr.bf16.mxu0 0
    %2398 = vmatpush1.bf16.msra.mxu0 %v2382
    %2399 = vmatprep.subr.bf16.mxu0 0
    %2400 = vmatpush1.bf16.msra.mxu0 0
    %2401 = vmatprep.subr.bf16.mxu0 0
    %2402 = vmatpush1.bf16.msra.mxu0 0
    %2403 = vmatprep.subr.bf16.mxu0 0
    %2404 = vmatpush1.bf16.msra.mxu0 0
    %2405 = vmatprep.subr.bf16.mxu0 0
    %2406 = vmatpush1.bf16.msra.mxu0 0
    %2407 = vmatprep.subr.bf16.mxu0 0
    %2408 = vmatpush1.bf16.msra.mxu0 0
    %2409 = vmatprep.subr.bf16.mxu0 0
    %2410 = vmatpush1.bf16.msra.mxu0 0
    %2411 = vmatprep.subr.bf16.mxu0 0
    %2412 = vmatpush1.bf16.msra.mxu0 0
    %2413 = vmatprep.subr.bf16.mxu0 0
    %2414 = vmatpush1.bf16.msra.mxu0 0
    %2415 = vmatprep.subr.bf16.mxu0 0
    %2416 = vmatpush1.bf16.msra.mxu0 0
    %2417 = vmatprep.subr.bf16.mxu0 0
    %2418 = vmatpush1.bf16.msra.mxu0 0
    %2419 = vmatprep.subr.bf16.mxu0 0
    %2420 = vmatpush1.bf16.msra.mxu0 0
    %2421 = vmatprep.subr.bf16.mxu0 0
    %2422 = vmatpush1.bf16.msra.mxu0 0
    %2423 = vmatprep.mubr.bf16.mxu0 0
    %2424 = vmatmul.mubr.bf16.gmra.mrb[0].mxu0 %v2389
    %v2425 = vpop.f32.mrb[0].mxu0
    %v2426 = vadd.f32 %v2361, %v2425
    %v2427 = vpop.f32.mrb[0].mxu0
    %v2428 = vpop.f32.mrb[0].mxu0
    %v2429 = vpop.f32.mrb[0].mxu0
    %2430 = vdwg.mxu0
    %vm2431 = vcmp.gt.f32.partialorder %v2426, 0.0
    %v2432 = vmul.f32 %v2426, 0.2
    %v2433 = vsel %vm2431, %v2426, %v2432
    %v2434 = vpack.c.bf16 %v2433, %v2433
    %v2436 = vlaneseq
    %v2437 = vshrl.u32 %v2436, 7
    %v2438 = vsub.s32 0, %v2437
    %v2439 = vrot.slane %v2290, %v2438
    %v2449 = vunpack.c.l.b16 %v2282
    %v2450 = vunpack.c.l.b16 %v2283
    %v2451 = vunpack.c.l.b16 %v2284
    %v2452 = vunpack.c.l.b16 %v2285
    %v2453 = vunpack.c.l.b16 %v2286
    %v2454 = vunpack.c.l.b16 %v2287
    %v2455 = vunpack.c.l.b16 %v2288
    %v2456 = vunpack.c.l.b16 %v2289
    %v2457 = vpack.c.b16 %v2450, %v2449
    %v2458 = vpack.c.b16 %v2452, %v2451
    %v2459 = vpack.c.b16 %v2454, %v2453
    %v2460 = vpack.c.b16 %v2456, %v2455
    %v2466 = vsel %vm2387, %v2434, 0
    %2468 = vmatprep.subr.bf16.mxu0 0
    %2469 = vmatpush1.bf16.msra.mxu0 %v2457
    %2470 = vmatprep.subr.bf16.mxu0 0
    %2471 = vmatpush1.bf16.msra.mxu0 %v2458
    %2472 = vmatprep.subr.bf16.mxu0 0
    %2473 = vmatpush1.bf16.msra.mxu0 %v2459
    %2474 = vmatprep.subr.bf16.mxu0 0
    %2475 = vmatpush1.bf16.msra.mxu0 %v2460
    %2476 = vmatprep.subr.bf16.mxu0 0
    %2477 = vmatpush1.bf16.msra.mxu0 0
    %2478 = vmatprep.subr.bf16.mxu0 0
    %2479 = vmatpush1.bf16.msra.mxu0 0
    %2480 = vmatprep.subr.bf16.mxu0 0
    %2481 = vmatpush1.bf16.msra.mxu0 0
    %2482 = vmatprep.subr.bf16.mxu0 0
    %2483 = vmatpush1.bf16.msra.mxu0 0
    %2484 = vmatprep.subr.bf16.mxu0 0
    %2485 = vmatpush1.bf16.msra.mxu0 0
    %2486 = vmatprep.subr.bf16.mxu0 0
    %2487 = vmatpush1.bf16.msra.mxu0 0
    %2488 = vmatprep.subr.bf16.mxu0 0
    %2489 = vmatpush1.bf16.msra.mxu0 0
    %2490 = vmatprep.subr.bf16.mxu0 0
    %2491 = vmatpush1.bf16.msra.mxu0 0
    %2492 = vmatprep.subr.bf16.mxu0 0
    %2493 = vmatpush1.bf16.msra.mxu0 0
    %2494 = vmatprep.subr.bf16.mxu0 0
    %2495 = vmatpush1.bf16.msra.mxu0 0
    %2496 = vmatprep.subr.bf16.mxu0 0
    %2497 = vmatpush1.bf16.msra.mxu0 0
    %2498 = vmatprep.subr.bf16.mxu0 0
    %2499 = vmatpush1.bf16.msra.mxu0 0
    %2500 = vmatprep.mubr.bf16.mxu0 0
    %2501 = vmatmul.mubr.bf16.gmra.mrb[0].mxu0 %v2466
    %v2502 = vpop.f32.mrb[0].mxu0
    %v2503 = vadd.f32 %v2439, %v2502
    %v2504 = vpop.f32.mrb[0].mxu0
    %v2505 = vpop.f32.mrb[0].mxu0
    %v2506 = vpop.f32.mrb[0].mxu0
    %2507 = vdwg.mxu0
    %vm2508 = vcmask 1024
    %2509 = vst.msk [vmem:[%s19] sm:$0x3] %vm2508, %v2503
    // Predicated region
    $region86: #{tpu_custom_call.1} parent=1 // pred_check
      _
    $region87: #{tpu_custom_call.1} parent=1 // pred_check_branch
      %2511 = sbr.rel (0) target = $region89
    $region88: #{tpu_custom_call.1} parent=1 // pred_region
      _
    $region89: #{tpu_custom_call.1} parent=1 // pred_fallthru
      _
    // Predicated region
    $region90: #{tpu_custom_call.1} parent=1 // pred_check
      _
    $region91: #{tpu_custom_call.1} parent=1 // pred_check_branch
      %2513 = sbr.rel (0) target = $region93
    $region92: #{tpu_custom_call.1} parent=1 // pred_region
      _
    $region93: #{tpu_custom_call.1} parent=1 // pred_fallthru
      _
    %2514 = vsyncpa [#allocation4], 1
    %2515 = vsyncpa [#allocation6], 1

</llo_original>
